<compile_context>
chip_gen: v7x
topology: tpu7x:2x2x1
jax: 0.10.0
libtpu: 0.0.40
codegen_flags: <defaults>
</compile_context>

<pallas_src>
import functools

import jax
import jax.numpy as jnp
from jax.experimental import pallas as pl
from jax.experimental.pallas import tpu as pltpu


def _round_up(n, m):
    return ((n + m - 1) // m) * m


def _device_kind():
    try:
        return jax.devices()[0].device_kind.lower()
    except Exception:  # pragma: no cover - defensive
        return ""


# ---------------------------------------------------------------------------
# Kernel
# ---------------------------------------------------------------------------
def _dense(x, w_ref, b_ref, relu=True):
    # bf16 operands, f32 accumulation on the MXU; bias add / ReLU on the VPU.
    y = jnp.dot(x.astype(jnp.bfloat16), w_ref[...],
                preferred_element_type=jnp.float32) + b_ref[...]
    if relu:
        y = jnp.maximum(y, 0.0)
    return y


def inference_model_kernel(
    xl_ref,                                   # (2, TB, C) bf16: [x; labels]
    # features branch
    fw1, fb1, fw2, fb2, fw3, fb3,
    # labels branch
    lw1, lb1, lw2, lb2, lw3, lb3,
    # combine head
    cw1, cb1, cw2, cb2, cw3, cb3, cw4r, cb4,
    out_ref,
    *, split_combine,
):
    x = xl_ref[0]                             # (TB, C) bf16
    lbl = xl_ref[1]                           # (TB, C) bf16

    # features(x): C -> 1024 -> 512 -> 128, ReLU after each.
    hx = _dense(x, fw1, fb1)
    hx = _dense(hx, fw2, fb2)
    # bf16 immediately: hx stays live across the whole labels branch.
    hx = _dense(hx, fw3, fb3).astype(jnp.bfloat16)

    # labels(l): C -> 1024 -> 512 -> 128, ReLU after each.
    hl = _dense(lbl, lw1, lb1)
    hl = _dense(hl, lw2, lb2)
    hl = _dense(hl, lw3, lb3).astype(jnp.bfloat16)

    # First combine layer; torch.cat((out_x, out_l), 1) @ cw1.
    if split_combine:
        # v5e: 128-deep MXU, each half already fills a pass.
        h = jnp.dot(hx, cw1[0:128, :], preferred_element_type=jnp.float32)
        h = h + jnp.dot(hl, cw1[128:256, :], preferred_element_type=jnp.float32)
    else:
        # v6e/v7x: one K=256 matmul; the concat is lane-placement only
        # (both operands are exactly 128 lanes wide).
        hcat = jnp.concatenate([hx, hl], axis=-1)        # (TB, 256) bf16
        h = jnp.dot(hcat, cw1[...], preferred_element_type=jnp.float32)
    h = jnp.maximum(h + cb1[...], 0.0)

    # combine: 256 -> 128 -> 64 (ReLU after each).
    h = _dense(h, cw2, cb2)
    h = _dense(h, cw3, cb3)

    # 64 -> 1 as VPU multiply + lane reduction (skip a degenerate MXU pass).
    logits = jnp.sum(h * cw4r[...], axis=-1, keepdims=True) + cb4[...]

    # Sigmoid output (exp on the EUP).
    out_ref[...] = (1.0 / (1.0 + jnp.exp(-logits))).astype(out_ref.dtype)


# ---------------------------------------------------------------------------
# One-time parameter preparation (bf16 weights, f32 row biases)
# ---------------------------------------------------------------------------
def prepare_params(params):
    """Cast/reshape params ONCE; pass the result to inference_model_forward."""
    def w16(w):
        return jnp.asarray(w, jnp.bfloat16)

    def b2d(b):
        return jnp.asarray(b, jnp.float32).reshape(1, -1)

    (fw1, fb1), (fw2, fb2), (fw3, fb3) = params[0:3]
    (lw1, lb1), (lw2, lb2), (lw3, lb3) = params[3:6]
    (cw1, cb1), (cw2, cb2), (cw3, cb3), (cw4, cb4) = params[6:10]

    flat = [
        w16(fw1), b2d(fb1), w16(fw2), b2d(fb2), w16(fw3), b2d(fb3),
        w16(lw1), b2d(lb1), w16(lw2), b2d(lb2), w16(lw3), b2d(lb3),
        w16(cw1), b2d(cb1),
        w16(cw2), b2d(cb2), w16(cw3), b2d(cb3),
        jnp.asarray(cw4, jnp.float32).reshape(1, -1),    # (1, 64) f32 (VPU)
        b2d(cb4),
    ]
    return [jax.block_until_ready(a) for a in flat]      # materialize once


# ---------------------------------------------------------------------------
# Wrapper
# ---------------------------------------------------------------------------
def inference_model_forward(x, lbl, flat_params, *, batch_tile=None):
    """x, lbl: (B, num_classes) f32. flat_params from prepare_params().
    Returns (B, 1) f32 membership score."""
    B, C = x.shape
    kind = _device_kind()
    is_v5 = "v5" in kind
    is_v6 = "v6" in kind
    is_v7 = ("v7" in kind) or ("7x" in kind)

    # --- batch tiling / padding --------------------------------------------
    Bp8 = _round_up(B, 8)                           # sublane-aligned batch
    if batch_tile is None:
        cap = 512 if (is_v6 and Bp8 >= 1024) else 256
        TB = min(cap, Bp8)
        # >= 2 grid steps when possible: keeps both v7x TensorCores busy.
        if Bp8 >= 16 and Bp8 // TB < 2:
            TB = _round_up(Bp8 // 2, 8)
    else:
        TB = _round_up(min(batch_tile, Bp8), 8)
    TB = max(TB, 8)
    Bp = _round_up(Bp8, TB)
    grid = (Bp // TB,)

    # --- input packing: (2, Bp, C) bf16, one DMA per grid step --------------
    xl = jnp.stack([x, lbl]).astype(jnp.bfloat16)
    if Bp != B:
        xl = jnp.pad(xl, ((0, 0), (0, Bp - B), (0, 0)))

    def _rep_spec(a):
        # full-array block, constant index_map -> fetched once, VMEM-resident
        return pl.BlockSpec(a.shape, lambda i: (0, 0))

    in_specs = [pl.BlockSpec((2, TB, C), lambda i: (0, i, 0))] + [
        _rep_spec(a) for a in flat_params
    ]
    out_spec = pl.BlockSpec((TB, 1), lambda i: (i, 0))

    # --- cost estimate -------------------------------------------------------
    per_row_flops = 2 * (C * 1024 + 1024 * 512 + 512 * 128) * 2   # two branches
    per_row_flops += 2 * (256 * 256 + 256 * 128 + 128 * 64 + 64)
    bytes_accessed = int(
        xl.size * xl.dtype.itemsize
        + sum(a.size * a.dtype.itemsize for a in flat_params)
        + Bp * 4
    )
    cost = pl.CostEstimate(
        flops=int(Bp * per_row_flops),
        transcendentals=int(Bp),
        bytes_accessed=bytes_accessed,
    )

    # v7x has only 64 MiB physical VMEM -> stay at 32 MiB scoped; elsewhere
    # (128 MiB physical) raise to 64 MiB (v5e's scoped default is only 16 MiB).
    vmem_limit = (32 << 20) if is_v7 else (64 << 20)

    kernel = functools.partial(inference_model_kernel, split_combine=is_v5)

    out = pl.pallas_call(
        kernel,
        out_shape=jax.ShapeDtypeStruct((Bp, 1), jnp.float32),
        grid=grid,
        in_specs=in_specs,
        out_specs=out_spec,
        compiler_params=pltpu.CompilerParams(
            dimension_semantics=("parallel",),
            vmem_limit_bytes=vmem_limit,
        ),
        cost_estimate=cost,
    )(xl, *flat_params)

    return out[:B]


# ---------------------------------------------------------------------------
# Deterministic parameter init (synthetic; mirrors nn.Linear shapes)
# ---------------------------------------------------------------------------
def init_params(num_classes, key):
    layer_dims = [
        # features
        (num_classes, 1024), (1024, 512), (512, 128),
        # labels
        (num_classes, 1024), (1024, 512), (512, 128),
        # combine
        (256, 256), (256, 128), (128, 64), (64, 1),
    ]
    params = []
    for (fan_in, fan_out) in layer_dims:
        key, kw, kb = jax.random.split(key, 3)
        bound = 1.0 / jnp.sqrt(jnp.float32(fan_in))
        w = jax.random.uniform(kw, (fan_in, fan_out), jnp.float32, -bound, bound)
        b = jax.random.uniform(kb, (fan_out,), jnp.float32, -bound, bound)
        params.append((w, b))
    return params


# Pure-JAX reference with matching arithmetic (bf16 matmul inputs, f32 acc).
def reference_forward(x, lbl, params):
    def dense(h, w, b, relu=True):
        y = jnp.dot(h.astype(jnp.bfloat16), w.astype(jnp.bfloat16),
                    preferred_element_type=jnp.float32) + b
        return jnp.maximum(y, 0.0) if relu else y

    (fw1, fb1), (fw2, fb2), (fw3, fb3) = params[0:3]
    (lw1, lb1), (lw2, lb2), (lw3, lb3) = params[3:6]
    (cw1, cb1), (cw2, cb2), (cw3, cb3), (cw4, cb4) = params[6:10]

    hx = dense(dense(dense(x, fw1, fb1), fw2, fb2), fw3, fb3)
    hl = dense(dense(dense(lbl, lw1, lb1), lw2, lb2), lw3, lb3)
    h = jnp.concatenate([hx, hl], axis=1)
    h = dense(h, cw1, cb1)
    h = dense(h, cw2, cb2)
    h = dense(h, cw3, cb3)
    logits = h @ cw4 + cb4          # final layer in f32, as in the kernel
    return 1.0 / (1.0 + jnp.exp(-logits))


if __name__ == "__main__":
    num_classes = 16
    batch = 12          # deliberately not a multiple of the tile -> tests padding

    key = jax.random.PRNGKey(0)
    key, kx, kl = jax.random.split(key, 3)
    # x: posterior-like scores, l: one-hot labels — both (B, num_classes)
    x = jax.nn.softmax(jax.random.normal(kx, (batch, num_classes), jnp.float32), axis=-1)
    lbl = jax.nn.one_hot(
        jax.random.randint(kl, (batch,), 0, num_classes), num_classes, dtype=jnp.float32
    )

    params = init_params(num_classes, key)
    flat_params = prepare_params(params)   # one-time bf16/f32 cast of all weights

    # tile heuristic -> TB=8, 2-step "parallel" batch grid (tiling + padding path)
    out = inference_model_forward(x, lbl, flat_params)
    out = jax.block_until_ready(out)

    ref = jax.block_until_ready(reference_forward(x, lbl, params))
    assert out.shape == (batch, 1)
    assert jnp.allclose(out, ref, atol=2e-3, rtol=2e-3)

    print("KERNEL_OK")
</pallas_src>

<mosaic_0001>
module attributes {stable_mosaic.version = 11 : i64} {
  func.func @inference_model_kernel(%arg0: i32, %arg1: memref<2x8x16xbf16, #tpu.memory_space<vmem>>, %arg2: memref<16x1024xbf16, #tpu.memory_space<vmem>>, %arg3: memref<1x1024xf32, #tpu.memory_space<vmem>>, %arg4: memref<1024x512xbf16, #tpu.memory_space<vmem>>, %arg5: memref<1x512xf32, #tpu.memory_space<vmem>>, %arg6: memref<512x128xbf16, #tpu.memory_space<vmem>>, %arg7: memref<1x128xf32, #tpu.memory_space<vmem>>, %arg8: memref<16x1024xbf16, #tpu.memory_space<vmem>>, %arg9: memref<1x1024xf32, #tpu.memory_space<vmem>>, %arg10: memref<1024x512xbf16, #tpu.memory_space<vmem>>, %arg11: memref<1x512xf32, #tpu.memory_space<vmem>>, %arg12: memref<512x128xbf16, #tpu.memory_space<vmem>>, %arg13: memref<1x128xf32, #tpu.memory_space<vmem>>, %arg14: memref<256x256xbf16, #tpu.memory_space<vmem>>, %arg15: memref<1x256xf32, #tpu.memory_space<vmem>>, %arg16: memref<256x128xbf16, #tpu.memory_space<vmem>>, %arg17: memref<1x128xf32, #tpu.memory_space<vmem>>, %arg18: memref<128x64xbf16, #tpu.memory_space<vmem>>, %arg19: memref<1x64xf32, #tpu.memory_space<vmem>>, %arg20: memref<1x64xf32, #tpu.memory_space<vmem>>, %arg21: memref<1x1xf32, #tpu.memory_space<vmem>>, %arg22: memref<8x1xf32, #tpu.memory_space<vmem>>) attributes {dimension_semantics = [#tpu.dimension_semantics<parallel>], iteration_bounds = array<i64: 2>, scalar_prefetch = 0 : i64, scratch_operands = 0 : i64, tpu.core_type = #tpu.core_type<tc>, window_params = [{transform_indices = @transform_0, window_bounds = array<i64: 2, 8, 16>}, {pipeline_mode = #tpu.pipeline_mode<synchronous>, transform_indices = @transform_1, window_bounds = array<i64: 16, 1024>}, {pipeline_mode = #tpu.pipeline_mode<synchronous>, transform_indices = @transform_2, window_bounds = array<i64: 1, 1024>}, {pipeline_mode = #tpu.pipeline_mode<synchronous>, transform_indices = @transform_3, window_bounds = array<i64: 1024, 512>}, {pipeline_mode = #tpu.pipeline_mode<synchronous>, transform_indices = @transform_4, window_bounds = array<i64: 1, 512>}, {pipeline_mode = #tpu.pipeline_mode<synchronous>, transform_indices = @transform_5, window_bounds = array<i64: 512, 128>}, {pipeline_mode = #tpu.pipeline_mode<synchronous>, transform_indices = @transform_6, window_bounds = array<i64: 1, 128>}, {pipeline_mode = #tpu.pipeline_mode<synchronous>, transform_indices = @transform_7, window_bounds = array<i64: 16, 1024>}, {pipeline_mode = #tpu.pipeline_mode<synchronous>, transform_indices = @transform_8, window_bounds = array<i64: 1, 1024>}, {pipeline_mode = #tpu.pipeline_mode<synchronous>, transform_indices = @transform_9, window_bounds = array<i64: 1024, 512>}, {pipeline_mode = #tpu.pipeline_mode<synchronous>, transform_indices = @transform_10, window_bounds = array<i64: 1, 512>}, {pipeline_mode = #tpu.pipeline_mode<synchronous>, transform_indices = @transform_11, window_bounds = array<i64: 512, 128>}, {pipeline_mode = #tpu.pipeline_mode<synchronous>, transform_indices = @transform_12, window_bounds = array<i64: 1, 128>}, {pipeline_mode = #tpu.pipeline_mode<synchronous>, transform_indices = @transform_13, window_bounds = array<i64: 256, 256>}, {pipeline_mode = #tpu.pipeline_mode<synchronous>, transform_indices = @transform_14, window_bounds = array<i64: 1, 256>}, {pipeline_mode = #tpu.pipeline_mode<synchronous>, transform_indices = @transform_15, window_bounds = array<i64: 256, 128>}, {pipeline_mode = #tpu.pipeline_mode<synchronous>, transform_indices = @transform_16, window_bounds = array<i64: 1, 128>}, {pipeline_mode = #tpu.pipeline_mode<synchronous>, transform_indices = @transform_17, window_bounds = array<i64: 128, 64>}, {pipeline_mode = #tpu.pipeline_mode<synchronous>, transform_indices = @transform_18, window_bounds = array<i64: 1, 64>}, {pipeline_mode = #tpu.pipeline_mode<synchronous>, transform_indices = @transform_19, window_bounds = array<i64: 1, 64>}, {pipeline_mode = #tpu.pipeline_mode<synchronous>, transform_indices = @transform_20, window_bounds = array<i64: 1, 1>}, {transform_indices = @transform_21, window_bounds = array<i64: 8, 1>}]} {
    %c0 = arith.constant 0 : index
    %c0_0 = arith.constant 0 : index
    %c0_1 = arith.constant 0 : index
    %0 = vector.load %arg1[%c0, %c0_0, %c0_1] : memref<2x8x16xbf16, #tpu.memory_space<vmem>>, vector<1x8x16xbf16>
    %1 = vector.shape_cast %0 : vector<1x8x16xbf16> to vector<8x16xbf16>
    %c1 = arith.constant 1 : index
    %c0_2 = arith.constant 0 : index
    %c0_3 = arith.constant 0 : index
    %2 = vector.load %arg1[%c1, %c0_2, %c0_3] : memref<2x8x16xbf16, #tpu.memory_space<vmem>>, vector<1x8x16xbf16>
    %3 = vector.shape_cast %2 : vector<1x8x16xbf16> to vector<8x16xbf16>
    %c0_4 = arith.constant 0 : index
    %c0_5 = arith.constant 0 : index
    %4 = vector.load %arg2[%c0_4, %c0_5] : memref<16x1024xbf16, #tpu.memory_space<vmem>>, vector<16x1024xbf16>
    %cst = arith.constant dense<0.000000e+00> : vector<8x1024xf32>
    %5 = tpu.matmul %1, %4, %cst {dimension_numbers = #tpu.dot_dimension_numbers<[1], [0], [0], [1], [0, 0, 1, 1], [], []>} : vector<8x16xbf16>, vector<16x1024xbf16>, vector<8x1024xf32> -> vector<8x1024xf32>
    %c0_6 = arith.constant 0 : index
    %c0_7 = arith.constant 0 : index
    %6 = vector.load %arg3[%c0_6, %c0_7] : memref<1x1024xf32, #tpu.memory_space<vmem>>, vector<1x1024xf32>
    %7 = vector.broadcast %6 : vector<1x1024xf32> to vector<8x1024xf32>
    %8 = arith.addf %5, %7 : vector<8x1024xf32>
    %cst_8 = arith.constant 0.000000e+00 : f32
    %9 = vector.broadcast %cst_8 : f32 to vector<8x1024xf32>
    %10 = arith.maximumf %8, %9 : vector<8x1024xf32>
    %11 = arith.truncf %10 : vector<8x1024xf32> to vector<8x1024xbf16>
    %c0_9 = arith.constant 0 : index
    %c0_10 = arith.constant 0 : index
    %12 = vector.load %arg4[%c0_9, %c0_10] : memref<1024x512xbf16, #tpu.memory_space<vmem>>, vector<1024x512xbf16>
    %cst_11 = arith.constant dense<0.000000e+00> : vector<8x512xf32>
    %13 = tpu.matmul %11, %12, %cst_11 {dimension_numbers = #tpu.dot_dimension_numbers<[1], [0], [0], [1], [0, 0, 1, 1], [], []>} : vector<8x1024xbf16>, vector<1024x512xbf16>, vector<8x512xf32> -> vector<8x512xf32>
    %c0_12 = arith.constant 0 : index
    %c0_13 = arith.constant 0 : index
    %14 = vector.load %arg5[%c0_12, %c0_13] : memref<1x512xf32, #tpu.memory_space<vmem>>, vector<1x512xf32>
    %15 = vector.broadcast %14 : vector<1x512xf32> to vector<8x512xf32>
    %16 = arith.addf %13, %15 : vector<8x512xf32>
    %cst_14 = arith.constant 0.000000e+00 : f32
    %17 = vector.broadcast %cst_14 : f32 to vector<8x512xf32>
    %18 = arith.maximumf %16, %17 : vector<8x512xf32>
    %19 = arith.truncf %18 : vector<8x512xf32> to vector<8x512xbf16>
    %c0_15 = arith.constant 0 : index
    %c0_16 = arith.constant 0 : index
    %20 = vector.load %arg6[%c0_15, %c0_16] : memref<512x128xbf16, #tpu.memory_space<vmem>>, vector<512x128xbf16>
    %cst_17 = arith.constant dense<0.000000e+00> : vector<8x128xf32>
    %21 = tpu.matmul %19, %20, %cst_17 {dimension_numbers = #tpu.dot_dimension_numbers<[1], [0], [0], [1], [0, 0, 1, 1], [], []>} : vector<8x512xbf16>, vector<512x128xbf16>, vector<8x128xf32> -> vector<8x128xf32>
    %c0_18 = arith.constant 0 : index
    %c0_19 = arith.constant 0 : index
    %22 = vector.load %arg7[%c0_18, %c0_19] : memref<1x128xf32, #tpu.memory_space<vmem>>, vector<1x128xf32>
    %23 = vector.broadcast %22 : vector<1x128xf32> to vector<8x128xf32>
    %24 = arith.addf %21, %23 : vector<8x128xf32>
    %cst_20 = arith.constant 0.000000e+00 : f32
    %25 = vector.broadcast %cst_20 : f32 to vector<8x128xf32>
    %26 = arith.maximumf %24, %25 : vector<8x128xf32>
    %27 = arith.truncf %26 : vector<8x128xf32> to vector<8x128xbf16>
    %c0_21 = arith.constant 0 : index
    %c0_22 = arith.constant 0 : index
    %28 = vector.load %arg8[%c0_21, %c0_22] : memref<16x1024xbf16, #tpu.memory_space<vmem>>, vector<16x1024xbf16>
    %cst_23 = arith.constant dense<0.000000e+00> : vector<8x1024xf32>
    %29 = tpu.matmul %3, %28, %cst_23 {dimension_numbers = #tpu.dot_dimension_numbers<[1], [0], [0], [1], [0, 0, 1, 1], [], []>} : vector<8x16xbf16>, vector<16x1024xbf16>, vector<8x1024xf32> -> vector<8x1024xf32>
    %c0_24 = arith.constant 0 : index
    %c0_25 = arith.constant 0 : index
    %30 = vector.load %arg9[%c0_24, %c0_25] : memref<1x1024xf32, #tpu.memory_space<vmem>>, vector<1x1024xf32>
    %31 = vector.broadcast %30 : vector<1x1024xf32> to vector<8x1024xf32>
    %32 = arith.addf %29, %31 : vector<8x1024xf32>
    %cst_26 = arith.constant 0.000000e+00 : f32
    %33 = vector.broadcast %cst_26 : f32 to vector<8x1024xf32>
    %34 = arith.maximumf %32, %33 : vector<8x1024xf32>
    %35 = arith.truncf %34 : vector<8x1024xf32> to vector<8x1024xbf16>
    %c0_27 = arith.constant 0 : index
    %c0_28 = arith.constant 0 : index
    %36 = vector.load %arg10[%c0_27, %c0_28] : memref<1024x512xbf16, #tpu.memory_space<vmem>>, vector<1024x512xbf16>
    %cst_29 = arith.constant dense<0.000000e+00> : vector<8x512xf32>
    %37 = tpu.matmul %35, %36, %cst_29 {dimension_numbers = #tpu.dot_dimension_numbers<[1], [0], [0], [1], [0, 0, 1, 1], [], []>} : vector<8x1024xbf16>, vector<1024x512xbf16>, vector<8x512xf32> -> vector<8x512xf32>
    %c0_30 = arith.constant 0 : index
    %c0_31 = arith.constant 0 : index
    %38 = vector.load %arg11[%c0_30, %c0_31] : memref<1x512xf32, #tpu.memory_space<vmem>>, vector<1x512xf32>
    %39 = vector.broadcast %38 : vector<1x512xf32> to vector<8x512xf32>
    %40 = arith.addf %37, %39 : vector<8x512xf32>
    %cst_32 = arith.constant 0.000000e+00 : f32
    %41 = vector.broadcast %cst_32 : f32 to vector<8x512xf32>
    %42 = arith.maximumf %40, %41 : vector<8x512xf32>
    %43 = arith.truncf %42 : vector<8x512xf32> to vector<8x512xbf16>
    %c0_33 = arith.constant 0 : index
    %c0_34 = arith.constant 0 : index
    %44 = vector.load %arg12[%c0_33, %c0_34] : memref<512x128xbf16, #tpu.memory_space<vmem>>, vector<512x128xbf16>
    %cst_35 = arith.constant dense<0.000000e+00> : vector<8x128xf32>
    %45 = tpu.matmul %43, %44, %cst_35 {dimension_numbers = #tpu.dot_dimension_numbers<[1], [0], [0], [1], [0, 0, 1, 1], [], []>} : vector<8x512xbf16>, vector<512x128xbf16>, vector<8x128xf32> -> vector<8x128xf32>
    %c0_36 = arith.constant 0 : index
    %c0_37 = arith.constant 0 : index
    %46 = vector.load %arg13[%c0_36, %c0_37] : memref<1x128xf32, #tpu.memory_space<vmem>>, vector<1x128xf32>
    %47 = vector.broadcast %46 : vector<1x128xf32> to vector<8x128xf32>
    %48 = arith.addf %45, %47 : vector<8x128xf32>
    %cst_38 = arith.constant 0.000000e+00 : f32
    %49 = vector.broadcast %cst_38 : f32 to vector<8x128xf32>
    %50 = arith.maximumf %48, %49 : vector<8x128xf32>
    %51 = arith.truncf %50 : vector<8x128xf32> to vector<8x128xbf16>
    %52 = tpu.concatenate %27, %51 in 1 : vector<8x128xbf16>, vector<8x128xbf16> -> vector<8x256xbf16>
    %c0_39 = arith.constant 0 : index
    %c0_40 = arith.constant 0 : index
    %53 = vector.load %arg14[%c0_39, %c0_40] : memref<256x256xbf16, #tpu.memory_space<vmem>>, vector<256x256xbf16>
    %cst_41 = arith.constant dense<0.000000e+00> : vector<8x256xf32>
    %54 = tpu.matmul %52, %53, %cst_41 {dimension_numbers = #tpu.dot_dimension_numbers<[1], [0], [0], [1], [0, 0, 1, 1], [], []>} : vector<8x256xbf16>, vector<256x256xbf16>, vector<8x256xf32> -> vector<8x256xf32>
    %c0_42 = arith.constant 0 : index
    %c0_43 = arith.constant 0 : index
    %55 = vector.load %arg15[%c0_42, %c0_43] : memref<1x256xf32, #tpu.memory_space<vmem>>, vector<1x256xf32>
    %56 = vector.broadcast %55 : vector<1x256xf32> to vector<8x256xf32>
    %57 = arith.addf %54, %56 : vector<8x256xf32>
    %cst_44 = arith.constant 0.000000e+00 : f32
    %58 = vector.broadcast %cst_44 : f32 to vector<8x256xf32>
    %59 = arith.maximumf %57, %58 : vector<8x256xf32>
    %60 = arith.truncf %59 : vector<8x256xf32> to vector<8x256xbf16>
    %c0_45 = arith.constant 0 : index
    %c0_46 = arith.constant 0 : index
    %61 = vector.load %arg16[%c0_45, %c0_46] : memref<256x128xbf16, #tpu.memory_space<vmem>>, vector<256x128xbf16>
    %cst_47 = arith.constant dense<0.000000e+00> : vector<8x128xf32>
    %62 = tpu.matmul %60, %61, %cst_47 {dimension_numbers = #tpu.dot_dimension_numbers<[1], [0], [0], [1], [0, 0, 1, 1], [], []>} : vector<8x256xbf16>, vector<256x128xbf16>, vector<8x128xf32> -> vector<8x128xf32>
    %c0_48 = arith.constant 0 : index
    %c0_49 = arith.constant 0 : index
    %63 = vector.load %arg17[%c0_48, %c0_49] : memref<1x128xf32, #tpu.memory_space<vmem>>, vector<1x128xf32>
    %64 = vector.broadcast %63 : vector<1x128xf32> to vector<8x128xf32>
    %65 = arith.addf %62, %64 : vector<8x128xf32>
    %cst_50 = arith.constant 0.000000e+00 : f32
    %66 = vector.broadcast %cst_50 : f32 to vector<8x128xf32>
    %67 = arith.maximumf %65, %66 : vector<8x128xf32>
    %68 = arith.truncf %67 : vector<8x128xf32> to vector<8x128xbf16>
    %c0_51 = arith.constant 0 : index
    %c0_52 = arith.constant 0 : index
    %69 = vector.load %arg18[%c0_51, %c0_52] : memref<128x64xbf16, #tpu.memory_space<vmem>>, vector<128x64xbf16>
    %cst_53 = arith.constant dense<0.000000e+00> : vector<8x64xf32>
    %70 = tpu.matmul %68, %69, %cst_53 {dimension_numbers = #tpu.dot_dimension_numbers<[1], [0], [0], [1], [0, 0, 1, 1], [], []>} : vector<8x128xbf16>, vector<128x64xbf16>, vector<8x64xf32> -> vector<8x64xf32>
    %c0_54 = arith.constant 0 : index
    %c0_55 = arith.constant 0 : index
    %71 = vector.load %arg19[%c0_54, %c0_55] : memref<1x64xf32, #tpu.memory_space<vmem>>, vector<1x64xf32>
    %72 = vector.broadcast %71 : vector<1x64xf32> to vector<8x64xf32>
    %73 = arith.addf %70, %72 : vector<8x64xf32>
    %cst_56 = arith.constant 0.000000e+00 : f32
    %74 = vector.broadcast %cst_56 : f32 to vector<8x64xf32>
    %75 = arith.maximumf %73, %74 : vector<8x64xf32>
    %c0_57 = arith.constant 0 : index
    %c0_58 = arith.constant 0 : index
    %76 = vector.load %arg20[%c0_57, %c0_58] : memref<1x64xf32, #tpu.memory_space<vmem>>, vector<1x64xf32>
    %77 = vector.broadcast %76 : vector<1x64xf32> to vector<8x64xf32>
    %78 = arith.mulf %75, %77 : vector<8x64xf32>
    %cst_59 = arith.constant dense<0.000000e+00> : vector<8xf32>
    %79 = vector.multi_reduction <add>, %78, %cst_59 [1] : vector<8x64xf32> to vector<8xf32>
    %80 = vector.shape_cast %79 : vector<8xf32> to vector<8x1xf32>
    %c0_60 = arith.constant 0 : index
    %c0_61 = arith.constant 0 : index
    %81 = vector.load %arg21[%c0_60, %c0_61] : memref<1x1xf32, #tpu.memory_space<vmem>>, vector<1x1xf32>
    %82 = vector.broadcast %81 : vector<1x1xf32> to vector<8x1xf32>
    %83 = arith.addf %80, %82 : vector<8x1xf32>
    %cst_62 = arith.constant 0.000000e+00 : f32
    %84 = vector.broadcast %cst_62 : f32 to vector<8x1xf32>
    %85 = arith.subf %84, %83 : vector<8x1xf32>
    %86 = math.exp %85 : vector<8x1xf32>
    %cst_63 = arith.constant 1.000000e+00 : f32
    %87 = vector.broadcast %cst_63 : f32 to vector<8x1xf32>
    %88 = arith.addf %87, %86 : vector<8x1xf32>
    %cst_64 = arith.constant 1.000000e+00 : f32
    %89 = vector.broadcast %cst_64 : f32 to vector<8x1xf32>
    %90 = arith.divf %89, %88 : vector<8x1xf32>
    %c0_65 = arith.constant 0 : index
    %c0_66 = arith.constant 0 : index
    %91 = vector.load %arg22[%c0_65, %c0_66] : memref<8x1xf32, #tpu.memory_space<vmem>>, vector<8x1xf32>
    tpu.vector_store %arg22[%c0_65, %c0_66], %90 {strides = array<i32>} : memref<8x1xf32, #tpu.memory_space<vmem>>, vector<8x1xf32>,
    return
  }
  func.func @transform_0(%arg0: i32) -> (i32, i32, i32) {
    %c0_i32 = arith.constant 0 : i32
    %c0_i32_0 = arith.constant 0 : i32
    %c0_i32_1 = arith.constant 0 : i32
    return %c0_i32, %arg0, %c0_i32_0 : i32, i32, i32
  }
  func.func @transform_1(%arg0: i32) -> (i32, i32) {
    %c0_i32 = arith.constant 0 : i32
    %c0_i32_0 = arith.constant 0 : i32
    %c0_i32_1 = arith.constant 0 : i32
    return %c0_i32, %c0_i32_0 : i32, i32
  }
  func.func @transform_2(%arg0: i32) -> (i32, i32) {
    %c0_i32 = arith.constant 0 : i32
    %c0_i32_0 = arith.constant 0 : i32
    %c0_i32_1 = arith.constant 0 : i32
    return %c0_i32, %c0_i32_0 : i32, i32
  }
  func.func @transform_3(%arg0: i32) -> (i32, i32) {
    %c0_i32 = arith.constant 0 : i32
    %c0_i32_0 = arith.constant 0 : i32
    %c0_i32_1 = arith.constant 0 : i32
    return %c0_i32, %c0_i32_0 : i32, i32
  }
  func.func @transform_4(%arg0: i32) -> (i32, i32) {
    %c0_i32 = arith.constant 0 : i32
    %c0_i32_0 = arith.constant 0 : i32
    %c0_i32_1 = arith.constant 0 : i32
    return %c0_i32, %c0_i32_0 : i32, i32
  }
  func.func @transform_5(%arg0: i32) -> (i32, i32) {
    %c0_i32 = arith.constant 0 : i32
    %c0_i32_0 = arith.constant 0 : i32
    %c0_i32_1 = arith.constant 0 : i32
    return %c0_i32, %c0_i32_0 : i32, i32
  }
  func.func @transform_6(%arg0: i32) -> (i32, i32) {
    %c0_i32 = arith.constant 0 : i32
    %c0_i32_0 = arith.constant 0 : i32
    %c0_i32_1 = arith.constant 0 : i32
    return %c0_i32, %c0_i32_0 : i32, i32
  }
  func.func @transform_7(%arg0: i32) -> (i32, i32) {
    %c0_i32 = arith.constant 0 : i32
    %c0_i32_0 = arith.constant 0 : i32
    %c0_i32_1 = arith.constant 0 : i32
    return %c0_i32, %c0_i32_0 : i32, i32
  }
  func.func @transform_8(%arg0: i32) -> (i32, i32) {
    %c0_i32 = arith.constant 0 : i32
    %c0_i32_0 = arith.constant 0 : i32
    %c0_i32_1 = arith.constant 0 : i32
    return %c0_i32, %c0_i32_0 : i32, i32
  }
  func.func @transform_9(%arg0: i32) -> (i32, i32) {
    %c0_i32 = arith.constant 0 : i32
    %c0_i32_0 = arith.constant 0 : i32
    %c0_i32_1 = arith.constant 0 : i32
    return %c0_i32, %c0_i32_0 : i32, i32
  }
  func.func @transform_10(%arg0: i32) -> (i32, i32) {
    %c0_i32 = arith.constant 0 : i32
    %c0_i32_0 = arith.constant 0 : i32
    %c0_i32_1 = arith.constant 0 : i32
    return %c0_i32, %c0_i32_0 : i32, i32
  }
  func.func @transform_11(%arg0: i32) -> (i32, i32) {
    %c0_i32 = arith.constant 0 : i32
    %c0_i32_0 = arith.constant 0 : i32
    %c0_i32_1 = arith.constant 0 : i32
    return %c0_i32, %c0_i32_0 : i32, i32
  }
  func.func @transform_12(%arg0: i32) -> (i32, i32) {
    %c0_i32 = arith.constant 0 : i32
    %c0_i32_0 = arith.constant 0 : i32
    %c0_i32_1 = arith.constant 0 : i32
    return %c0_i32, %c0_i32_0 : i32, i32
  }
  func.func @transform_13(%arg0: i32) -> (i32, i32) {
    %c0_i32 = arith.constant 0 : i32
    %c0_i32_0 = arith.constant 0 : i32
    %c0_i32_1 = arith.constant 0 : i32
    return %c0_i32, %c0_i32_0 : i32, i32
  }
  func.func @transform_14(%arg0: i32) -> (i32, i32) {
    %c0_i32 = arith.constant 0 : i32
    %c0_i32_0 = arith.constant 0 : i32
    %c0_i32_1 = arith.constant 0 : i32
    return %c0_i32, %c0_i32_0 : i32, i32
  }
  func.func @transform_15(%arg0: i32) -> (i32, i32) {
    %c0_i32 = arith.constant 0 : i32
    %c0_i32_0 = arith.constant 0 : i32
    %c0_i32_1 = arith.constant 0 : i32
    return %c0_i32, %c0_i32_0 : i32, i32
  }
  func.func @transform_16(%arg0: i32) -> (i32, i32) {
    %c0_i32 = arith.constant 0 : i32
    %c0_i32_0 = arith.constant 0 : i32
    %c0_i32_1 = arith.constant 0 : i32
    return %c0_i32, %c0_i32_0 : i32, i32
  }
  func.func @transform_17(%arg0: i32) -> (i32, i32) {
    %c0_i32 = arith.constant 0 : i32
    %c0_i32_0 = arith.constant 0 : i32
    %c0_i32_1 = arith.constant 0 : i32
    return %c0_i32, %c0_i32_0 : i32, i32
  }
  func.func @transform_18(%arg0: i32) -> (i32, i32) {
    %c0_i32 = arith.constant 0 : i32
    %c0_i32_0 = arith.constant 0 : i32
    %c0_i32_1 = arith.constant 0 : i32
    return %c0_i32, %c0_i32_0 : i32, i32
  }
  func.func @transform_19(%arg0: i32) -> (i32, i32) {
    %c0_i32 = arith.constant 0 : i32
    %c0_i32_0 = arith.constant 0 : i32
    %c0_i32_1 = arith.constant 0 : i32
    return %c0_i32, %c0_i32_0 : i32, i32
  }
  func.func @transform_20(%arg0: i32) -> (i32, i32) {
    %c0_i32 = arith.constant 0 : i32
    %c0_i32_0 = arith.constant 0 : i32
    %c0_i32_1 = arith.constant 0 : i32
    return %c0_i32, %c0_i32_0 : i32, i32
  }
  func.func @transform_21(%arg0: i32) -> (i32, i32) {
    %c0_i32 = arith.constant 0 : i32
    %c0_i32_0 = arith.constant 0 : i32
    return %arg0, %c0_i32 : i32, i32
  }
}

</mosaic_0001>

<llo_original>
// kernel: tpu_custom_call.1
$region0: #{tpu_custom_call.1}
  #allocation0 [shape = 'u32[]', space=smem, size = 0x4, offset = 0x4, fixed_abs, tag = 'smem constant byte address 0x4 - core index']
  #allocation1 [shape = 'u32[144,128]{1,0:T(1,128)}', space=vmem, size = 0x12000, scoped, tag = 'internal scratch']
  #allocation2 [shape = 'f32[1,1]{1,0:T(1,128)S(1)}', space=vmem, size = 0x200, scoped, tag = 'scoped memory for tpu_custom_call.1']
  %s0 = inlined_call_operand.hbm [shape: bf16[2,16,16], index: 0, kind: input, shape index: {}]
  %s1 = inlined_call_operand.hbm [shape: bf16[16,1024], index: 1, kind: input, shape index: {}]
  %s2 = inlined_call_operand.hbm [shape: f32[1,1024], index: 2, kind: input, shape index: {}]
  %s3 = inlined_call_operand.hbm [shape: bf16[1024,512], index: 3, kind: input, shape index: {}]
  %s4 = inlined_call_operand.hbm [shape: f32[1,512], index: 4, kind: input, shape index: {}]
  %s5 = inlined_call_operand.hbm [shape: bf16[512,128], index: 5, kind: input, shape index: {}]
  %s6 = inlined_call_operand.hbm [shape: f32[1,128], index: 6, kind: input, shape index: {}]
  %s7 = inlined_call_operand.hbm [shape: bf16[16,1024], index: 7, kind: input, shape index: {}]
  %s8 = inlined_call_operand.hbm [shape: f32[1,1024], index: 8, kind: input, shape index: {}]
  %s9 = inlined_call_operand.hbm [shape: bf16[1024,512], index: 9, kind: input, shape index: {}]
  %s10 = inlined_call_operand.hbm [shape: f32[1,512], index: 10, kind: input, shape index: {}]
  %s11 = inlined_call_operand.hbm [shape: bf16[512,128], index: 11, kind: input, shape index: {}]
  %s12 = inlined_call_operand.hbm [shape: f32[1,128], index: 12, kind: input, shape index: {}]
  %s13 = inlined_call_operand.hbm [shape: bf16[256,256], index: 13, kind: input, shape index: {}]
  %s14 = inlined_call_operand.hbm [shape: f32[1,256], index: 14, kind: input, shape index: {}]
  %s15 = inlined_call_operand.hbm [shape: bf16[256,128], index: 15, kind: input, shape index: {}]
  %s16 = inlined_call_operand.hbm [shape: f32[1,128], index: 16, kind: input, shape index: {}]
  %s17 = inlined_call_operand.hbm [shape: bf16[128,64], index: 17, kind: input, shape index: {}]
  %s18 = inlined_call_operand.hbm [shape: f32[1,64], index: 18, kind: input, shape index: {}]
  %s19 = inlined_call_operand.hbm [shape: f32[1,64], index: 19, kind: input, shape index: {}]
  %s20 = inlined_call_operand.<no memory space> [shape: f32[1,1], index: 20, kind: input, shape index: {}]
  %s21 = inlined_call_operand.hbm [shape: f32[16,1], index: 21, kind: output, shape index: {}]
  %s22 = sld [smem:[#allocation0]]
  $region197: #{tpu_custom_call.1} parent=0
    _
  %s24 = ssub.s32 1, %s22
  %s25 = scalar_select 0, %s24, %s22
  %v26 = vstv %s20
  %27 = vst [vmem:[#allocation2] sm:$0x1] %v26
  $region1: #{tpu_custom_call.1} parent=0
    #allocation3 [shape = 'u8[8192]{0}', space=vmem, size = 0x2000, scoped, tag = 'input window, operand 0']
    #allocation4 [shape = 's32[2]{0}', space=sflag, size = 0x8, scoped, tag = 'scoped memory for tpu_custom_call.1']
    #allocation5 [shape = 's32[2]{0}', space=sflag, size = 0x8, scoped, tag = 'scoped memory for tpu_custom_call.1']
    #allocation6 [shape = 'u8[32768]{0}', space=vmem, size = 0x8000, scoped, tag = 'input window, operand 1, single buffered']
    #allocation7 [shape = 's32[1]{0}', space=sflag, size = 0x4, scoped, tag = 'scoped memory for tpu_custom_call.1']
    #allocation8 [shape = 'u8[4096]{0}', space=vmem, size = 0x1000, scoped, tag = 'input window, operand 2, single buffered']
    #allocation9 [shape = 'u8[1048576]{0}', space=vmem, size = 0x100000, scoped, tag = 'input window, operand 3, single buffered']
    #allocation10 [shape = 's32[1]{0}', space=sflag, size = 0x4, scoped, tag = 'scoped memory for tpu_custom_call.1']
    #allocation11 [shape = 'u8[2048]{0}', space=vmem, size = 0x800, scoped, tag = 'input window, operand 4, single buffered']
    #allocation12 [shape = 'u8[131072]{0}', space=vmem, size = 0x20000, scoped, tag = 'input window, operand 5, single buffered']
    #allocation13 [shape = 's32[1]{0}', space=sflag, size = 0x4, scoped, tag = 'scoped memory for tpu_custom_call.1']
    #allocation14 [shape = 'u8[512]{0}', space=vmem, size = 0x400, scoped, tag = 'input window, operand 6, single buffered']
    #allocation15 [shape = 'u8[32768]{0}', space=vmem, size = 0x8000, scoped, tag = 'input window, operand 7, single buffered']
    #allocation16 [shape = 's32[1]{0}', space=sflag, size = 0x4, scoped, tag = 'scoped memory for tpu_custom_call.1']
    #allocation17 [shape = 'u8[4096]{0}', space=vmem, size = 0x1000, scoped, tag = 'input window, operand 8, single buffered']
    #allocation18 [shape = 'u8[1048576]{0}', space=vmem, size = 0x100000, scoped, tag = 'input window, operand 9, single buffered']
    #allocation19 [shape = 's32[1]{0}', space=sflag, size = 0x4, scoped, tag = 'scoped memory for tpu_custom_call.1']
    #allocation20 [shape = 'u8[2048]{0}', space=vmem, size = 0x800, scoped, tag = 'input window, operand 10, single buffered']
    #allocation21 [shape = 'u8[131072]{0}', space=vmem, size = 0x20000, scoped, tag = 'input window, operand 11, single buffered']
    #allocation22 [shape = 's32[1]{0}', space=sflag, size = 0x4, scoped, tag = 'scoped memory for tpu_custom_call.1']
    #allocation23 [shape = 'u8[512]{0}', space=vmem, size = 0x400, scoped, tag = 'input window, operand 12, single buffered']
    #allocation24 [shape = 'u8[131072]{0}', space=vmem, size = 0x20000, scoped, tag = 'input window, operand 13, single buffered']
    #allocation25 [shape = 's32[1]{0}', space=sflag, size = 0x4, scoped, tag = 'scoped memory for tpu_custom_call.1']
    #allocation26 [shape = 'u8[1024]{0}', space=vmem, size = 0x400, scoped, tag = 'input window, operand 14, single buffered']
    #allocation27 [shape = 'u8[65536]{0}', space=vmem, size = 0x10000, scoped, tag = 'input window, operand 15, single buffered']
    #allocation28 [shape = 's32[1]{0}', space=sflag, size = 0x4, scoped, tag = 'scoped memory for tpu_custom_call.1']
    #allocation29 [shape = 'u8[512]{0}', space=vmem, size = 0x400, scoped, tag = 'input window, operand 16, single buffered']
    #allocation30 [shape = 'u8[32768]{0}', space=vmem, size = 0x8000, scoped, tag = 'input window, operand 17, single buffered']
    #allocation31 [shape = 's32[1]{0}', space=sflag, size = 0x4, scoped, tag = 'scoped memory for tpu_custom_call.1']
    #allocation32 [shape = 'u8[512]{0}', space=vmem, size = 0x400, scoped, tag = 'input window, operand 18, single buffered']
    #allocation33 [shape = 'u8[512]{0}', space=vmem, size = 0x400, scoped, tag = 'input window, operand 19, single buffered']
    #allocation34 [shape = 's32[1]{0}', space=sflag, size = 0x4, scoped, tag = 'scoped memory for tpu_custom_call.1']
    #allocation35 [shape = 'u8[8192]{0}', space=vmem, size = 0x2000, scoped, tag = 'output window, operand 0']
    %28 = vsyncpa [#allocation4], 0
    %s29 = scalar_lea.sflag [#allocation4], 1
    %30 = vsyncpa %s29, 0
    %31 = vsyncpa [#allocation7], 0
    %32 = vsyncpa [#allocation10], 0
    %33 = vsyncpa [#allocation13], 0
    %34 = vsyncpa [#allocation16], 0
    %35 = vsyncpa [#allocation19], 0
    %36 = vsyncpa [#allocation22], 0
    %37 = vsyncpa [#allocation25], 0
    %38 = vsyncpa [#allocation28], 0
    %39 = vsyncpa [#allocation31], 0
    %40 = vsyncpa [#allocation34], 0
    %41 = vsyncpa [#allocation5], 0
    %s42 = scalar_lea.sflag [#allocation5], 1
    %43 = vsyncpa %s42, 0
    loop: start=0, step=1, limit=4
    $region2: #{tpu_custom_call.1} parent=1 // loop_pre_header
      _
    $region3: #{tpu_custom_call.1} parent=1 // loop_header
      %s45 = sphi 0, %s49
      %p46 = scmp.ge.s32.totalorder %s45, 4
      %s55 = sphi 0, %s57
      %s58 = sphi 0, %s55
      %s59 = sphi 0, %s58
      %s75 = sphi 0, %s59
      %s79 = sphi 0, %s79
      %s81 = sphi 0, %s79
      %s82 = sphi 0, %s81
      %s96 = sphi 0, %s82
      %s100 = sphi 0, %s100
      %s102 = sphi 0, %s100
      %s103 = sphi 0, %s102
      %s117 = sphi 0, %s103
      %s121 = sphi 0, %s121
      %s123 = sphi 0, %s121
      %s124 = sphi 0, %s123
      %s138 = sphi 0, %s124
      %s142 = sphi 0, %s142
      %s144 = sphi 0, %s142
      %s145 = sphi 0, %s144
      %s159 = sphi 0, %s145
      %s163 = sphi 0, %s163
      %s165 = sphi 0, %s163
      %s166 = sphi 0, %s165
      %s180 = sphi 0, %s166
      %s184 = sphi 0, %s184
      %s186 = sphi 0, %s184
      %s187 = sphi 0, %s186
      %s201 = sphi 0, %s187
      %s205 = sphi 0, %s205
      %s207 = sphi 0, %s205
      %s208 = sphi 0, %s207
      %s222 = sphi 0, %s208
      %s226 = sphi 0, %s226
      %s228 = sphi 0, %s226
      %s229 = sphi 0, %s228
      %s243 = sphi 0, %s229
      %s247 = sphi 0, %s247
      %s249 = sphi 0, %s247
      %s250 = sphi 0, %s249
      %s264 = sphi 0, %s250
      %s268 = sphi 0, %s268
      %s270 = sphi 0, %s268
      %s271 = sphi 0, %s270
      %s285 = sphi 0, %s271
      %s289 = sphi 0, %s289
      %s291 = sphi 0, %s289
      %s292 = sphi 0, %s291
      %s306 = sphi 0, %s292
      %s310 = sphi 0, %s310
      %s312 = sphi 0, %s310
      %s313 = sphi 0, %s312
      %s327 = sphi 0, %s313
      %s331 = sphi 0, %s331
      %s333 = sphi 0, %s331
      %s334 = sphi 0, %s333
      %s348 = sphi 0, %s334
      %s352 = sphi 0, %s352
      %s354 = sphi 0, %s352
      %s355 = sphi 0, %s354
      %s369 = sphi 0, %s355
      %s373 = sphi 0, %s373
      %s375 = sphi 0, %s373
      %s376 = sphi 0, %s375
      %s390 = sphi 0, %s376
      %s394 = sphi 0, %s394
      %s396 = sphi 0, %s394
      %s397 = sphi 0, %s396
      %s411 = sphi 0, %s397
      %s415 = sphi 0, %s415
      %s417 = sphi 0, %s415
      %s418 = sphi 0, %s417
      %s432 = sphi 0, %s418
      %s436 = sphi 0, %s436
      %s438 = sphi 0, %s436
      %s439 = sphi 0, %s438
      %s453 = sphi 0, %s439
      %s457 = sphi 0, %s457
      %s459 = sphi 0, %s457
      %s460 = sphi 0, %s459
      %s474 = sphi 0, %s460
      %s478 = sphi 0, %s478
      %s480 = sphi 0, %s478
      %s481 = sphi 0, %s480
      %s495 = sphi 0, %s481
      %s501 = sphi 0, %s503
      %s504 = sphi 0, %s501
      %s505 = sphi 0, %s504
      %s521 = sphi 0, %s505
    $region4: #{tpu_custom_call.1} parent=1 // loop_header_branch
      %48 = sbr.rel (%p46) target = $region8
    $region5: #{tpu_custom_call.1} parent=1 // loop_body
      %s50 = ssub.s32 %s45, 1
      %s51 = ssub.s32 %s45, 2
      %s52 = sadd.s32 %s45, 1
      %s53 = ssub.s32 %s45, %s52
      %p54 = scmp.eq.s32.totalorder %s53, 0
      %s56 = sadd.s32 %s55, 1
      %s57 = scalar_select %p54, %s55, %s56
      %p60 = pneg %p54
      %p61 = scmp.eq.s32.totalorder %s45, 1
      %p62 = por %p60, %p61
      %p63 = scmp.ne.s32.totalorder %s55, %s58
      %p64 = scmp.eq.s32.totalorder %s45, 0
      %p65 = por %p63, %p64
      %p66 = scmp.ne.s32.totalorder %s55, %s58
      %p67 = scmp.eq.s32.totalorder %s50, 1
      %p68 = por %p66, %p67
      %p69 = scmp.ne.s32.totalorder %s58, %s59
      %p70 = scmp.eq.s32.totalorder %s50, 0
      %p71 = por %p69, %p70
      %p72 = scmp.ne.s32.totalorder %s58, %s59
      %p73 = scmp.eq.s32.totalorder %s51, 1
      %p74 = por %p72, %p73
      %p76 = scmp.ne.s32.totalorder %s59, %s75
      %p77 = scmp.eq.s32.totalorder %s51, 0
      %p78 = por %p76, %p77
      %s80 = sadd.s32 %s79, 1
      %p83 = scmp.eq.s32.totalorder %s45, 1
      %p84 = scmp.ne.s32.totalorder %s79, %s81
      %p85 = scmp.eq.s32.totalorder %s45, 0
      %p86 = por %p84, %p85
      %p87 = scmp.ne.s32.totalorder %s79, %s81
      %p88 = scmp.eq.s32.totalorder %s50, 1
      %p89 = por %p87, %p88
      %p90 = scmp.ne.s32.totalorder %s81, %s82
      %p91 = scmp.eq.s32.totalorder %s50, 0
      %p92 = por %p90, %p91
      %p93 = scmp.ne.s32.totalorder %s81, %s82
      %p94 = scmp.eq.s32.totalorder %s51, 1
      %p95 = por %p93, %p94
      %p97 = scmp.ne.s32.totalorder %s82, %s96
      %p98 = scmp.eq.s32.totalorder %s51, 0
      %p99 = por %p97, %p98
      %s101 = sadd.s32 %s100, 1
      %p104 = scmp.eq.s32.totalorder %s45, 1
      %p105 = scmp.ne.s32.totalorder %s100, %s102
      %p106 = scmp.eq.s32.totalorder %s45, 0
      %p107 = por %p105, %p106
      %p108 = scmp.ne.s32.totalorder %s100, %s102
      %p109 = scmp.eq.s32.totalorder %s50, 1
      %p110 = por %p108, %p109
      %p111 = scmp.ne.s32.totalorder %s102, %s103
      %p112 = scmp.eq.s32.totalorder %s50, 0
      %p113 = por %p111, %p112
      %p114 = scmp.ne.s32.totalorder %s102, %s103
      %p115 = scmp.eq.s32.totalorder %s51, 1
      %p116 = por %p114, %p115
      %p118 = scmp.ne.s32.totalorder %s103, %s117
      %p119 = scmp.eq.s32.totalorder %s51, 0
      %p120 = por %p118, %p119
      %s122 = sadd.s32 %s121, 1
      %p125 = scmp.eq.s32.totalorder %s45, 1
      %p126 = scmp.ne.s32.totalorder %s121, %s123
      %p127 = scmp.eq.s32.totalorder %s45, 0
      %p128 = por %p126, %p127
      %p129 = scmp.ne.s32.totalorder %s121, %s123
      %p130 = scmp.eq.s32.totalorder %s50, 1
      %p131 = por %p129, %p130
      %p132 = scmp.ne.s32.totalorder %s123, %s124
      %p133 = scmp.eq.s32.totalorder %s50, 0
      %p134 = por %p132, %p133
      %p135 = scmp.ne.s32.totalorder %s123, %s124
      %p136 = scmp.eq.s32.totalorder %s51, 1
      %p137 = por %p135, %p136
      %p139 = scmp.ne.s32.totalorder %s124, %s138
      %p140 = scmp.eq.s32.totalorder %s51, 0
      %p141 = por %p139, %p140
      %s143 = sadd.s32 %s142, 1
      %p146 = scmp.eq.s32.totalorder %s45, 1
      %p147 = scmp.ne.s32.totalorder %s142, %s144
      %p148 = scmp.eq.s32.totalorder %s45, 0
      %p149 = por %p147, %p148
      %p150 = scmp.ne.s32.totalorder %s142, %s144
      %p151 = scmp.eq.s32.totalorder %s50, 1
      %p152 = por %p150, %p151
      %p153 = scmp.ne.s32.totalorder %s144, %s145
      %p154 = scmp.eq.s32.totalorder %s50, 0
      %p155 = por %p153, %p154
      %p156 = scmp.ne.s32.totalorder %s144, %s145
      %p157 = scmp.eq.s32.totalorder %s51, 1
      %p158 = por %p156, %p157
      %p160 = scmp.ne.s32.totalorder %s145, %s159
      %p161 = scmp.eq.s32.totalorder %s51, 0
      %p162 = por %p160, %p161
      %s164 = sadd.s32 %s163, 1
      %p167 = scmp.eq.s32.totalorder %s45, 1
      %p168 = scmp.ne.s32.totalorder %s163, %s165
      %p169 = scmp.eq.s32.totalorder %s45, 0
      %p170 = por %p168, %p169
      %p171 = scmp.ne.s32.totalorder %s163, %s165
      %p172 = scmp.eq.s32.totalorder %s50, 1
      %p173 = por %p171, %p172
      %p174 = scmp.ne.s32.totalorder %s165, %s166
      %p175 = scmp.eq.s32.totalorder %s50, 0
      %p176 = por %p174, %p175
      %p177 = scmp.ne.s32.totalorder %s165, %s166
      %p178 = scmp.eq.s32.totalorder %s51, 1
      %p179 = por %p177, %p178
      %p181 = scmp.ne.s32.totalorder %s166, %s180
      %p182 = scmp.eq.s32.totalorder %s51, 0
      %p183 = por %p181, %p182
      %s185 = sadd.s32 %s184, 1
      %p188 = scmp.eq.s32.totalorder %s45, 1
      %p189 = scmp.ne.s32.totalorder %s184, %s186
      %p190 = scmp.eq.s32.totalorder %s45, 0
      %p191 = por %p189, %p190
      %p192 = scmp.ne.s32.totalorder %s184, %s186
      %p193 = scmp.eq.s32.totalorder %s50, 1
      %p194 = por %p192, %p193
      %p195 = scmp.ne.s32.totalorder %s186, %s187
      %p196 = scmp.eq.s32.totalorder %s50, 0
      %p197 = por %p195, %p196
      %p198 = scmp.ne.s32.totalorder %s186, %s187
      %p199 = scmp.eq.s32.totalorder %s51, 1
      %p200 = por %p198, %p199
      %p202 = scmp.ne.s32.totalorder %s187, %s201
      %p203 = scmp.eq.s32.totalorder %s51, 0
      %p204 = por %p202, %p203
      %s206 = sadd.s32 %s205, 1
      %p209 = scmp.eq.s32.totalorder %s45, 1
      %p210 = scmp.ne.s32.totalorder %s205, %s207
      %p211 = scmp.eq.s32.totalorder %s45, 0
      %p212 = por %p210, %p211
      %p213 = scmp.ne.s32.totalorder %s205, %s207
      %p214 = scmp.eq.s32.totalorder %s50, 1
      %p215 = por %p213, %p214
      %p216 = scmp.ne.s32.totalorder %s207, %s208
      %p217 = scmp.eq.s32.totalorder %s50, 0
      %p218 = por %p216, %p217
      %p219 = scmp.ne.s32.totalorder %s207, %s208
      %p220 = scmp.eq.s32.totalorder %s51, 1
      %p221 = por %p219, %p220
      %p223 = scmp.ne.s32.totalorder %s208, %s222
      %p224 = scmp.eq.s32.totalorder %s51, 0
      %p225 = por %p223, %p224
      %s227 = sadd.s32 %s226, 1
      %p230 = scmp.eq.s32.totalorder %s45, 1
      %p231 = scmp.ne.s32.totalorder %s226, %s228
      %p232 = scmp.eq.s32.totalorder %s45, 0
      %p233 = por %p231, %p232
      %p234 = scmp.ne.s32.totalorder %s226, %s228
      %p235 = scmp.eq.s32.totalorder %s50, 1
      %p236 = por %p234, %p235
      %p237 = scmp.ne.s32.totalorder %s228, %s229
      %p238 = scmp.eq.s32.totalorder %s50, 0
      %p239 = por %p237, %p238
      %p240 = scmp.ne.s32.totalorder %s228, %s229
      %p241 = scmp.eq.s32.totalorder %s51, 1
      %p242 = por %p240, %p241
      %p244 = scmp.ne.s32.totalorder %s229, %s243
      %p245 = scmp.eq.s32.totalorder %s51, 0
      %p246 = por %p244, %p245
      %s248 = sadd.s32 %s247, 1
      %p251 = scmp.eq.s32.totalorder %s45, 1
      %p252 = scmp.ne.s32.totalorder %s247, %s249
      %p253 = scmp.eq.s32.totalorder %s45, 0
      %p254 = por %p252, %p253
      %p255 = scmp.ne.s32.totalorder %s247, %s249
      %p256 = scmp.eq.s32.totalorder %s50, 1
      %p257 = por %p255, %p256
      %p258 = scmp.ne.s32.totalorder %s249, %s250
      %p259 = scmp.eq.s32.totalorder %s50, 0
      %p260 = por %p258, %p259
      %p261 = scmp.ne.s32.totalorder %s249, %s250
      %p262 = scmp.eq.s32.totalorder %s51, 1
      %p263 = por %p261, %p262
      %p265 = scmp.ne.s32.totalorder %s250, %s264
      %p266 = scmp.eq.s32.totalorder %s51, 0
      %p267 = por %p265, %p266
      %s269 = sadd.s32 %s268, 1
      %p272 = scmp.eq.s32.totalorder %s45, 1
      %p273 = scmp.ne.s32.totalorder %s268, %s270
      %p274 = scmp.eq.s32.totalorder %s45, 0
      %p275 = por %p273, %p274
      %p276 = scmp.ne.s32.totalorder %s268, %s270
      %p277 = scmp.eq.s32.totalorder %s50, 1
      %p278 = por %p276, %p277
      %p279 = scmp.ne.s32.totalorder %s270, %s271
      %p280 = scmp.eq.s32.totalorder %s50, 0
      %p281 = por %p279, %p280
      %p282 = scmp.ne.s32.totalorder %s270, %s271
      %p283 = scmp.eq.s32.totalorder %s51, 1
      %p284 = por %p282, %p283
      %p286 = scmp.ne.s32.totalorder %s271, %s285
      %p287 = scmp.eq.s32.totalorder %s51, 0
      %p288 = por %p286, %p287
      %s290 = sadd.s32 %s289, 1
      %p293 = scmp.eq.s32.totalorder %s45, 1
      %p294 = scmp.ne.s32.totalorder %s289, %s291
      %p295 = scmp.eq.s32.totalorder %s45, 0
      %p296 = por %p294, %p295
      %p297 = scmp.ne.s32.totalorder %s289, %s291
      %p298 = scmp.eq.s32.totalorder %s50, 1
      %p299 = por %p297, %p298
      %p300 = scmp.ne.s32.totalorder %s291, %s292
      %p301 = scmp.eq.s32.totalorder %s50, 0
      %p302 = por %p300, %p301
      %p303 = scmp.ne.s32.totalorder %s291, %s292
      %p304 = scmp.eq.s32.totalorder %s51, 1
      %p305 = por %p303, %p304
      %p307 = scmp.ne.s32.totalorder %s292, %s306
      %p308 = scmp.eq.s32.totalorder %s51, 0
      %p309 = por %p307, %p308
      %s311 = sadd.s32 %s310, 1
      %p314 = scmp.eq.s32.totalorder %s45, 1
      %p315 = scmp.ne.s32.totalorder %s310, %s312
      %p316 = scmp.eq.s32.totalorder %s45, 0
      %p317 = por %p315, %p316
      %p318 = scmp.ne.s32.totalorder %s310, %s312
      %p319 = scmp.eq.s32.totalorder %s50, 1
      %p320 = por %p318, %p319
      %p321 = scmp.ne.s32.totalorder %s312, %s313
      %p322 = scmp.eq.s32.totalorder %s50, 0
      %p323 = por %p321, %p322
      %p324 = scmp.ne.s32.totalorder %s312, %s313
      %p325 = scmp.eq.s32.totalorder %s51, 1
      %p326 = por %p324, %p325
      %p328 = scmp.ne.s32.totalorder %s313, %s327
      %p329 = scmp.eq.s32.totalorder %s51, 0
      %p330 = por %p328, %p329
      %s332 = sadd.s32 %s331, 1
      %p335 = scmp.eq.s32.totalorder %s45, 1
      %p336 = scmp.ne.s32.totalorder %s331, %s333
      %p337 = scmp.eq.s32.totalorder %s45, 0
      %p338 = por %p336, %p337
      %p339 = scmp.ne.s32.totalorder %s331, %s333
      %p340 = scmp.eq.s32.totalorder %s50, 1
      %p341 = por %p339, %p340
      %p342 = scmp.ne.s32.totalorder %s333, %s334
      %p343 = scmp.eq.s32.totalorder %s50, 0
      %p344 = por %p342, %p343
      %p345 = scmp.ne.s32.totalorder %s333, %s334
      %p346 = scmp.eq.s32.totalorder %s51, 1
      %p347 = por %p345, %p346
      %p349 = scmp.ne.s32.totalorder %s334, %s348
      %p350 = scmp.eq.s32.totalorder %s51, 0
      %p351 = por %p349, %p350
      %s353 = sadd.s32 %s352, 1
      %p356 = scmp.eq.s32.totalorder %s45, 1
      %p357 = scmp.ne.s32.totalorder %s352, %s354
      %p358 = scmp.eq.s32.totalorder %s45, 0
      %p359 = por %p357, %p358
      %p360 = scmp.ne.s32.totalorder %s352, %s354
      %p361 = scmp.eq.s32.totalorder %s50, 1
      %p362 = por %p360, %p361
      %p363 = scmp.ne.s32.totalorder %s354, %s355
      %p364 = scmp.eq.s32.totalorder %s50, 0
      %p365 = por %p363, %p364
      %p366 = scmp.ne.s32.totalorder %s354, %s355
      %p367 = scmp.eq.s32.totalorder %s51, 1
      %p368 = por %p366, %p367
      %p370 = scmp.ne.s32.totalorder %s355, %s369
      %p371 = scmp.eq.s32.totalorder %s51, 0
      %p372 = por %p370, %p371
      %s374 = sadd.s32 %s373, 1
      %p377 = scmp.eq.s32.totalorder %s45, 1
      %p378 = scmp.ne.s32.totalorder %s373, %s375
      %p379 = scmp.eq.s32.totalorder %s45, 0
      %p380 = por %p378, %p379
      %p381 = scmp.ne.s32.totalorder %s373, %s375
      %p382 = scmp.eq.s32.totalorder %s50, 1
      %p383 = por %p381, %p382
      %p384 = scmp.ne.s32.totalorder %s375, %s376
      %p385 = scmp.eq.s32.totalorder %s50, 0
      %p386 = por %p384, %p385
      %p387 = scmp.ne.s32.totalorder %s375, %s376
      %p388 = scmp.eq.s32.totalorder %s51, 1
      %p389 = por %p387, %p388
      %p391 = scmp.ne.s32.totalorder %s376, %s390
      %p392 = scmp.eq.s32.totalorder %s51, 0
      %p393 = por %p391, %p392
      %s395 = sadd.s32 %s394, 1
      %p398 = scmp.eq.s32.totalorder %s45, 1
      %p399 = scmp.ne.s32.totalorder %s394, %s396
      %p400 = scmp.eq.s32.totalorder %s45, 0
      %p401 = por %p399, %p400
      %p402 = scmp.ne.s32.totalorder %s394, %s396
      %p403 = scmp.eq.s32.totalorder %s50, 1
      %p404 = por %p402, %p403
      %p405 = scmp.ne.s32.totalorder %s396, %s397
      %p406 = scmp.eq.s32.totalorder %s50, 0
      %p407 = por %p405, %p406
      %p408 = scmp.ne.s32.totalorder %s396, %s397
      %p409 = scmp.eq.s32.totalorder %s51, 1
      %p410 = por %p408, %p409
      %p412 = scmp.ne.s32.totalorder %s397, %s411
      %p413 = scmp.eq.s32.totalorder %s51, 0
      %p414 = por %p412, %p413
      %s416 = sadd.s32 %s415, 1
      %p419 = scmp.eq.s32.totalorder %s45, 1
      %p420 = scmp.ne.s32.totalorder %s415, %s417
      %p421 = scmp.eq.s32.totalorder %s45, 0
      %p422 = por %p420, %p421
      %p423 = scmp.ne.s32.totalorder %s415, %s417
      %p424 = scmp.eq.s32.totalorder %s50, 1
      %p425 = por %p423, %p424
      %p426 = scmp.ne.s32.totalorder %s417, %s418
      %p427 = scmp.eq.s32.totalorder %s50, 0
      %p428 = por %p426, %p427
      %p429 = scmp.ne.s32.totalorder %s417, %s418
      %p430 = scmp.eq.s32.totalorder %s51, 1
      %p431 = por %p429, %p430
      %p433 = scmp.ne.s32.totalorder %s418, %s432
      %p434 = scmp.eq.s32.totalorder %s51, 0
      %p435 = por %p433, %p434
      %s437 = sadd.s32 %s436, 1
      %p440 = scmp.eq.s32.totalorder %s45, 1
      %p441 = scmp.ne.s32.totalorder %s436, %s438
      %p442 = scmp.eq.s32.totalorder %s45, 0
      %p443 = por %p441, %p442
      %p444 = scmp.ne.s32.totalorder %s436, %s438
      %p445 = scmp.eq.s32.totalorder %s50, 1
      %p446 = por %p444, %p445
      %p447 = scmp.ne.s32.totalorder %s438, %s439
      %p448 = scmp.eq.s32.totalorder %s50, 0
      %p449 = por %p447, %p448
      %p450 = scmp.ne.s32.totalorder %s438, %s439
      %p451 = scmp.eq.s32.totalorder %s51, 1
      %p452 = por %p450, %p451
      %p454 = scmp.ne.s32.totalorder %s439, %s453
      %p455 = scmp.eq.s32.totalorder %s51, 0
      %p456 = por %p454, %p455
      %s458 = sadd.s32 %s457, 1
      %p461 = scmp.eq.s32.totalorder %s45, 1
      %p462 = scmp.ne.s32.totalorder %s457, %s459
      %p463 = scmp.eq.s32.totalorder %s45, 0
      %p464 = por %p462, %p463
      %p465 = scmp.ne.s32.totalorder %s457, %s459
      %p466 = scmp.eq.s32.totalorder %s50, 1
      %p467 = por %p465, %p466
      %p468 = scmp.ne.s32.totalorder %s459, %s460
      %p469 = scmp.eq.s32.totalorder %s50, 0
      %p470 = por %p468, %p469
      %p471 = scmp.ne.s32.totalorder %s459, %s460
      %p472 = scmp.eq.s32.totalorder %s51, 1
      %p473 = por %p471, %p472
      %p475 = scmp.ne.s32.totalorder %s460, %s474
      %p476 = scmp.eq.s32.totalorder %s51, 0
      %p477 = por %p475, %p476
      %s479 = sadd.s32 %s478, 1
      %p482 = scmp.eq.s32.totalorder %s45, 1
      %p483 = scmp.ne.s32.totalorder %s478, %s480
      %p484 = scmp.eq.s32.totalorder %s45, 0
      %p485 = por %p483, %p484
      %p486 = scmp.ne.s32.totalorder %s478, %s480
      %p487 = scmp.eq.s32.totalorder %s50, 1
      %p488 = por %p486, %p487
      %p489 = scmp.ne.s32.totalorder %s480, %s481
      %p490 = scmp.eq.s32.totalorder %s50, 0
      %p491 = por %p489, %p490
      %p492 = scmp.ne.s32.totalorder %s480, %s481
      %p493 = scmp.eq.s32.totalorder %s51, 1
      %p494 = por %p492, %p493
      %p496 = scmp.ne.s32.totalorder %s481, %s495
      %p497 = scmp.eq.s32.totalorder %s51, 0
      %p498 = por %p496, %p497
      %s499 = ssub.s32 %s45, %s52
      %p500 = scmp.eq.s32.totalorder %s499, 0
      %s502 = sadd.s32 %s501, 1
      %s503 = scalar_select %p500, %s501, %s502
      %p506 = pneg %p500
      %p507 = scmp.eq.s32.totalorder %s45, 1
      %p508 = por %p506, %p507
      %p509 = scmp.ne.s32.totalorder %s501, %s504
      %p510 = scmp.eq.s32.totalorder %s45, 0
      %p511 = por %p509, %p510
      %p512 = scmp.ne.s32.totalorder %s501, %s504
      %p513 = scmp.eq.s32.totalorder %s50, 1
      %p514 = por %p512, %p513
      %p515 = scmp.ne.s32.totalorder %s504, %s505
      %p516 = scmp.eq.s32.totalorder %s50, 0
      %p517 = por %p515, %p516
      %p518 = scmp.ne.s32.totalorder %s504, %s505
      %p519 = scmp.eq.s32.totalorder %s51, 1
      %p520 = por %p518, %p519
      %p522 = scmp.ne.s32.totalorder %s505, %s521
      %p523 = scmp.eq.s32.totalorder %s51, 0
      %p524 = por %p522, %p523
      %p525 = scmp.le.s32.totalorder 1, %s45
      %p526 = scmp.lt.s32.totalorder %s45, 3
      %p527 = pnand %p525, %p526
      %p528 = pneg %p527
      // Predicated region
      $region9: #{tpu_custom_call.1} parent=5 // pred_check
        _
      $region10: #{tpu_custom_call.1} parent=5 // pred_check_branch
        %530 = sbr.rel (%p527) target = $region12
      $region11: #{tpu_custom_call.1} parent=5 // pred_region
        %s531 = ssub.s32 %s45, 1
        // Predicated region
        $region13: #{tpu_custom_call.1} parent=11 // pred_check
          %p532 = pneg %p92
        $region14: #{tpu_custom_call.1} parent=11 // pred_check_branch
          %534 = sbr.rel (%p532) target = $region16
        $region15: #{tpu_custom_call.1} parent=11 // pred_region
          %s536 = ssub.s32 1024, 1024
          %537 = vsyncadd [#allocation7], %s536
          %s538 = sshll.u32 [#allocation6], 4
          %s539 = int_to_ptr.vmem [resolvable:$true] %s538
          %544 = dma.hbm_to_vmem [thread:$0]  %s1, 1024, %s539, [#allocation7], 512, 512, 32
        $region16: #{tpu_custom_call.1} parent=11 // pred_fallthru
          _
        // Predicated region
        $region17: #{tpu_custom_call.1} parent=11 // pred_check
          %p545 = pneg %p113
        $region18: #{tpu_custom_call.1} parent=11 // pred_check_branch
          %547 = sbr.rel (%p545) target = $region20
        $region19: #{tpu_custom_call.1} parent=11 // pred_region
          %s549 = ssub.s32 128, 128
          %550 = vsyncadd [#allocation7], %s549
          %s552 = sshll.u32 [#allocation8], 4
          %s553 = int_to_ptr.vmem [resolvable:$true] %s552
          %555 = dma.hbm_to_vmem [thread:$0]  %s2, 128, %s553, [#allocation7]
        $region20: #{tpu_custom_call.1} parent=11 // pred_fallthru
          _
        // Predicated region
        $region21: #{tpu_custom_call.1} parent=11 // pred_check
          %p556 = pneg %p134
        $region22: #{tpu_custom_call.1} parent=11 // pred_check_branch
          %558 = sbr.rel (%p556) target = $region24
        $region23: #{tpu_custom_call.1} parent=11 // pred_region
          %s560 = ssub.s32 32768, 32768
          %561 = vsyncadd [#allocation10], %s560
          %s562 = sshll.u32 [#allocation9], 4
          %s563 = int_to_ptr.vmem [resolvable:$true] %s562
          %568 = dma.hbm_to_vmem [thread:$0]  %s3, 32768, %s563, [#allocation10], 256, 256, 16
        $region24: #{tpu_custom_call.1} parent=11 // pred_fallthru
          _
        // Predicated region
        $region25: #{tpu_custom_call.1} parent=11 // pred_check
          %p569 = pneg %p155
        $region26: #{tpu_custom_call.1} parent=11 // pred_check_branch
          %571 = sbr.rel (%p569) target = $region28
        $region27: #{tpu_custom_call.1} parent=11 // pred_region
          %s573 = ssub.s32 64, 64
          %574 = vsyncadd [#allocation10], %s573
          %s576 = sshll.u32 [#allocation11], 4
          %s577 = int_to_ptr.vmem [resolvable:$true] %s576
          %579 = dma.hbm_to_vmem [thread:$0]  %s4, 64, %s577, [#allocation10]
        $region28: #{tpu_custom_call.1} parent=11 // pred_fallthru
          _
        // Predicated region
        $region29: #{tpu_custom_call.1} parent=11 // pred_check
          %p580 = pneg %p176
        $region30: #{tpu_custom_call.1} parent=11 // pred_check_branch
          %582 = sbr.rel (%p580) target = $region32
        $region31: #{tpu_custom_call.1} parent=11 // pred_region
          %s584 = ssub.s32 4096, 4096
          %585 = vsyncadd [#allocation13], %s584
          %s586 = sshll.u32 [#allocation12], 4
          %s587 = int_to_ptr.vmem [resolvable:$true] %s586
          %592 = dma.hbm_to_vmem [thread:$0]  %s5, 4096, %s587, [#allocation13], 64, 64, 4
        $region32: #{tpu_custom_call.1} parent=11 // pred_fallthru
          _
        // Predicated region
        $region33: #{tpu_custom_call.1} parent=11 // pred_check
          %p593 = pneg %p197
        $region34: #{tpu_custom_call.1} parent=11 // pred_check_branch
          %595 = sbr.rel (%p593) target = $region36
        $region35: #{tpu_custom_call.1} parent=11 // pred_region
          %s597 = ssub.s32 16, 16
          %598 = vsyncadd [#allocation13], %s597
          %s600 = sshll.u32 [#allocation14], 4
          %s601 = int_to_ptr.vmem [resolvable:$true] %s600
          %603 = dma.hbm_to_vmem [thread:$0]  %s6, 16, %s601, [#allocation13]
        $region36: #{tpu_custom_call.1} parent=11 // pred_fallthru
          _
        // Predicated region
        $region37: #{tpu_custom_call.1} parent=11 // pred_check
          %p604 = pneg %p218
        $region38: #{tpu_custom_call.1} parent=11 // pred_check_branch
          %606 = sbr.rel (%p604) target = $region40
        $region39: #{tpu_custom_call.1} parent=11 // pred_region
          %s608 = ssub.s32 1024, 1024
          %609 = vsyncadd [#allocation16], %s608
          %s610 = sshll.u32 [#allocation15], 4
          %s611 = int_to_ptr.vmem [resolvable:$true] %s610
          %616 = dma.hbm_to_vmem [thread:$0]  %s7, 1024, %s611, [#allocation16], 512, 512, 32
        $region40: #{tpu_custom_call.1} parent=11 // pred_fallthru
          _
        // Predicated region
        $region41: #{tpu_custom_call.1} parent=11 // pred_check
          %p617 = pneg %p239
        $region42: #{tpu_custom_call.1} parent=11 // pred_check_branch
          %619 = sbr.rel (%p617) target = $region44
        $region43: #{tpu_custom_call.1} parent=11 // pred_region
          %s621 = ssub.s32 128, 128
          %622 = vsyncadd [#allocation16], %s621
          %s624 = sshll.u32 [#allocation17], 4
          %s625 = int_to_ptr.vmem [resolvable:$true] %s624
          %627 = dma.hbm_to_vmem [thread:$0]  %s8, 128, %s625, [#allocation16]
        $region44: #{tpu_custom_call.1} parent=11 // pred_fallthru
          _
        // Predicated region
        $region45: #{tpu_custom_call.1} parent=11 // pred_check
          %p628 = pneg %p260
        $region46: #{tpu_custom_call.1} parent=11 // pred_check_branch
          %630 = sbr.rel (%p628) target = $region48
        $region47: #{tpu_custom_call.1} parent=11 // pred_region
          %s632 = ssub.s32 32768, 32768
          %633 = vsyncadd [#allocation19], %s632
          %s634 = sshll.u32 [#allocation18], 4
          %s635 = int_to_ptr.vmem [resolvable:$true] %s634
          %640 = dma.hbm_to_vmem [thread:$0]  %s9, 32768, %s635, [#allocation19], 256, 256, 16
        $region48: #{tpu_custom_call.1} parent=11 // pred_fallthru
          _
        // Predicated region
        $region49: #{tpu_custom_call.1} parent=11 // pred_check
          %p641 = pneg %p281
        $region50: #{tpu_custom_call.1} parent=11 // pred_check_branch
          %643 = sbr.rel (%p641) target = $region52
        $region51: #{tpu_custom_call.1} parent=11 // pred_region
          %s645 = ssub.s32 64, 64
          %646 = vsyncadd [#allocation19], %s645
          %s648 = sshll.u32 [#allocation20], 4
          %s649 = int_to_ptr.vmem [resolvable:$true] %s648
          %651 = dma.hbm_to_vmem [thread:$0]  %s10, 64, %s649, [#allocation19]
        $region52: #{tpu_custom_call.1} parent=11 // pred_fallthru
          _
        // Predicated region
        $region53: #{tpu_custom_call.1} parent=11 // pred_check
          %p652 = pneg %p302
        $region54: #{tpu_custom_call.1} parent=11 // pred_check_branch
          %654 = sbr.rel (%p652) target = $region56
        $region55: #{tpu_custom_call.1} parent=11 // pred_region
          %s656 = ssub.s32 4096, 4096
          %657 = vsyncadd [#allocation22], %s656
          %s658 = sshll.u32 [#allocation21], 4
          %s659 = int_to_ptr.vmem [resolvable:$true] %s658
          %664 = dma.hbm_to_vmem [thread:$0]  %s11, 4096, %s659, [#allocation22], 64, 64, 4
        $region56: #{tpu_custom_call.1} parent=11 // pred_fallthru
          _
        // Predicated region
        $region57: #{tpu_custom_call.1} parent=11 // pred_check
          %p665 = pneg %p323
        $region58: #{tpu_custom_call.1} parent=11 // pred_check_branch
          %667 = sbr.rel (%p665) target = $region60
        $region59: #{tpu_custom_call.1} parent=11 // pred_region
          %s669 = ssub.s32 16, 16
          %670 = vsyncadd [#allocation22], %s669
          %s672 = sshll.u32 [#allocation23], 4
          %s673 = int_to_ptr.vmem [resolvable:$true] %s672
          %675 = dma.hbm_to_vmem [thread:$0]  %s12, 16, %s673, [#allocation22]
        $region60: #{tpu_custom_call.1} parent=11 // pred_fallthru
          _
        // Predicated region
        $region61: #{tpu_custom_call.1} parent=11 // pred_check
          %p676 = pneg %p344
        $region62: #{tpu_custom_call.1} parent=11 // pred_check_branch
          %678 = sbr.rel (%p676) target = $region64
        $region63: #{tpu_custom_call.1} parent=11 // pred_region
          %s680 = ssub.s32 4096, 4096
          %681 = vsyncadd [#allocation25], %s680
          %s682 = sshll.u32 [#allocation24], 4
          %s683 = int_to_ptr.vmem [resolvable:$true] %s682
          %688 = dma.hbm_to_vmem [thread:$0]  %s13, 4096, %s683, [#allocation25], 128, 128, 8
        $region64: #{tpu_custom_call.1} parent=11 // pred_fallthru
          _
        // Predicated region
        $region65: #{tpu_custom_call.1} parent=11 // pred_check
          %p689 = pneg %p365
        $region66: #{tpu_custom_call.1} parent=11 // pred_check_branch
          %691 = sbr.rel (%p689) target = $region68
        $region67: #{tpu_custom_call.1} parent=11 // pred_region
          %s693 = ssub.s32 32, 32
          %694 = vsyncadd [#allocation25], %s693
          %s696 = sshll.u32 [#allocation26], 4
          %s697 = int_to_ptr.vmem [resolvable:$true] %s696
          %699 = dma.hbm_to_vmem [thread:$0]  %s14, 32, %s697, [#allocation25]
        $region68: #{tpu_custom_call.1} parent=11 // pred_fallthru
          _
        // Predicated region
        $region69: #{tpu_custom_call.1} parent=11 // pred_check
          %p700 = pneg %p386
        $region70: #{tpu_custom_call.1} parent=11 // pred_check_branch
          %702 = sbr.rel (%p700) target = $region72
        $region71: #{tpu_custom_call.1} parent=11 // pred_region
          %s704 = ssub.s32 2048, 2048
          %705 = vsyncadd [#allocation28], %s704
          %s706 = sshll.u32 [#allocation27], 4
          %s707 = int_to_ptr.vmem [resolvable:$true] %s706
          %712 = dma.hbm_to_vmem [thread:$0]  %s15, 2048, %s707, [#allocation28], 64, 64, 4
        $region72: #{tpu_custom_call.1} parent=11 // pred_fallthru
          _
        // Predicated region
        $region73: #{tpu_custom_call.1} parent=11 // pred_check
          %p713 = pneg %p407
        $region74: #{tpu_custom_call.1} parent=11 // pred_check_branch
          %715 = sbr.rel (%p713) target = $region76
        $region75: #{tpu_custom_call.1} parent=11 // pred_region
          %s717 = ssub.s32 16, 16
          %718 = vsyncadd [#allocation28], %s717
          %s720 = sshll.u32 [#allocation29], 4
          %s721 = int_to_ptr.vmem [resolvable:$true] %s720
          %723 = dma.hbm_to_vmem [thread:$0]  %s16, 16, %s721, [#allocation28]
        $region76: #{tpu_custom_call.1} parent=11 // pred_fallthru
          _
        // Predicated region
        $region77: #{tpu_custom_call.1} parent=11 // pred_check
          %p724 = pneg %p428
        $region78: #{tpu_custom_call.1} parent=11 // pred_check_branch
          %726 = sbr.rel (%p724) target = $region80
        $region79: #{tpu_custom_call.1} parent=11 // pred_region
          %s728 = ssub.s32 1024, 1024
          %729 = vsyncadd [#allocation31], %s728
          %s730 = sshll.u32 [#allocation30], 4
          %s731 = int_to_ptr.vmem [resolvable:$true] %s730
          %736 = dma.hbm_to_vmem [thread:$0]  %s17, 1024, %s731, [#allocation31], 64, 64, 4
        $region80: #{tpu_custom_call.1} parent=11 // pred_fallthru
          _
        // Predicated region
        $region81: #{tpu_custom_call.1} parent=11 // pred_check
          %p737 = pneg %p449
        $region82: #{tpu_custom_call.1} parent=11 // pred_check_branch
          %739 = sbr.rel (%p737) target = $region84
        $region83: #{tpu_custom_call.1} parent=11 // pred_region
          %s741 = ssub.s32 16, 16
          %742 = vsyncadd [#allocation31], %s741
          %s744 = sshll.u32 [#allocation32], 4
          %s745 = int_to_ptr.vmem [resolvable:$true] %s744
          %747 = dma.hbm_to_vmem [thread:$0]  %s18, 16, %s745, [#allocation31]
        $region84: #{tpu_custom_call.1} parent=11 // pred_fallthru
          _
        // Predicated region
        $region85: #{tpu_custom_call.1} parent=11 // pred_check
          %p748 = pneg %p470
        $region86: #{tpu_custom_call.1} parent=11 // pred_check_branch
          %750 = sbr.rel (%p748) target = $region88
        $region87: #{tpu_custom_call.1} parent=11 // pred_region
          %s752 = ssub.s32 16, 16
          %753 = vsyncadd [#allocation34], %s752
          %s755 = sshll.u32 [#allocation33], 4
          %s756 = int_to_ptr.vmem [resolvable:$true] %s755
          %758 = dma.hbm_to_vmem [thread:$0]  %s19, 16, %s756, [#allocation34]
        $region88: #{tpu_custom_call.1} parent=11 // pred_fallthru
          _
        // Predicated region
        $region89: #{tpu_custom_call.1} parent=11 // pred_check
          %p759 = pneg %p491
        $region90: #{tpu_custom_call.1} parent=11 // pred_check_branch
          %761 = sbr.rel (%p759) target = $region92
        $region91: #{tpu_custom_call.1} parent=11 // pred_region
          _
        $region92: #{tpu_custom_call.1} parent=11 // pred_fallthru
          _
      $region12: #{tpu_custom_call.1} parent=5 // pred_fallthru
        _
      %p762 = scmp.lt.s32.totalorder %s45, 2
      // Predicated region
      $region93: #{tpu_custom_call.1} parent=5 // pred_check
        %p763 = pneg %p762
      $region94: #{tpu_custom_call.1} parent=5 // pred_check_branch
        %765 = sbr.rel (%p763) target = $region96
      $region95: #{tpu_custom_call.1} parent=5 // pred_region
        // Predicated region
        $region97: #{tpu_custom_call.1} parent=95 // pred_check
          %p766 = pneg %p65
        $region98: #{tpu_custom_call.1} parent=95 // pred_check_branch
          %768 = sbr.rel (%p766) target = $region100
        $region99: #{tpu_custom_call.1} parent=95 // pred_region
          %s769 = sand.u32 %s55, 1
          %s770 = scalar_lea.sflag [#allocation4], %s769
          %s771 = sand.u32 %s55, 1
          %s772 = smul.addr %s771, 8
          %s773 = scalar_lea.vmem [#allocation3], %s772
          %s775 = ssub.s32 128, 128
          %776 = vsyncadd %s770, %s775
          %s777 = smul.addr %s45, 64
          %s778 = scalar_lea.hbm %s0, %s777
          %s779 = sshll.u32 %s773, 4
          %s780 = int_to_ptr.vmem [resolvable:$true] %s779
          %785 = dma.hbm_to_vmem [thread:$0]  %s778, 128, %s780, %s770, 128, 64, 4
        $region100: #{tpu_custom_call.1} parent=95 // pred_fallthru
          _
      $region96: #{tpu_custom_call.1} parent=5 // pred_fallthru
        _
      %p786 = scmp.le.s32.totalorder 1, %s45
      %p787 = scmp.lt.s32.totalorder %s45, 3
      %p788 = pnand %p786, %p787
      %p789 = pneg %p788
      // Predicated region
      $region101: #{tpu_custom_call.1} parent=5 // pred_check
        _
      $region102: #{tpu_custom_call.1} parent=5 // pred_check_branch
        %791 = sbr.rel (%p788) target = $region104
      $region103: #{tpu_custom_call.1} parent=5 // pred_region
        %s792 = ssub.s32 %s45, 1
        %s793 = sand.u32 %s58, 1
        %s794 = scalar_lea.sflag [#allocation4], %s793
        %s795 = sand.u32 %s58, 1
        %s796 = smul.addr %s795, 8
        %s797 = scalar_lea.vmem [#allocation3], %s796
        // Predicated region
        $region105: #{tpu_custom_call.1} parent=103 // pred_check
          %p798 = pneg %p71
        $region106: #{tpu_custom_call.1} parent=103 // pred_check_branch
          %800 = sbr.rel (%p798) target = $region108
        $region107: #{tpu_custom_call.1} parent=103 // pred_region
          %801 = dma.done %s794, 128
        $region108: #{tpu_custom_call.1} parent=103 // pred_fallthru
          _
        // Predicated region
        $region109: #{tpu_custom_call.1} parent=103 // pred_check
          %p802 = pneg %p92
        $region110: #{tpu_custom_call.1} parent=103 // pred_check_branch
          %804 = sbr.rel (%p802) target = $region112
        $region111: #{tpu_custom_call.1} parent=103 // pred_region
          %805 = dma.done [#allocation7], 1024
        $region112: #{tpu_custom_call.1} parent=103 // pred_fallthru
          _
        // Predicated region
        $region113: #{tpu_custom_call.1} parent=103 // pred_check
          %p806 = pneg %p113
        $region114: #{tpu_custom_call.1} parent=103 // pred_check_branch
          %808 = sbr.rel (%p806) target = $region116
        $region115: #{tpu_custom_call.1} parent=103 // pred_region
          %809 = dma.done [#allocation7], 128
        $region116: #{tpu_custom_call.1} parent=103 // pred_fallthru
          _
        // Predicated region
        $region117: #{tpu_custom_call.1} parent=103 // pred_check
          %p810 = pneg %p134
        $region118: #{tpu_custom_call.1} parent=103 // pred_check_branch
          %812 = sbr.rel (%p810) target = $region120
        $region119: #{tpu_custom_call.1} parent=103 // pred_region
          %813 = dma.done [#allocation10], 32768
        $region120: #{tpu_custom_call.1} parent=103 // pred_fallthru
          _
        // Predicated region
        $region121: #{tpu_custom_call.1} parent=103 // pred_check
          %p814 = pneg %p155
        $region122: #{tpu_custom_call.1} parent=103 // pred_check_branch
          %816 = sbr.rel (%p814) target = $region124
        $region123: #{tpu_custom_call.1} parent=103 // pred_region
          %817 = dma.done [#allocation10], 64
        $region124: #{tpu_custom_call.1} parent=103 // pred_fallthru
          _
        // Predicated region
        $region125: #{tpu_custom_call.1} parent=103 // pred_check
          %p818 = pneg %p176
        $region126: #{tpu_custom_call.1} parent=103 // pred_check_branch
          %820 = sbr.rel (%p818) target = $region128
        $region127: #{tpu_custom_call.1} parent=103 // pred_region
          %821 = dma.done [#allocation13], 4096
        $region128: #{tpu_custom_call.1} parent=103 // pred_fallthru
          _
        // Predicated region
        $region129: #{tpu_custom_call.1} parent=103 // pred_check
          %p822 = pneg %p197
        $region130: #{tpu_custom_call.1} parent=103 // pred_check_branch
          %824 = sbr.rel (%p822) target = $region132
        $region131: #{tpu_custom_call.1} parent=103 // pred_region
          %825 = dma.done [#allocation13], 16
        $region132: #{tpu_custom_call.1} parent=103 // pred_fallthru
          _
        // Predicated region
        $region133: #{tpu_custom_call.1} parent=103 // pred_check
          %p826 = pneg %p218
        $region134: #{tpu_custom_call.1} parent=103 // pred_check_branch
          %828 = sbr.rel (%p826) target = $region136
        $region135: #{tpu_custom_call.1} parent=103 // pred_region
          %829 = dma.done [#allocation16], 1024
        $region136: #{tpu_custom_call.1} parent=103 // pred_fallthru
          _
        // Predicated region
        $region137: #{tpu_custom_call.1} parent=103 // pred_check
          %p830 = pneg %p239
        $region138: #{tpu_custom_call.1} parent=103 // pred_check_branch
          %832 = sbr.rel (%p830) target = $region140
        $region139: #{tpu_custom_call.1} parent=103 // pred_region
          %833 = dma.done [#allocation16], 128
        $region140: #{tpu_custom_call.1} parent=103 // pred_fallthru
          _
        // Predicated region
        $region141: #{tpu_custom_call.1} parent=103 // pred_check
          %p834 = pneg %p260
        $region142: #{tpu_custom_call.1} parent=103 // pred_check_branch
          %836 = sbr.rel (%p834) target = $region144
        $region143: #{tpu_custom_call.1} parent=103 // pred_region
          %837 = dma.done [#allocation19], 32768
        $region144: #{tpu_custom_call.1} parent=103 // pred_fallthru
          _
        // Predicated region
        $region145: #{tpu_custom_call.1} parent=103 // pred_check
          %p838 = pneg %p281
        $region146: #{tpu_custom_call.1} parent=103 // pred_check_branch
          %840 = sbr.rel (%p838) target = $region148
        $region147: #{tpu_custom_call.1} parent=103 // pred_region
          %841 = dma.done [#allocation19], 64
        $region148: #{tpu_custom_call.1} parent=103 // pred_fallthru
          _
        // Predicated region
        $region149: #{tpu_custom_call.1} parent=103 // pred_check
          %p842 = pneg %p302
        $region150: #{tpu_custom_call.1} parent=103 // pred_check_branch
          %844 = sbr.rel (%p842) target = $region152
        $region151: #{tpu_custom_call.1} parent=103 // pred_region
          %845 = dma.done [#allocation22], 4096
        $region152: #{tpu_custom_call.1} parent=103 // pred_fallthru
          _
        // Predicated region
        $region153: #{tpu_custom_call.1} parent=103 // pred_check
          %p846 = pneg %p323
        $region154: #{tpu_custom_call.1} parent=103 // pred_check_branch
          %848 = sbr.rel (%p846) target = $region156
        $region155: #{tpu_custom_call.1} parent=103 // pred_region
          %849 = dma.done [#allocation22], 16
        $region156: #{tpu_custom_call.1} parent=103 // pred_fallthru
          _
        // Predicated region
        $region157: #{tpu_custom_call.1} parent=103 // pred_check
          %p850 = pneg %p344
        $region158: #{tpu_custom_call.1} parent=103 // pred_check_branch
          %852 = sbr.rel (%p850) target = $region160
        $region159: #{tpu_custom_call.1} parent=103 // pred_region
          %853 = dma.done [#allocation25], 4096
        $region160: #{tpu_custom_call.1} parent=103 // pred_fallthru
          _
        // Predicated region
        $region161: #{tpu_custom_call.1} parent=103 // pred_check
          %p854 = pneg %p365
        $region162: #{tpu_custom_call.1} parent=103 // pred_check_branch
          %856 = sbr.rel (%p854) target = $region164
        $region163: #{tpu_custom_call.1} parent=103 // pred_region
          %857 = dma.done [#allocation25], 32
        $region164: #{tpu_custom_call.1} parent=103 // pred_fallthru
          _
        // Predicated region
        $region165: #{tpu_custom_call.1} parent=103 // pred_check
          %p858 = pneg %p386
        $region166: #{tpu_custom_call.1} parent=103 // pred_check_branch
          %860 = sbr.rel (%p858) target = $region168
        $region167: #{tpu_custom_call.1} parent=103 // pred_region
          %861 = dma.done [#allocation28], 2048
        $region168: #{tpu_custom_call.1} parent=103 // pred_fallthru
          _
        // Predicated region
        $region169: #{tpu_custom_call.1} parent=103 // pred_check
          %p862 = pneg %p407
        $region170: #{tpu_custom_call.1} parent=103 // pred_check_branch
          %864 = sbr.rel (%p862) target = $region172
        $region171: #{tpu_custom_call.1} parent=103 // pred_region
          %865 = dma.done [#allocation28], 16
        $region172: #{tpu_custom_call.1} parent=103 // pred_fallthru
          _
        // Predicated region
        $region173: #{tpu_custom_call.1} parent=103 // pred_check
          %p866 = pneg %p428
        $region174: #{tpu_custom_call.1} parent=103 // pred_check_branch
          %868 = sbr.rel (%p866) target = $region176
        $region175: #{tpu_custom_call.1} parent=103 // pred_region
          %869 = dma.done [#allocation31], 1024
        $region176: #{tpu_custom_call.1} parent=103 // pred_fallthru
          _
        // Predicated region
        $region177: #{tpu_custom_call.1} parent=103 // pred_check
          %p870 = pneg %p449
        $region178: #{tpu_custom_call.1} parent=103 // pred_check_branch
          %872 = sbr.rel (%p870) target = $region180
        $region179: #{tpu_custom_call.1} parent=103 // pred_region
          %873 = dma.done [#allocation31], 16
        $region180: #{tpu_custom_call.1} parent=103 // pred_fallthru
          _
        // Predicated region
        $region181: #{tpu_custom_call.1} parent=103 // pred_check
          %p874 = pneg %p470
        $region182: #{tpu_custom_call.1} parent=103 // pred_check_branch
          %876 = sbr.rel (%p874) target = $region184
        $region183: #{tpu_custom_call.1} parent=103 // pred_region
          %877 = dma.done [#allocation34], 16
        $region184: #{tpu_custom_call.1} parent=103 // pred_fallthru
          _
        %s878 = sand.u32 %s58, 1
        %s879 = scalar_lea.sflag [#allocation4], %s878
        %s880 = sand.u32 %s58, 1
        %s881 = smul.addr %s880, 8
        %s882 = scalar_lea.vmem [#allocation3], %s881
        %p883 = pneg %p71
        %p884 = pneg %p68
        %p885 = pneg %p92
        %p886 = pneg %p89
        %p887 = pneg %p113
        %p888 = pneg %p110
        %p889 = pneg %p134
        %p890 = pneg %p131
        %p891 = pneg %p155
        %p892 = pneg %p152
        %p893 = pneg %p176
        %p894 = pneg %p173
        %p895 = pneg %p197
        %p896 = pneg %p194
        %p897 = pneg %p218
        %p898 = pneg %p215
        %p899 = pneg %p239
        %p900 = pneg %p236
        %p901 = pneg %p260
        %p902 = pneg %p257
        %p903 = pneg %p281
        %p904 = pneg %p278
        %p905 = pneg %p302
        %p906 = pneg %p299
        %p907 = pneg %p323
        %p908 = pneg %p320
        %p909 = pneg %p344
        %p910 = pneg %p341
        %p911 = pneg %p365
        %p912 = pneg %p362
        %p913 = pneg %p386
        %p914 = pneg %p383
        %p915 = pneg %p407
        %p916 = pneg %p404
        %p917 = pneg %p428
        %p918 = pneg %p425
        %p919 = pneg %p449
        %p920 = pneg %p446
        %p921 = pneg %p470
        %p922 = pneg %p467
        %p923 = pneg %p491
        %p924 = pneg %p488
        %p925 = pneg %p517
        %p926 = pneg %p514
        %s927 = sand.u32 %s504, 1
        %s928 = scalar_lea.sflag [#allocation5], %s927
        %s929 = sand.u32 %s504, 1
        %s930 = smul.addr %s929, 8
        %s931 = scalar_lea.vmem [#allocation35], %s930
        %v933 = vld [vmem:[%s797] sm:$0xf]
        %s934 = scalar_lea.vmem %s797, 4 [#allocation3]
        %v935 = vld [vmem:[%s934] sm:$0xf]
        %v936 = vld [vmem:[#allocation6] sm:$0xff]
        %v937 = vld [vmem:[#allocation6 + $0x8] sm:$0xff]
        %v938 = vld [vmem:[#allocation6 + $0x10] sm:$0xff]
        %v939 = vld [vmem:[#allocation6 + $0x18] sm:$0xff]
        %v940 = vld [vmem:[#allocation6 + $0x20] sm:$0xff]
        %v941 = vld [vmem:[#allocation6 + $0x28] sm:$0xff]
        %v942 = vld [vmem:[#allocation6 + $0x30] sm:$0xff]
        %v943 = vld [vmem:[#allocation6 + $0x38] sm:$0xff]
        %v944 = vld [vmem:[#allocation8] sm:$0xff]
        %v946 = vlaneseq
        %v947 = vshrl.u32 %v946, 7
        %v948 = vsub.s32 0, %v947
        %v949 = vrot.slane %v944, %v948
        %v950 = vlaneseq
        %v951 = vshrl.u32 %v950, 7
        %v952 = vsub.s32 1, %v951
        %v953 = vrot.slane %v944, %v952
        %v954 = vlaneseq
        %v955 = vshrl.u32 %v954, 7
        %v956 = vsub.s32 2, %v955
        %v957 = vrot.slane %v944, %v956
        %v958 = vlaneseq
        %v959 = vshrl.u32 %v958, 7
        %v960 = vsub.s32 3, %v959
        %v961 = vrot.slane %v944, %v960
        %v962 = vlaneseq
        %v963 = vshrl.u32 %v962, 7
        %v964 = vsub.s32 4, %v963
        %v965 = vrot.slane %v944, %v964
        %v966 = vlaneseq
        %v967 = vshrl.u32 %v966, 7
        %v968 = vsub.s32 5, %v967
        %v969 = vrot.slane %v944, %v968
        %v970 = vlaneseq
        %v971 = vshrl.u32 %v970, 7
        %v972 = vsub.s32 6, %v971
        %v973 = vrot.slane %v944, %v972
        %v974 = vlaneseq
        %v975 = vshrl.u32 %v974, 7
        %v976 = vsub.s32 7, %v975
        %v977 = vrot.slane %v944, %v976
        %v994 = vunpack.c.l.b16 %v936
        %v995 = vunpack.c.h.b16 %v936
        %v996 = vunpack.c.l.b16 %v937
        %v997 = vunpack.c.h.b16 %v937
        %v998 = vunpack.c.l.b16 %v938
        %v999 = vunpack.c.h.b16 %v938
        %v1000 = vunpack.c.l.b16 %v939
        %v1001 = vunpack.c.h.b16 %v939
        %v1002 = vunpack.c.l.b16 %v940
        %v1003 = vunpack.c.h.b16 %v940
        %v1004 = vunpack.c.l.b16 %v941
        %v1005 = vunpack.c.h.b16 %v941
        %v1006 = vunpack.c.l.b16 %v942
        %v1007 = vunpack.c.h.b16 %v942
        %v1008 = vunpack.c.l.b16 %v943
        %v1009 = vunpack.c.h.b16 %v943
        %v1010 = vpack.c.b16 %v1002, %v994
        %v1011 = vpack.c.b16 %v1003, %v995
        %v1012 = vpack.c.b16 %v1004, %v996
        %v1013 = vpack.c.b16 %v1005, %v997
        %v1014 = vpack.c.b16 %v1006, %v998
        %v1015 = vpack.c.b16 %v1007, %v999
        %v1016 = vpack.c.b16 %v1008, %v1000
        %v1017 = vpack.c.b16 %v1009, %v1001
        %vm1026 = vcmask 130048
        %v1028 = vsel %vm1026, %v933, 0
        %1030 = vmatprep.subr.bf16.mxu0 %v1011
        %1031 = vmatpush1.bf16.msra.mxu0 %v1010
        %1032 = vmatprep.subr.bf16.mxu0 0
        %1033 = vmatpush1.bf16.msra.mxu0 0
        %1034 = vmatprep.subr.bf16.mxu0 0
        %1035 = vmatpush1.bf16.msra.mxu0 0
        %1036 = vmatprep.subr.bf16.mxu0 0
        %1037 = vmatpush1.bf16.msra.mxu0 0
        %1038 = vmatprep.subr.bf16.mxu0 0
        %1039 = vmatpush1.bf16.msra.mxu0 0
        %1040 = vmatprep.subr.bf16.mxu0 0
        %1041 = vmatpush1.bf16.msra.mxu0 0
        %1042 = vmatprep.subr.bf16.mxu0 0
        %1043 = vmatpush1.bf16.msra.mxu0 0
        %1044 = vmatprep.subr.bf16.mxu0 0
        %1045 = vmatpush1.bf16.msra.mxu0 0
        %1046 = vmatprep.subr.bf16.mxu0 0
        %1047 = vmatpush1.bf16.msra.mxu0 0
        %1048 = vmatprep.subr.bf16.mxu0 0
        %1049 = vmatpush1.bf16.msra.mxu0 0
        %1050 = vmatprep.subr.bf16.mxu0 0
        %1051 = vmatpush1.bf16.msra.mxu0 0
        %1052 = vmatprep.subr.bf16.mxu0 0
        %1053 = vmatpush1.bf16.msra.mxu0 0
        %1054 = vmatprep.subr.bf16.mxu0 0
        %1055 = vmatpush1.bf16.msra.mxu0 0
        %1056 = vmatprep.subr.bf16.mxu0 0
        %1057 = vmatpush1.bf16.msra.mxu0 0
        %1058 = vmatprep.subr.bf16.mxu0 0
        %1059 = vmatpush1.bf16.msra.mxu0 0
        %1060 = vmatprep.subr.bf16.mxu0 0
        %1061 = vmatpush1.bf16.msra.mxu0 0
        %1062 = vmatprep.mubr.bf16.mxu0 0
        %1063 = vmatmul.mubr.bf16.gmra.mrb[0].mxu0 %v1028
        %v1064 = vpop.f32.mrb[0].mxu0
        %v1065 = vadd.f32 %v949, %v1064
        %v1066 = vpop.f32.mrb[0].mxu0
        %v1067 = vadd.f32 %v953, %v1066
        %v1068 = vpop.f32.mrb[0].mxu0
        %v1069 = vpop.f32.mrb[0].mxu0
        %1070 = vdwg.mxu0
        %1071 = vmatprep.subr.bf16.mxu0 %v1013
        %1072 = vmatpush1.bf16.msra.mxu0 %v1012
        %1073 = vmatprep.subr.bf16.mxu0 0
        %1074 = vmatpush1.bf16.msra.mxu0 0
        %1075 = vmatprep.subr.bf16.mxu0 0
        %1076 = vmatpush1.bf16.msra.mxu0 0
        %1077 = vmatprep.subr.bf16.mxu0 0
        %1078 = vmatpush1.bf16.msra.mxu0 0
        %1079 = vmatprep.subr.bf16.mxu0 0
        %1080 = vmatpush1.bf16.msra.mxu0 0
        %1081 = vmatprep.subr.bf16.mxu0 0
        %1082 = vmatpush1.bf16.msra.mxu0 0
        %1083 = vmatprep.subr.bf16.mxu0 0
        %1084 = vmatpush1.bf16.msra.mxu0 0
        %1085 = vmatprep.subr.bf16.mxu0 0
        %1086 = vmatpush1.bf16.msra.mxu0 0
        %1087 = vmatprep.subr.bf16.mxu0 0
        %1088 = vmatpush1.bf16.msra.mxu0 0
        %1089 = vmatprep.subr.bf16.mxu0 0
        %1090 = vmatpush1.bf16.msra.mxu0 0
        %1091 = vmatprep.subr.bf16.mxu0 0
        %1092 = vmatpush1.bf16.msra.mxu0 0
        %1093 = vmatprep.subr.bf16.mxu0 0
        %1094 = vmatpush1.bf16.msra.mxu0 0
        %1095 = vmatprep.subr.bf16.mxu0 0
        %1096 = vmatpush1.bf16.msra.mxu0 0
        %1097 = vmatprep.subr.bf16.mxu0 0
        %1098 = vmatpush1.bf16.msra.mxu0 0
        %1099 = vmatprep.subr.bf16.mxu0 0
        %1100 = vmatpush1.bf16.msra.mxu0 0
        %1101 = vmatprep.subr.bf16.mxu0 0
        %1102 = vmatpush1.bf16.msra.mxu0 0
        %1103 = vmatprep.mubr.bf16.mxu0 0
        %1104 = vmatmul.mubr.bf16.gmra.mrb[0].mxu0 %v1028
        %v1105 = vpop.f32.mrb[0].mxu0
        %v1106 = vadd.f32 %v957, %v1105
        %v1107 = vpop.f32.mrb[0].mxu0
        %v1108 = vadd.f32 %v961, %v1107
        %v1109 = vpop.f32.mrb[0].mxu0
        %v1110 = vpop.f32.mrb[0].mxu0
        %1111 = vdwg.mxu0
        %1112 = vmatprep.subr.bf16.mxu0 %v1015
        %1113 = vmatpush1.bf16.msra.mxu0 %v1014
        %1114 = vmatprep.subr.bf16.mxu0 0
        %1115 = vmatpush1.bf16.msra.mxu0 0
        %1116 = vmatprep.subr.bf16.mxu0 0
        %1117 = vmatpush1.bf16.msra.mxu0 0
        %1118 = vmatprep.subr.bf16.mxu0 0
        %1119 = vmatpush1.bf16.msra.mxu0 0
        %1120 = vmatprep.subr.bf16.mxu0 0
        %1121 = vmatpush1.bf16.msra.mxu0 0
        %1122 = vmatprep.subr.bf16.mxu0 0
        %1123 = vmatpush1.bf16.msra.mxu0 0
        %1124 = vmatprep.subr.bf16.mxu0 0
        %1125 = vmatpush1.bf16.msra.mxu0 0
        %1126 = vmatprep.subr.bf16.mxu0 0
        %1127 = vmatpush1.bf16.msra.mxu0 0
        %1128 = vmatprep.subr.bf16.mxu0 0
        %1129 = vmatpush1.bf16.msra.mxu0 0
        %1130 = vmatprep.subr.bf16.mxu0 0
        %1131 = vmatpush1.bf16.msra.mxu0 0
        %1132 = vmatprep.subr.bf16.mxu0 0
        %1133 = vmatpush1.bf16.msra.mxu0 0
        %1134 = vmatprep.subr.bf16.mxu0 0
        %1135 = vmatpush1.bf16.msra.mxu0 0
        %1136 = vmatprep.subr.bf16.mxu0 0
        %1137 = vmatpush1.bf16.msra.mxu0 0
        %1138 = vmatprep.subr.bf16.mxu0 0
        %1139 = vmatpush1.bf16.msra.mxu0 0
        %1140 = vmatprep.subr.bf16.mxu0 0
        %1141 = vmatpush1.bf16.msra.mxu0 0
        %1142 = vmatprep.subr.bf16.mxu0 0
        %1143 = vmatpush1.bf16.msra.mxu0 0
        %1144 = vmatprep.mubr.bf16.mxu0 0
        %1145 = vmatmul.mubr.bf16.gmra.mrb[0].mxu0 %v1028
        %v1146 = vpop.f32.mrb[0].mxu0
        %v1147 = vadd.f32 %v965, %v1146
        %v1148 = vpop.f32.mrb[0].mxu0
        %v1149 = vadd.f32 %v969, %v1148
        %v1150 = vpop.f32.mrb[0].mxu0
        %v1151 = vpop.f32.mrb[0].mxu0
        %1152 = vdwg.mxu0
        %1153 = vmatprep.subr.bf16.mxu0 %v1017
        %1154 = vmatpush1.bf16.msra.mxu0 %v1016
        %1155 = vmatprep.subr.bf16.mxu0 0
        %1156 = vmatpush1.bf16.msra.mxu0 0
        %1157 = vmatprep.subr.bf16.mxu0 0
        %1158 = vmatpush1.bf16.msra.mxu0 0
        %1159 = vmatprep.subr.bf16.mxu0 0
        %1160 = vmatpush1.bf16.msra.mxu0 0
        %1161 = vmatprep.subr.bf16.mxu0 0
        %1162 = vmatpush1.bf16.msra.mxu0 0
        %1163 = vmatprep.subr.bf16.mxu0 0
        %1164 = vmatpush1.bf16.msra.mxu0 0
        %1165 = vmatprep.subr.bf16.mxu0 0
        %1166 = vmatpush1.bf16.msra.mxu0 0
        %1167 = vmatprep.subr.bf16.mxu0 0
        %1168 = vmatpush1.bf16.msra.mxu0 0
        %1169 = vmatprep.subr.bf16.mxu0 0
        %1170 = vmatpush1.bf16.msra.mxu0 0
        %1171 = vmatprep.subr.bf16.mxu0 0
        %1172 = vmatpush1.bf16.msra.mxu0 0
        %1173 = vmatprep.subr.bf16.mxu0 0
        %1174 = vmatpush1.bf16.msra.mxu0 0
        %1175 = vmatprep.subr.bf16.mxu0 0
        %1176 = vmatpush1.bf16.msra.mxu0 0
        %1177 = vmatprep.subr.bf16.mxu0 0
        %1178 = vmatpush1.bf16.msra.mxu0 0
        %1179 = vmatprep.subr.bf16.mxu0 0
        %1180 = vmatpush1.bf16.msra.mxu0 0
        %1181 = vmatprep.subr.bf16.mxu0 0
        %1182 = vmatpush1.bf16.msra.mxu0 0
        %1183 = vmatprep.subr.bf16.mxu0 0
        %1184 = vmatpush1.bf16.msra.mxu0 0
        %1185 = vmatprep.mubr.bf16.mxu0 0
        %1186 = vmatmul.mubr.bf16.gmra.mrb[0].mxu0 %v1028
        %v1187 = vpop.f32.mrb[0].mxu0
        %v1188 = vadd.f32 %v973, %v1187
        %v1189 = vpop.f32.mrb[0].mxu0
        %v1190 = vadd.f32 %v977, %v1189
        %v1191 = vpop.f32.mrb[0].mxu0
        %v1192 = vpop.f32.mrb[0].mxu0
        %1193 = vdwg.mxu0
        %v1194 = vmax.f32 %v1065, 0.0
        %v1195 = vmax.f32 %v1067, 0.0
        %v1196 = vmax.f32 %v1106, 0.0
        %v1197 = vmax.f32 %v1108, 0.0
        %v1198 = vmax.f32 %v1147, 0.0
        %v1199 = vmax.f32 %v1149, 0.0
        %v1200 = vmax.f32 %v1188, 0.0
        %v1201 = vmax.f32 %v1190, 0.0
        %v1202 = vpack.c.bf16 %v1194, %v1194
        %v1203 = vpack.c.bf16 %v1195, %v1195
        %v1204 = vpack.c.bf16 %v1196, %v1196
        %v1205 = vpack.c.bf16 %v1197, %v1197
        %v1206 = vpack.c.bf16 %v1198, %v1198
        %v1207 = vpack.c.bf16 %v1199, %v1199
        %v1208 = vpack.c.bf16 %v1200, %v1200
        %v1209 = vpack.c.bf16 %v1201, %v1201
        %v1210 = vld [vmem:[#allocation9] sm:$0xff]
        %v1211 = vld [vmem:[#allocation9 + $0x8] sm:$0xff]
        %v1212 = vld [vmem:[#allocation9 + $0x10] sm:$0xff]
        %v1213 = vld [vmem:[#allocation9 + $0x18] sm:$0xff]
        %v1214 = vld [vmem:[#allocation9 + $0x20] sm:$0xff]
        %v1215 = vld [vmem:[#allocation9 + $0x28] sm:$0xff]
        %v1216 = vld [vmem:[#allocation9 + $0x30] sm:$0xff]
        %v1217 = vld [vmem:[#allocation9 + $0x38] sm:$0xff]
        %v1218 = vld [vmem:[#allocation9 + $0x40] sm:$0xff]
        %v1219 = vld [vmem:[#allocation9 + $0x48] sm:$0xff]
        %v1220 = vld [vmem:[#allocation9 + $0x50] sm:$0xff]
        %v1221 = vld [vmem:[#allocation9 + $0x58] sm:$0xff]
        %v1222 = vld [vmem:[#allocation9 + $0x60] sm:$0xff]
        %v1223 = vld [vmem:[#allocation9 + $0x68] sm:$0xff]
        %v1224 = vld [vmem:[#allocation9 + $0x70] sm:$0xff]
        %v1225 = vld [vmem:[#allocation9 + $0x78] sm:$0xff]
        %v1226 = vld [vmem:[#allocation9 + $0x80] sm:$0xff]
        %v1227 = vld [vmem:[#allocation9 + $0x88] sm:$0xff]
        %v1228 = vld [vmem:[#allocation9 + $0x90] sm:$0xff]
        %v1229 = vld [vmem:[#allocation9 + $0x98] sm:$0xff]
        %v1230 = vld [vmem:[#allocation9 + $0xa0] sm:$0xff]
        %v1231 = vld [vmem:[#allocation9 + $0xa8] sm:$0xff]
        %v1232 = vld [vmem:[#allocation9 + $0xb0] sm:$0xff]
        %v1233 = vld [vmem:[#allocation9 + $0xb8] sm:$0xff]
        %v1234 = vld [vmem:[#allocation9 + $0xc0] sm:$0xff]
        %v1235 = vld [vmem:[#allocation9 + $0xc8] sm:$0xff]
        %v1236 = vld [vmem:[#allocation9 + $0xd0] sm:$0xff]
        %v1237 = vld [vmem:[#allocation9 + $0xd8] sm:$0xff]
        %v1238 = vld [vmem:[#allocation9 + $0xe0] sm:$0xff]
        %v1239 = vld [vmem:[#allocation9 + $0xe8] sm:$0xff]
        %v1240 = vld [vmem:[#allocation9 + $0xf0] sm:$0xff]
        %v1241 = vld [vmem:[#allocation9 + $0xf8] sm:$0xff]
        %v1242 = vld [vmem:[#allocation9 + $0x100] sm:$0xff]
        %v1243 = vld [vmem:[#allocation9 + $0x108] sm:$0xff]
        %v1244 = vld [vmem:[#allocation9 + $0x110] sm:$0xff]
        %v1245 = vld [vmem:[#allocation9 + $0x118] sm:$0xff]
        %v1246 = vld [vmem:[#allocation9 + $0x120] sm:$0xff]
        %v1247 = vld [vmem:[#allocation9 + $0x128] sm:$0xff]
        %v1248 = vld [vmem:[#allocation9 + $0x130] sm:$0xff]
        %v1249 = vld [vmem:[#allocation9 + $0x138] sm:$0xff]
        %v1250 = vld [vmem:[#allocation9 + $0x140] sm:$0xff]
        %v1251 = vld [vmem:[#allocation9 + $0x148] sm:$0xff]
        %v1252 = vld [vmem:[#allocation9 + $0x150] sm:$0xff]
        %v1253 = vld [vmem:[#allocation9 + $0x158] sm:$0xff]
        %v1254 = vld [vmem:[#allocation9 + $0x160] sm:$0xff]
        %v1255 = vld [vmem:[#allocation9 + $0x168] sm:$0xff]
        %v1256 = vld [vmem:[#allocation9 + $0x170] sm:$0xff]
        %v1257 = vld [vmem:[#allocation9 + $0x178] sm:$0xff]
        %v1258 = vld [vmem:[#allocation9 + $0x180] sm:$0xff]
        %v1259 = vld [vmem:[#allocation9 + $0x188] sm:$0xff]
        %v1260 = vld [vmem:[#allocation9 + $0x190] sm:$0xff]
        %v1261 = vld [vmem:[#allocation9 + $0x198] sm:$0xff]
        %v1262 = vld [vmem:[#allocation9 + $0x1a0] sm:$0xff]
        %v1263 = vld [vmem:[#allocation9 + $0x1a8] sm:$0xff]
        %v1264 = vld [vmem:[#allocation9 + $0x1b0] sm:$0xff]
        %v1265 = vld [vmem:[#allocation9 + $0x1b8] sm:$0xff]
        %v1266 = vld [vmem:[#allocation9 + $0x1c0] sm:$0xff]
        %v1267 = vld [vmem:[#allocation9 + $0x1c8] sm:$0xff]
        %v1268 = vld [vmem:[#allocation9 + $0x1d0] sm:$0xff]
        %v1269 = vld [vmem:[#allocation9 + $0x1d8] sm:$0xff]
        %v1270 = vld [vmem:[#allocation9 + $0x1e0] sm:$0xff]
        %v1271 = vld [vmem:[#allocation9 + $0x1e8] sm:$0xff]
        %v1272 = vld [vmem:[#allocation9 + $0x1f0] sm:$0xff]
        %v1273 = vld [vmem:[#allocation9 + $0x1f8] sm:$0xff]
        %v1274 = vld [vmem:[#allocation9 + $0x200] sm:$0xff]
        %v1275 = vld [vmem:[#allocation9 + $0x208] sm:$0xff]
        %v1276 = vld [vmem:[#allocation9 + $0x210] sm:$0xff]
        %v1277 = vld [vmem:[#allocation9 + $0x218] sm:$0xff]
        %v1278 = vld [vmem:[#allocation9 + $0x220] sm:$0xff]
        %v1279 = vld [vmem:[#allocation9 + $0x228] sm:$0xff]
        %v1280 = vld [vmem:[#allocation9 + $0x230] sm:$0xff]
        %v1281 = vld [vmem:[#allocation9 + $0x238] sm:$0xff]
        %v1282 = vld [vmem:[#allocation9 + $0x240] sm:$0xff]
        %v1283 = vld [vmem:[#allocation9 + $0x248] sm:$0xff]
        %v1284 = vld [vmem:[#allocation9 + $0x250] sm:$0xff]
        %v1285 = vld [vmem:[#allocation9 + $0x258] sm:$0xff]
        %v1286 = vld [vmem:[#allocation9 + $0x260] sm:$0xff]
        %v1287 = vld [vmem:[#allocation9 + $0x268] sm:$0xff]
        %v1288 = vld [vmem:[#allocation9 + $0x270] sm:$0xff]
        %v1289 = vld [vmem:[#allocation9 + $0x278] sm:$0xff]
        %v1290 = vld [vmem:[#allocation9 + $0x280] sm:$0xff]
        %v1291 = vld [vmem:[#allocation9 + $0x288] sm:$0xff]
        %v1292 = vld [vmem:[#allocation9 + $0x290] sm:$0xff]
        %v1293 = vld [vmem:[#allocation9 + $0x298] sm:$0xff]
        %v1294 = vld [vmem:[#allocation9 + $0x2a0] sm:$0xff]
        %v1295 = vld [vmem:[#allocation9 + $0x2a8] sm:$0xff]
        %v1296 = vld [vmem:[#allocation9 + $0x2b0] sm:$0xff]
        %v1297 = vld [vmem:[#allocation9 + $0x2b8] sm:$0xff]
        %v1298 = vld [vmem:[#allocation9 + $0x2c0] sm:$0xff]
        %v1299 = vld [vmem:[#allocation9 + $0x2c8] sm:$0xff]
        %v1300 = vld [vmem:[#allocation9 + $0x2d0] sm:$0xff]
        %v1301 = vld [vmem:[#allocation9 + $0x2d8] sm:$0xff]
        %v1302 = vld [vmem:[#allocation9 + $0x2e0] sm:$0xff]
        %v1303 = vld [vmem:[#allocation9 + $0x2e8] sm:$0xff]
        %v1304 = vld [vmem:[#allocation9 + $0x2f0] sm:$0xff]
        %v1305 = vld [vmem:[#allocation9 + $0x2f8] sm:$0xff]
        %v1306 = vld [vmem:[#allocation9 + $0x300] sm:$0xff]
        %v1307 = vld [vmem:[#allocation9 + $0x308] sm:$0xff]
        %v1308 = vld [vmem:[#allocation9 + $0x310] sm:$0xff]
        %v1309 = vld [vmem:[#allocation9 + $0x318] sm:$0xff]
        %v1310 = vld [vmem:[#allocation9 + $0x320] sm:$0xff]
        %v1311 = vld [vmem:[#allocation9 + $0x328] sm:$0xff]
        %v1312 = vld [vmem:[#allocation9 + $0x330] sm:$0xff]
        %v1313 = vld [vmem:[#allocation9 + $0x338] sm:$0xff]
        %v1314 = vld [vmem:[#allocation9 + $0x340] sm:$0xff]
        %v1315 = vld [vmem:[#allocation9 + $0x348] sm:$0xff]
        %v1316 = vld [vmem:[#allocation9 + $0x350] sm:$0xff]
        %v1317 = vld [vmem:[#allocation9 + $0x358] sm:$0xff]
        %v1318 = vld [vmem:[#allocation9 + $0x360] sm:$0xff]
        %v1319 = vld [vmem:[#allocation9 + $0x368] sm:$0xff]
        %v1320 = vld [vmem:[#allocation9 + $0x370] sm:$0xff]
        %v1321 = vld [vmem:[#allocation9 + $0x378] sm:$0xff]
        %v1322 = vld [vmem:[#allocation9 + $0x380] sm:$0xff]
        %v1323 = vld [vmem:[#allocation9 + $0x388] sm:$0xff]
        %v1324 = vld [vmem:[#allocation9 + $0x390] sm:$0xff]
        %v1325 = vld [vmem:[#allocation9 + $0x398] sm:$0xff]
        %v1326 = vld [vmem:[#allocation9 + $0x3a0] sm:$0xff]
        %v1327 = vld [vmem:[#allocation9 + $0x3a8] sm:$0xff]
        %v1328 = vld [vmem:[#allocation9 + $0x3b0] sm:$0xff]
        %v1329 = vld [vmem:[#allocation9 + $0x3b8] sm:$0xff]
        %v1330 = vld [vmem:[#allocation9 + $0x3c0] sm:$0xff]
        %v1331 = vld [vmem:[#allocation9 + $0x3c8] sm:$0xff]
        %v1332 = vld [vmem:[#allocation9 + $0x3d0] sm:$0xff]
        %v1333 = vld [vmem:[#allocation9 + $0x3d8] sm:$0xff]
        %v1334 = vld [vmem:[#allocation9 + $0x3e0] sm:$0xff]
        %v1335 = vld [vmem:[#allocation9 + $0x3e8] sm:$0xff]
        %v1336 = vld [vmem:[#allocation9 + $0x3f0] sm:$0xff]
        %v1337 = vld [vmem:[#allocation9 + $0x3f8] sm:$0xff]
        %v1338 = vld [vmem:[#allocation9 + $0x400] sm:$0xff]
        %v1339 = vld [vmem:[#allocation9 + $0x408] sm:$0xff]
        %v1340 = vld [vmem:[#allocation9 + $0x410] sm:$0xff]
        %v1341 = vld [vmem:[#allocation9 + $0x418] sm:$0xff]
        %v1342 = vld [vmem:[#allocation9 + $0x420] sm:$0xff]
        %v1343 = vld [vmem:[#allocation9 + $0x428] sm:$0xff]
        %v1344 = vld [vmem:[#allocation9 + $0x430] sm:$0xff]
        %v1345 = vld [vmem:[#allocation9 + $0x438] sm:$0xff]
        %v1346 = vld [vmem:[#allocation9 + $0x440] sm:$0xff]
        %v1347 = vld [vmem:[#allocation9 + $0x448] sm:$0xff]
        %v1348 = vld [vmem:[#allocation9 + $0x450] sm:$0xff]
        %v1349 = vld [vmem:[#allocation9 + $0x458] sm:$0xff]
        %v1350 = vld [vmem:[#allocation9 + $0x460] sm:$0xff]
        %v1351 = vld [vmem:[#allocation9 + $0x468] sm:$0xff]
        %v1352 = vld [vmem:[#allocation9 + $0x470] sm:$0xff]
        %v1353 = vld [vmem:[#allocation9 + $0x478] sm:$0xff]
        %v1354 = vld [vmem:[#allocation9 + $0x480] sm:$0xff]
        %v1355 = vld [vmem:[#allocation9 + $0x488] sm:$0xff]
        %v1356 = vld [vmem:[#allocation9 + $0x490] sm:$0xff]
        %v1357 = vld [vmem:[#allocation9 + $0x498] sm:$0xff]
        %v1358 = vld [vmem:[#allocation9 + $0x4a0] sm:$0xff]
        %v1359 = vld [vmem:[#allocation9 + $0x4a8] sm:$0xff]
        %v1360 = vld [vmem:[#allocation9 + $0x4b0] sm:$0xff]
        %v1361 = vld [vmem:[#allocation9 + $0x4b8] sm:$0xff]
        %v1362 = vld [vmem:[#allocation9 + $0x4c0] sm:$0xff]
        %v1363 = vld [vmem:[#allocation9 + $0x4c8] sm:$0xff]
        %v1364 = vld [vmem:[#allocation9 + $0x4d0] sm:$0xff]
        %v1365 = vld [vmem:[#allocation9 + $0x4d8] sm:$0xff]
        %v1366 = vld [vmem:[#allocation9 + $0x4e0] sm:$0xff]
        %v1367 = vld [vmem:[#allocation9 + $0x4e8] sm:$0xff]
        %v1368 = vld [vmem:[#allocation9 + $0x4f0] sm:$0xff]
        %v1369 = vld [vmem:[#allocation9 + $0x4f8] sm:$0xff]
        %v1370 = vld [vmem:[#allocation9 + $0x500] sm:$0xff]
        %v1371 = vld [vmem:[#allocation9 + $0x508] sm:$0xff]
        %v1372 = vld [vmem:[#allocation9 + $0x510] sm:$0xff]
        %v1373 = vld [vmem:[#allocation9 + $0x518] sm:$0xff]
        %v1374 = vld [vmem:[#allocation9 + $0x520] sm:$0xff]
        %v1375 = vld [vmem:[#allocation9 + $0x528] sm:$0xff]
        %v1376 = vld [vmem:[#allocation9 + $0x530] sm:$0xff]
        %v1377 = vld [vmem:[#allocation9 + $0x538] sm:$0xff]
        %v1378 = vld [vmem:[#allocation9 + $0x540] sm:$0xff]
        %v1379 = vld [vmem:[#allocation9 + $0x548] sm:$0xff]
        %v1380 = vld [vmem:[#allocation9 + $0x550] sm:$0xff]
        %v1381 = vld [vmem:[#allocation9 + $0x558] sm:$0xff]
        %v1382 = vld [vmem:[#allocation9 + $0x560] sm:$0xff]
        %v1383 = vld [vmem:[#allocation9 + $0x568] sm:$0xff]
        %v1384 = vld [vmem:[#allocation9 + $0x570] sm:$0xff]
        %v1385 = vld [vmem:[#allocation9 + $0x578] sm:$0xff]
        %v1386 = vld [vmem:[#allocation9 + $0x580] sm:$0xff]
        %v1387 = vld [vmem:[#allocation9 + $0x588] sm:$0xff]
        %v1388 = vld [vmem:[#allocation9 + $0x590] sm:$0xff]
        %v1389 = vld [vmem:[#allocation9 + $0x598] sm:$0xff]
        %v1390 = vld [vmem:[#allocation9 + $0x5a0] sm:$0xff]
        %v1391 = vld [vmem:[#allocation9 + $0x5a8] sm:$0xff]
        %v1392 = vld [vmem:[#allocation9 + $0x5b0] sm:$0xff]
        %v1393 = vld [vmem:[#allocation9 + $0x5b8] sm:$0xff]
        %v1394 = vld [vmem:[#allocation9 + $0x5c0] sm:$0xff]
        %v1395 = vld [vmem:[#allocation9 + $0x5c8] sm:$0xff]
        %v1396 = vld [vmem:[#allocation9 + $0x5d0] sm:$0xff]
        %v1397 = vld [vmem:[#allocation9 + $0x5d8] sm:$0xff]
        %v1398 = vld [vmem:[#allocation9 + $0x5e0] sm:$0xff]
        %v1399 = vld [vmem:[#allocation9 + $0x5e8] sm:$0xff]
        %v1400 = vld [vmem:[#allocation9 + $0x5f0] sm:$0xff]
        %v1401 = vld [vmem:[#allocation9 + $0x5f8] sm:$0xff]
        %v1402 = vld [vmem:[#allocation9 + $0x600] sm:$0xff]
        %v1403 = vld [vmem:[#allocation9 + $0x608] sm:$0xff]
        %v1404 = vld [vmem:[#allocation9 + $0x610] sm:$0xff]
        %v1405 = vld [vmem:[#allocation9 + $0x618] sm:$0xff]
        %v1406 = vld [vmem:[#allocation9 + $0x620] sm:$0xff]
        %v1407 = vld [vmem:[#allocation9 + $0x628] sm:$0xff]
        %v1408 = vld [vmem:[#allocation9 + $0x630] sm:$0xff]
        %v1409 = vld [vmem:[#allocation9 + $0x638] sm:$0xff]
        %v1410 = vld [vmem:[#allocation9 + $0x640] sm:$0xff]
        %v1411 = vld [vmem:[#allocation9 + $0x648] sm:$0xff]
        %v1412 = vld [vmem:[#allocation9 + $0x650] sm:$0xff]
        %v1413 = vld [vmem:[#allocation9 + $0x658] sm:$0xff]
        %v1414 = vld [vmem:[#allocation9 + $0x660] sm:$0xff]
        %v1415 = vld [vmem:[#allocation9 + $0x668] sm:$0xff]
        %v1416 = vld [vmem:[#allocation9 + $0x670] sm:$0xff]
        %v1417 = vld [vmem:[#allocation9 + $0x678] sm:$0xff]
        %v1418 = vld [vmem:[#allocation9 + $0x680] sm:$0xff]
        %v1419 = vld [vmem:[#allocation9 + $0x688] sm:$0xff]
        %v1420 = vld [vmem:[#allocation9 + $0x690] sm:$0xff]
        %v1421 = vld [vmem:[#allocation9 + $0x698] sm:$0xff]
        %v1422 = vld [vmem:[#allocation9 + $0x6a0] sm:$0xff]
        %v1423 = vld [vmem:[#allocation9 + $0x6a8] sm:$0xff]
        %v1424 = vld [vmem:[#allocation9 + $0x6b0] sm:$0xff]
        %v1425 = vld [vmem:[#allocation9 + $0x6b8] sm:$0xff]
        %v1426 = vld [vmem:[#allocation9 + $0x6c0] sm:$0xff]
        %v1427 = vld [vmem:[#allocation9 + $0x6c8] sm:$0xff]
        %v1428 = vld [vmem:[#allocation9 + $0x6d0] sm:$0xff]
        %v1429 = vld [vmem:[#allocation9 + $0x6d8] sm:$0xff]
        %v1430 = vld [vmem:[#allocation9 + $0x6e0] sm:$0xff]
        %v1431 = vld [vmem:[#allocation9 + $0x6e8] sm:$0xff]
        %v1432 = vld [vmem:[#allocation9 + $0x6f0] sm:$0xff]
        %v1433 = vld [vmem:[#allocation9 + $0x6f8] sm:$0xff]
        %v1434 = vld [vmem:[#allocation9 + $0x700] sm:$0xff]
        %v1435 = vld [vmem:[#allocation9 + $0x708] sm:$0xff]
        %v1436 = vld [vmem:[#allocation9 + $0x710] sm:$0xff]
        %v1437 = vld [vmem:[#allocation9 + $0x718] sm:$0xff]
        %v1438 = vld [vmem:[#allocation9 + $0x720] sm:$0xff]
        %v1439 = vld [vmem:[#allocation9 + $0x728] sm:$0xff]
        %v1440 = vld [vmem:[#allocation9 + $0x730] sm:$0xff]
        %v1441 = vld [vmem:[#allocation9 + $0x738] sm:$0xff]
        %v1442 = vld [vmem:[#allocation9 + $0x740] sm:$0xff]
        %v1443 = vld [vmem:[#allocation9 + $0x748] sm:$0xff]
        %v1444 = vld [vmem:[#allocation9 + $0x750] sm:$0xff]
        %v1445 = vld [vmem:[#allocation9 + $0x758] sm:$0xff]
        %v1446 = vld [vmem:[#allocation9 + $0x760] sm:$0xff]
        %v1447 = vld [vmem:[#allocation9 + $0x768] sm:$0xff]
        %v1448 = vld [vmem:[#allocation9 + $0x770] sm:$0xff]
        %v1449 = vld [vmem:[#allocation9 + $0x778] sm:$0xff]
        %v1450 = vld [vmem:[#allocation9 + $0x780] sm:$0xff]
        %v1451 = vld [vmem:[#allocation9 + $0x788] sm:$0xff]
        %v1452 = vld [vmem:[#allocation9 + $0x790] sm:$0xff]
        %v1453 = vld [vmem:[#allocation9 + $0x798] sm:$0xff]
        %v1454 = vld [vmem:[#allocation9 + $0x7a0] sm:$0xff]
        %v1455 = vld [vmem:[#allocation9 + $0x7a8] sm:$0xff]
        %v1456 = vld [vmem:[#allocation9 + $0x7b0] sm:$0xff]
        %v1457 = vld [vmem:[#allocation9 + $0x7b8] sm:$0xff]
        %v1458 = vld [vmem:[#allocation9 + $0x7c0] sm:$0xff]
        %v1459 = vld [vmem:[#allocation9 + $0x7c8] sm:$0xff]
        %v1460 = vld [vmem:[#allocation9 + $0x7d0] sm:$0xff]
        %v1461 = vld [vmem:[#allocation9 + $0x7d8] sm:$0xff]
        %v1462 = vld [vmem:[#allocation9 + $0x7e0] sm:$0xff]
        %v1463 = vld [vmem:[#allocation9 + $0x7e8] sm:$0xff]
        %v1464 = vld [vmem:[#allocation9 + $0x7f0] sm:$0xff]
        %v1465 = vld [vmem:[#allocation9 + $0x7f8] sm:$0xff]
        %v1466 = vld [vmem:[#allocation11] sm:$0xf]
        %v1468 = vlaneseq
        %v1469 = vshrl.u32 %v1468, 7
        %v1470 = vsub.s32 0, %v1469
        %v1471 = vrot.slane %v1466, %v1470
        %v1472 = vlaneseq
        %v1473 = vshrl.u32 %v1472, 7
        %v1474 = vsub.s32 1, %v1473
        %v1475 = vrot.slane %v1466, %v1474
        %v1476 = vlaneseq
        %v1477 = vshrl.u32 %v1476, 7
        %v1478 = vsub.s32 2, %v1477
        %v1479 = vrot.slane %v1466, %v1478
        %v1480 = vlaneseq
        %v1481 = vshrl.u32 %v1480, 7
        %v1482 = vsub.s32 3, %v1481
        %v1483 = vrot.slane %v1466, %v1482
        %v1744 = vunpack.c.l.b16 %v1210
        %v1745 = vunpack.c.h.b16 %v1210
        %v1746 = vunpack.c.l.b16 %v1211
        %v1747 = vunpack.c.h.b16 %v1211
        %v1748 = vunpack.c.l.b16 %v1212
        %v1749 = vunpack.c.h.b16 %v1212
        %v1750 = vunpack.c.l.b16 %v1213
        %v1751 = vunpack.c.h.b16 %v1213
        %v1752 = vunpack.c.l.b16 %v1214
        %v1753 = vunpack.c.h.b16 %v1214
        %v1754 = vunpack.c.l.b16 %v1215
        %v1755 = vunpack.c.h.b16 %v1215
        %v1756 = vunpack.c.l.b16 %v1216
        %v1757 = vunpack.c.h.b16 %v1216
        %v1758 = vunpack.c.l.b16 %v1217
        %v1759 = vunpack.c.h.b16 %v1217
        %v1760 = vunpack.c.l.b16 %v1218
        %v1761 = vunpack.c.h.b16 %v1218
        %v1762 = vunpack.c.l.b16 %v1219
        %v1763 = vunpack.c.h.b16 %v1219
        %v1764 = vunpack.c.l.b16 %v1220
        %v1765 = vunpack.c.h.b16 %v1220
        %v1766 = vunpack.c.l.b16 %v1221
        %v1767 = vunpack.c.h.b16 %v1221
        %v1768 = vunpack.c.l.b16 %v1222
        %v1769 = vunpack.c.h.b16 %v1222
        %v1770 = vunpack.c.l.b16 %v1223
        %v1771 = vunpack.c.h.b16 %v1223
        %v1772 = vunpack.c.l.b16 %v1224
        %v1773 = vunpack.c.h.b16 %v1224
        %v1774 = vunpack.c.l.b16 %v1225
        %v1775 = vunpack.c.h.b16 %v1225
        %v1776 = vunpack.c.l.b16 %v1226
        %v1777 = vunpack.c.h.b16 %v1226
        %v1778 = vunpack.c.l.b16 %v1227
        %v1779 = vunpack.c.h.b16 %v1227
        %v1780 = vunpack.c.l.b16 %v1228
        %v1781 = vunpack.c.h.b16 %v1228
        %v1782 = vunpack.c.l.b16 %v1229
        %v1783 = vunpack.c.h.b16 %v1229
        %v1784 = vunpack.c.l.b16 %v1230
        %v1785 = vunpack.c.h.b16 %v1230
        %v1786 = vunpack.c.l.b16 %v1231
        %v1787 = vunpack.c.h.b16 %v1231
        %v1788 = vunpack.c.l.b16 %v1232
        %v1789 = vunpack.c.h.b16 %v1232
        %v1790 = vunpack.c.l.b16 %v1233
        %v1791 = vunpack.c.h.b16 %v1233
        %v1792 = vunpack.c.l.b16 %v1234
        %v1793 = vunpack.c.h.b16 %v1234
        %v1794 = vunpack.c.l.b16 %v1235
        %v1795 = vunpack.c.h.b16 %v1235
        %v1796 = vunpack.c.l.b16 %v1236
        %v1797 = vunpack.c.h.b16 %v1236
        %v1798 = vunpack.c.l.b16 %v1237
        %v1799 = vunpack.c.h.b16 %v1237
        %v1800 = vunpack.c.l.b16 %v1238
        %v1801 = vunpack.c.h.b16 %v1238
        %v1802 = vunpack.c.l.b16 %v1239
        %v1803 = vunpack.c.h.b16 %v1239
        %v1804 = vunpack.c.l.b16 %v1240
        %v1805 = vunpack.c.h.b16 %v1240
        %v1806 = vunpack.c.l.b16 %v1241
        %v1807 = vunpack.c.h.b16 %v1241
        %v1808 = vunpack.c.l.b16 %v1242
        %v1809 = vunpack.c.h.b16 %v1242
        %v1810 = vunpack.c.l.b16 %v1243
        %v1811 = vunpack.c.h.b16 %v1243
        %v1812 = vunpack.c.l.b16 %v1244
        %v1813 = vunpack.c.h.b16 %v1244
        %v1814 = vunpack.c.l.b16 %v1245
        %v1815 = vunpack.c.h.b16 %v1245
        %v1816 = vunpack.c.l.b16 %v1246
        %v1817 = vunpack.c.h.b16 %v1246
        %v1818 = vunpack.c.l.b16 %v1247
        %v1819 = vunpack.c.h.b16 %v1247
        %v1820 = vunpack.c.l.b16 %v1248
        %v1821 = vunpack.c.h.b16 %v1248
        %v1822 = vunpack.c.l.b16 %v1249
        %v1823 = vunpack.c.h.b16 %v1249
        %v1824 = vunpack.c.l.b16 %v1250
        %v1825 = vunpack.c.h.b16 %v1250
        %v1826 = vunpack.c.l.b16 %v1251
        %v1827 = vunpack.c.h.b16 %v1251
        %v1828 = vunpack.c.l.b16 %v1252
        %v1829 = vunpack.c.h.b16 %v1252
        %v1830 = vunpack.c.l.b16 %v1253
        %v1831 = vunpack.c.h.b16 %v1253
        %v1832 = vunpack.c.l.b16 %v1254
        %v1833 = vunpack.c.h.b16 %v1254
        %v1834 = vunpack.c.l.b16 %v1255
        %v1835 = vunpack.c.h.b16 %v1255
        %v1836 = vunpack.c.l.b16 %v1256
        %v1837 = vunpack.c.h.b16 %v1256
        %v1838 = vunpack.c.l.b16 %v1257
        %v1839 = vunpack.c.h.b16 %v1257
        %v1840 = vunpack.c.l.b16 %v1258
        %v1841 = vunpack.c.h.b16 %v1258
        %v1842 = vunpack.c.l.b16 %v1259
        %v1843 = vunpack.c.h.b16 %v1259
        %v1844 = vunpack.c.l.b16 %v1260
        %v1845 = vunpack.c.h.b16 %v1260
        %v1846 = vunpack.c.l.b16 %v1261
        %v1847 = vunpack.c.h.b16 %v1261
        %v1848 = vunpack.c.l.b16 %v1262
        %v1849 = vunpack.c.h.b16 %v1262
        %v1850 = vunpack.c.l.b16 %v1263
        %v1851 = vunpack.c.h.b16 %v1263
        %v1852 = vunpack.c.l.b16 %v1264
        %v1853 = vunpack.c.h.b16 %v1264
        %v1854 = vunpack.c.l.b16 %v1265
        %v1855 = vunpack.c.h.b16 %v1265
        %v1856 = vunpack.c.l.b16 %v1266
        %v1857 = vunpack.c.h.b16 %v1266
        %v1858 = vunpack.c.l.b16 %v1267
        %v1859 = vunpack.c.h.b16 %v1267
        %v1860 = vunpack.c.l.b16 %v1268
        %v1861 = vunpack.c.h.b16 %v1268
        %v1862 = vunpack.c.l.b16 %v1269
        %v1863 = vunpack.c.h.b16 %v1269
        %v1864 = vunpack.c.l.b16 %v1270
        %v1865 = vunpack.c.h.b16 %v1270
        %v1866 = vunpack.c.l.b16 %v1271
        %v1867 = vunpack.c.h.b16 %v1271
        %v1868 = vunpack.c.l.b16 %v1272
        %v1869 = vunpack.c.h.b16 %v1272
        %v1870 = vunpack.c.l.b16 %v1273
        %v1871 = vunpack.c.h.b16 %v1273
        %v1872 = vunpack.c.l.b16 %v1274
        %v1873 = vunpack.c.h.b16 %v1274
        %v1874 = vunpack.c.l.b16 %v1275
        %v1875 = vunpack.c.h.b16 %v1275
        %v1876 = vunpack.c.l.b16 %v1276
        %v1877 = vunpack.c.h.b16 %v1276
        %v1878 = vunpack.c.l.b16 %v1277
        %v1879 = vunpack.c.h.b16 %v1277
        %v1880 = vunpack.c.l.b16 %v1278
        %v1881 = vunpack.c.h.b16 %v1278
        %v1882 = vunpack.c.l.b16 %v1279
        %v1883 = vunpack.c.h.b16 %v1279
        %v1884 = vunpack.c.l.b16 %v1280
        %v1885 = vunpack.c.h.b16 %v1280
        %v1886 = vunpack.c.l.b16 %v1281
        %v1887 = vunpack.c.h.b16 %v1281
        %v1888 = vunpack.c.l.b16 %v1282
        %v1889 = vunpack.c.h.b16 %v1282
        %v1890 = vunpack.c.l.b16 %v1283
        %v1891 = vunpack.c.h.b16 %v1283
        %v1892 = vunpack.c.l.b16 %v1284
        %v1893 = vunpack.c.h.b16 %v1284
        %v1894 = vunpack.c.l.b16 %v1285
        %v1895 = vunpack.c.h.b16 %v1285
        %v1896 = vunpack.c.l.b16 %v1286
        %v1897 = vunpack.c.h.b16 %v1286
        %v1898 = vunpack.c.l.b16 %v1287
        %v1899 = vunpack.c.h.b16 %v1287
        %v1900 = vunpack.c.l.b16 %v1288
        %v1901 = vunpack.c.h.b16 %v1288
        %v1902 = vunpack.c.l.b16 %v1289
        %v1903 = vunpack.c.h.b16 %v1289
        %v1904 = vunpack.c.l.b16 %v1290
        %v1905 = vunpack.c.h.b16 %v1290
        %v1906 = vunpack.c.l.b16 %v1291
        %v1907 = vunpack.c.h.b16 %v1291
        %v1908 = vunpack.c.l.b16 %v1292
        %v1909 = vunpack.c.h.b16 %v1292
        %v1910 = vunpack.c.l.b16 %v1293
        %v1911 = vunpack.c.h.b16 %v1293
        %v1912 = vunpack.c.l.b16 %v1294
        %v1913 = vunpack.c.h.b16 %v1294
        %v1914 = vunpack.c.l.b16 %v1295
        %v1915 = vunpack.c.h.b16 %v1295
        %v1916 = vunpack.c.l.b16 %v1296
        %v1917 = vunpack.c.h.b16 %v1296
        %v1918 = vunpack.c.l.b16 %v1297
        %v1919 = vunpack.c.h.b16 %v1297
        %v1920 = vunpack.c.l.b16 %v1298
        %v1921 = vunpack.c.h.b16 %v1298
        %v1922 = vunpack.c.l.b16 %v1299
        %v1923 = vunpack.c.h.b16 %v1299
        %v1924 = vunpack.c.l.b16 %v1300
        %v1925 = vunpack.c.h.b16 %v1300
        %v1926 = vunpack.c.l.b16 %v1301
        %v1927 = vunpack.c.h.b16 %v1301
        %v1928 = vunpack.c.l.b16 %v1302
        %v1929 = vunpack.c.h.b16 %v1302
        %v1930 = vunpack.c.l.b16 %v1303
        %v1931 = vunpack.c.h.b16 %v1303
        %v1932 = vunpack.c.l.b16 %v1304
        %v1933 = vunpack.c.h.b16 %v1304
        %v1934 = vunpack.c.l.b16 %v1305
        %v1935 = vunpack.c.h.b16 %v1305
        %v1936 = vunpack.c.l.b16 %v1306
        %v1937 = vunpack.c.h.b16 %v1306
        %v1938 = vunpack.c.l.b16 %v1307
        %v1939 = vunpack.c.h.b16 %v1307
        %v1940 = vunpack.c.l.b16 %v1308
        %v1941 = vunpack.c.h.b16 %v1308
        %v1942 = vunpack.c.l.b16 %v1309
        %v1943 = vunpack.c.h.b16 %v1309
        %v1944 = vunpack.c.l.b16 %v1310
        %v1945 = vunpack.c.h.b16 %v1310
        %v1946 = vunpack.c.l.b16 %v1311
        %v1947 = vunpack.c.h.b16 %v1311
        %v1948 = vunpack.c.l.b16 %v1312
        %v1949 = vunpack.c.h.b16 %v1312
        %v1950 = vunpack.c.l.b16 %v1313
        %v1951 = vunpack.c.h.b16 %v1313
        %v1952 = vunpack.c.l.b16 %v1314
        %v1953 = vunpack.c.h.b16 %v1314
        %v1954 = vunpack.c.l.b16 %v1315
        %v1955 = vunpack.c.h.b16 %v1315
        %v1956 = vunpack.c.l.b16 %v1316
        %v1957 = vunpack.c.h.b16 %v1316
        %v1958 = vunpack.c.l.b16 %v1317
        %v1959 = vunpack.c.h.b16 %v1317
        %v1960 = vunpack.c.l.b16 %v1318
        %v1961 = vunpack.c.h.b16 %v1318
        %v1962 = vunpack.c.l.b16 %v1319
        %v1963 = vunpack.c.h.b16 %v1319
        %v1964 = vunpack.c.l.b16 %v1320
        %v1965 = vunpack.c.h.b16 %v1320
        %v1966 = vunpack.c.l.b16 %v1321
        %v1967 = vunpack.c.h.b16 %v1321
        %v1968 = vunpack.c.l.b16 %v1322
        %v1969 = vunpack.c.h.b16 %v1322
        %v1970 = vunpack.c.l.b16 %v1323
        %v1971 = vunpack.c.h.b16 %v1323
        %v1972 = vunpack.c.l.b16 %v1324
        %v1973 = vunpack.c.h.b16 %v1324
        %v1974 = vunpack.c.l.b16 %v1325
        %v1975 = vunpack.c.h.b16 %v1325
        %v1976 = vunpack.c.l.b16 %v1326
        %v1977 = vunpack.c.h.b16 %v1326
        %v1978 = vunpack.c.l.b16 %v1327
        %v1979 = vunpack.c.h.b16 %v1327
        %v1980 = vunpack.c.l.b16 %v1328
        %v1981 = vunpack.c.h.b16 %v1328
        %v1982 = vunpack.c.l.b16 %v1329
        %v1983 = vunpack.c.h.b16 %v1329
        %v1984 = vunpack.c.l.b16 %v1330
        %v1985 = vunpack.c.h.b16 %v1330
        %v1986 = vunpack.c.l.b16 %v1331
        %v1987 = vunpack.c.h.b16 %v1331
        %v1988 = vunpack.c.l.b16 %v1332
        %v1989 = vunpack.c.h.b16 %v1332
        %v1990 = vunpack.c.l.b16 %v1333
        %v1991 = vunpack.c.h.b16 %v1333
        %v1992 = vunpack.c.l.b16 %v1334
        %v1993 = vunpack.c.h.b16 %v1334
        %v1994 = vunpack.c.l.b16 %v1335
        %v1995 = vunpack.c.h.b16 %v1335
        %v1996 = vunpack.c.l.b16 %v1336
        %v1997 = vunpack.c.h.b16 %v1336
        %v1998 = vunpack.c.l.b16 %v1337
        %v1999 = vunpack.c.h.b16 %v1337
        %v2000 = vunpack.c.l.b16 %v1338
        %v2001 = vunpack.c.h.b16 %v1338
        %v2002 = vunpack.c.l.b16 %v1339
        %v2003 = vunpack.c.h.b16 %v1339
        %v2004 = vunpack.c.l.b16 %v1340
        %v2005 = vunpack.c.h.b16 %v1340
        %v2006 = vunpack.c.l.b16 %v1341
        %v2007 = vunpack.c.h.b16 %v1341
        %v2008 = vunpack.c.l.b16 %v1342
        %v2009 = vunpack.c.h.b16 %v1342
        %v2010 = vunpack.c.l.b16 %v1343
        %v2011 = vunpack.c.h.b16 %v1343
        %v2012 = vunpack.c.l.b16 %v1344
        %v2013 = vunpack.c.h.b16 %v1344
        %v2014 = vunpack.c.l.b16 %v1345
        %v2015 = vunpack.c.h.b16 %v1345
        %v2016 = vunpack.c.l.b16 %v1346
        %v2017 = vunpack.c.h.b16 %v1346
        %v2018 = vunpack.c.l.b16 %v1347
        %v2019 = vunpack.c.h.b16 %v1347
        %v2020 = vunpack.c.l.b16 %v1348
        %v2021 = vunpack.c.h.b16 %v1348
        %v2022 = vunpack.c.l.b16 %v1349
        %v2023 = vunpack.c.h.b16 %v1349
        %v2024 = vunpack.c.l.b16 %v1350
        %v2025 = vunpack.c.h.b16 %v1350
        %v2026 = vunpack.c.l.b16 %v1351
        %v2027 = vunpack.c.h.b16 %v1351
        %v2028 = vunpack.c.l.b16 %v1352
        %v2029 = vunpack.c.h.b16 %v1352
        %v2030 = vunpack.c.l.b16 %v1353
        %v2031 = vunpack.c.h.b16 %v1353
        %v2032 = vunpack.c.l.b16 %v1354
        %v2033 = vunpack.c.h.b16 %v1354
        %v2034 = vunpack.c.l.b16 %v1355
        %v2035 = vunpack.c.h.b16 %v1355
        %v2036 = vunpack.c.l.b16 %v1356
        %v2037 = vunpack.c.h.b16 %v1356
        %v2038 = vunpack.c.l.b16 %v1357
        %v2039 = vunpack.c.h.b16 %v1357
        %v2040 = vunpack.c.l.b16 %v1358
        %v2041 = vunpack.c.h.b16 %v1358
        %v2042 = vunpack.c.l.b16 %v1359
        %v2043 = vunpack.c.h.b16 %v1359
        %v2044 = vunpack.c.l.b16 %v1360
        %v2045 = vunpack.c.h.b16 %v1360
        %v2046 = vunpack.c.l.b16 %v1361
        %v2047 = vunpack.c.h.b16 %v1361
        %v2048 = vunpack.c.l.b16 %v1362
        %v2049 = vunpack.c.h.b16 %v1362
        %v2050 = vunpack.c.l.b16 %v1363
        %v2051 = vunpack.c.h.b16 %v1363
        %v2052 = vunpack.c.l.b16 %v1364
        %v2053 = vunpack.c.h.b16 %v1364
        %v2054 = vunpack.c.l.b16 %v1365
        %v2055 = vunpack.c.h.b16 %v1365
        %v2056 = vunpack.c.l.b16 %v1366
        %v2057 = vunpack.c.h.b16 %v1366
        %v2058 = vunpack.c.l.b16 %v1367
        %v2059 = vunpack.c.h.b16 %v1367
        %v2060 = vunpack.c.l.b16 %v1368
        %v2061 = vunpack.c.h.b16 %v1368
        %v2062 = vunpack.c.l.b16 %v1369
        %v2063 = vunpack.c.h.b16 %v1369
        %v2064 = vunpack.c.l.b16 %v1370
        %v2065 = vunpack.c.h.b16 %v1370
        %v2066 = vunpack.c.l.b16 %v1371
        %v2067 = vunpack.c.h.b16 %v1371
        %v2068 = vunpack.c.l.b16 %v1372
        %v2069 = vunpack.c.h.b16 %v1372
        %v2070 = vunpack.c.l.b16 %v1373
        %v2071 = vunpack.c.h.b16 %v1373
        %v2072 = vunpack.c.l.b16 %v1374
        %v2073 = vunpack.c.h.b16 %v1374
        %v2074 = vunpack.c.l.b16 %v1375
        %v2075 = vunpack.c.h.b16 %v1375
        %v2076 = vunpack.c.l.b16 %v1376
        %v2077 = vunpack.c.h.b16 %v1376
        %v2078 = vunpack.c.l.b16 %v1377
        %v2079 = vunpack.c.h.b16 %v1377
        %v2080 = vunpack.c.l.b16 %v1378
        %v2081 = vunpack.c.h.b16 %v1378
        %v2082 = vunpack.c.l.b16 %v1379
        %v2083 = vunpack.c.h.b16 %v1379
        %v2084 = vunpack.c.l.b16 %v1380
        %v2085 = vunpack.c.h.b16 %v1380
        %v2086 = vunpack.c.l.b16 %v1381
        %v2087 = vunpack.c.h.b16 %v1381
        %v2088 = vunpack.c.l.b16 %v1382
        %v2089 = vunpack.c.h.b16 %v1382
        %v2090 = vunpack.c.l.b16 %v1383
        %v2091 = vunpack.c.h.b16 %v1383
        %v2092 = vunpack.c.l.b16 %v1384
        %v2093 = vunpack.c.h.b16 %v1384
        %v2094 = vunpack.c.l.b16 %v1385
        %v2095 = vunpack.c.h.b16 %v1385
        %v2096 = vunpack.c.l.b16 %v1386
        %v2097 = vunpack.c.h.b16 %v1386
        %v2098 = vunpack.c.l.b16 %v1387
        %v2099 = vunpack.c.h.b16 %v1387
        %v2100 = vunpack.c.l.b16 %v1388
        %v2101 = vunpack.c.h.b16 %v1388
        %v2102 = vunpack.c.l.b16 %v1389
        %v2103 = vunpack.c.h.b16 %v1389
        %v2104 = vunpack.c.l.b16 %v1390
        %v2105 = vunpack.c.h.b16 %v1390
        %v2106 = vunpack.c.l.b16 %v1391
        %v2107 = vunpack.c.h.b16 %v1391
        %v2108 = vunpack.c.l.b16 %v1392
        %v2109 = vunpack.c.h.b16 %v1392
        %v2110 = vunpack.c.l.b16 %v1393
        %v2111 = vunpack.c.h.b16 %v1393
        %v2112 = vunpack.c.l.b16 %v1394
        %v2113 = vunpack.c.h.b16 %v1394
        %v2114 = vunpack.c.l.b16 %v1395
        %v2115 = vunpack.c.h.b16 %v1395
        %v2116 = vunpack.c.l.b16 %v1396
        %v2117 = vunpack.c.h.b16 %v1396
        %v2118 = vunpack.c.l.b16 %v1397
        %v2119 = vunpack.c.h.b16 %v1397
        %v2120 = vunpack.c.l.b16 %v1398
        %v2121 = vunpack.c.h.b16 %v1398
        %v2122 = vunpack.c.l.b16 %v1399
        %v2123 = vunpack.c.h.b16 %v1399
        %v2124 = vunpack.c.l.b16 %v1400
        %v2125 = vunpack.c.h.b16 %v1400
        %v2126 = vunpack.c.l.b16 %v1401
        %v2127 = vunpack.c.h.b16 %v1401
        %v2128 = vunpack.c.l.b16 %v1402
        %v2129 = vunpack.c.h.b16 %v1402
        %v2130 = vunpack.c.l.b16 %v1403
        %v2131 = vunpack.c.h.b16 %v1403
        %v2132 = vunpack.c.l.b16 %v1404
        %v2133 = vunpack.c.h.b16 %v1404
        %v2134 = vunpack.c.l.b16 %v1405
        %v2135 = vunpack.c.h.b16 %v1405
        %v2136 = vunpack.c.l.b16 %v1406
        %v2137 = vunpack.c.h.b16 %v1406
        %v2138 = vunpack.c.l.b16 %v1407
        %v2139 = vunpack.c.h.b16 %v1407
        %v2140 = vunpack.c.l.b16 %v1408
        %v2141 = vunpack.c.h.b16 %v1408
        %v2142 = vunpack.c.l.b16 %v1409
        %v2143 = vunpack.c.h.b16 %v1409
        %v2144 = vunpack.c.l.b16 %v1410
        %v2145 = vunpack.c.h.b16 %v1410
        %v2146 = vunpack.c.l.b16 %v1411
        %v2147 = vunpack.c.h.b16 %v1411
        %v2148 = vunpack.c.l.b16 %v1412
        %v2149 = vunpack.c.h.b16 %v1412
        %v2150 = vunpack.c.l.b16 %v1413
        %v2151 = vunpack.c.h.b16 %v1413
        %v2152 = vunpack.c.l.b16 %v1414
        %v2153 = vunpack.c.h.b16 %v1414
        %v2154 = vunpack.c.l.b16 %v1415
        %v2155 = vunpack.c.h.b16 %v1415
        %v2156 = vunpack.c.l.b16 %v1416
        %v2157 = vunpack.c.h.b16 %v1416
        %v2158 = vunpack.c.l.b16 %v1417
        %v2159 = vunpack.c.h.b16 %v1417
        %v2160 = vunpack.c.l.b16 %v1418
        %v2161 = vunpack.c.h.b16 %v1418
        %v2162 = vunpack.c.l.b16 %v1419
        %v2163 = vunpack.c.h.b16 %v1419
        %v2164 = vunpack.c.l.b16 %v1420
        %v2165 = vunpack.c.h.b16 %v1420
        %v2166 = vunpack.c.l.b16 %v1421
        %v2167 = vunpack.c.h.b16 %v1421
        %v2168 = vunpack.c.l.b16 %v1422
        %v2169 = vunpack.c.h.b16 %v1422
        %v2170 = vunpack.c.l.b16 %v1423
        %v2171 = vunpack.c.h.b16 %v1423
        %v2172 = vunpack.c.l.b16 %v1424
        %v2173 = vunpack.c.h.b16 %v1424
        %v2174 = vunpack.c.l.b16 %v1425
        %v2175 = vunpack.c.h.b16 %v1425
        %v2176 = vunpack.c.l.b16 %v1426
        %v2177 = vunpack.c.h.b16 %v1426
        %v2178 = vunpack.c.l.b16 %v1427
        %v2179 = vunpack.c.h.b16 %v1427
        %v2180 = vunpack.c.l.b16 %v1428
        %v2181 = vunpack.c.h.b16 %v1428
        %v2182 = vunpack.c.l.b16 %v1429
        %v2183 = vunpack.c.h.b16 %v1429
        %v2184 = vunpack.c.l.b16 %v1430
        %v2185 = vunpack.c.h.b16 %v1430
        %v2186 = vunpack.c.l.b16 %v1431
        %v2187 = vunpack.c.h.b16 %v1431
        %v2188 = vunpack.c.l.b16 %v1432
        %v2189 = vunpack.c.h.b16 %v1432
        %v2190 = vunpack.c.l.b16 %v1433
        %v2191 = vunpack.c.h.b16 %v1433
        %v2192 = vunpack.c.l.b16 %v1434
        %v2193 = vunpack.c.h.b16 %v1434
        %v2194 = vunpack.c.l.b16 %v1435
        %v2195 = vunpack.c.h.b16 %v1435
        %v2196 = vunpack.c.l.b16 %v1436
        %v2197 = vunpack.c.h.b16 %v1436
        %v2198 = vunpack.c.l.b16 %v1437
        %v2199 = vunpack.c.h.b16 %v1437
        %v2200 = vunpack.c.l.b16 %v1438
        %v2201 = vunpack.c.h.b16 %v1438
        %v2202 = vunpack.c.l.b16 %v1439
        %v2203 = vunpack.c.h.b16 %v1439
        %v2204 = vunpack.c.l.b16 %v1440
        %v2205 = vunpack.c.h.b16 %v1440
        %v2206 = vunpack.c.l.b16 %v1441
        %v2207 = vunpack.c.h.b16 %v1441
        %v2208 = vunpack.c.l.b16 %v1442
        %v2209 = vunpack.c.h.b16 %v1442
        %v2210 = vunpack.c.l.b16 %v1443
        %v2211 = vunpack.c.h.b16 %v1443
        %v2212 = vunpack.c.l.b16 %v1444
        %v2213 = vunpack.c.h.b16 %v1444
        %v2214 = vunpack.c.l.b16 %v1445
        %v2215 = vunpack.c.h.b16 %v1445
        %v2216 = vunpack.c.l.b16 %v1446
        %v2217 = vunpack.c.h.b16 %v1446
        %v2218 = vunpack.c.l.b16 %v1447
        %v2219 = vunpack.c.h.b16 %v1447
        %v2220 = vunpack.c.l.b16 %v1448
        %v2221 = vunpack.c.h.b16 %v1448
        %v2222 = vunpack.c.l.b16 %v1449
        %v2223 = vunpack.c.h.b16 %v1449
        %v2224 = vunpack.c.l.b16 %v1450
        %v2225 = vunpack.c.h.b16 %v1450
        %v2226 = vunpack.c.l.b16 %v1451
        %v2227 = vunpack.c.h.b16 %v1451
        %v2228 = vunpack.c.l.b16 %v1452
        %v2229 = vunpack.c.h.b16 %v1452
        %v2230 = vunpack.c.l.b16 %v1453
        %v2231 = vunpack.c.h.b16 %v1453
        %v2232 = vunpack.c.l.b16 %v1454
        %v2233 = vunpack.c.h.b16 %v1454
        %v2234 = vunpack.c.l.b16 %v1455
        %v2235 = vunpack.c.h.b16 %v1455
        %v2236 = vunpack.c.l.b16 %v1456
        %v2237 = vunpack.c.h.b16 %v1456
        %v2238 = vunpack.c.l.b16 %v1457
        %v2239 = vunpack.c.h.b16 %v1457
        %v2240 = vunpack.c.l.b16 %v1458
        %v2241 = vunpack.c.h.b16 %v1458
        %v2242 = vunpack.c.l.b16 %v1459
        %v2243 = vunpack.c.h.b16 %v1459
        %v2244 = vunpack.c.l.b16 %v1460
        %v2245 = vunpack.c.h.b16 %v1460
        %v2246 = vunpack.c.l.b16 %v1461
        %v2247 = vunpack.c.h.b16 %v1461
        %v2248 = vunpack.c.l.b16 %v1462
        %v2249 = vunpack.c.h.b16 %v1462
        %v2250 = vunpack.c.l.b16 %v1463
        %v2251 = vunpack.c.h.b16 %v1463
        %v2252 = vunpack.c.l.b16 %v1464
        %v2253 = vunpack.c.h.b16 %v1464
        %v2254 = vunpack.c.l.b16 %v1465
        %v2255 = vunpack.c.h.b16 %v1465
        %v2256 = vpack.c.b16 %v1748, %v1744
        %v2257 = vpack.c.b16 %v1749, %v1745
        %v2258 = vpack.c.b16 %v1750, %v1746
        %v2259 = vpack.c.b16 %v1751, %v1747
        %v2260 = vpack.c.b16 %v1756, %v1752
        %v2261 = vpack.c.b16 %v1757, %v1753
        %v2262 = vpack.c.b16 %v1758, %v1754
        %v2263 = vpack.c.b16 %v1759, %v1755
        %v2264 = vpack.c.b16 %v1764, %v1760
        %v2265 = vpack.c.b16 %v1765, %v1761
        %v2266 = vpack.c.b16 %v1766, %v1762
        %v2267 = vpack.c.b16 %v1767, %v1763
        %v2268 = vpack.c.b16 %v1772, %v1768
        %v2269 = vpack.c.b16 %v1773, %v1769
        %v2270 = vpack.c.b16 %v1774, %v1770
        %v2271 = vpack.c.b16 %v1775, %v1771
        %v2272 = vpack.c.b16 %v1780, %v1776
        %v2273 = vpack.c.b16 %v1781, %v1777
        %v2274 = vpack.c.b16 %v1782, %v1778
        %v2275 = vpack.c.b16 %v1783, %v1779
        %v2276 = vpack.c.b16 %v1788, %v1784
        %v2277 = vpack.c.b16 %v1789, %v1785
        %v2278 = vpack.c.b16 %v1790, %v1786
        %v2279 = vpack.c.b16 %v1791, %v1787
        %v2280 = vpack.c.b16 %v1796, %v1792
        %v2281 = vpack.c.b16 %v1797, %v1793
        %v2282 = vpack.c.b16 %v1798, %v1794
        %v2283 = vpack.c.b16 %v1799, %v1795
        %v2284 = vpack.c.b16 %v1804, %v1800
        %v2285 = vpack.c.b16 %v1805, %v1801
        %v2286 = vpack.c.b16 %v1806, %v1802
        %v2287 = vpack.c.b16 %v1807, %v1803
        %v2288 = vpack.c.b16 %v1812, %v1808
        %v2289 = vpack.c.b16 %v1813, %v1809
        %v2290 = vpack.c.b16 %v1814, %v1810
        %v2291 = vpack.c.b16 %v1815, %v1811
        %v2292 = vpack.c.b16 %v1820, %v1816
        %v2293 = vpack.c.b16 %v1821, %v1817
        %v2294 = vpack.c.b16 %v1822, %v1818
        %v2295 = vpack.c.b16 %v1823, %v1819
        %v2296 = vpack.c.b16 %v1828, %v1824
        %v2297 = vpack.c.b16 %v1829, %v1825
        %v2298 = vpack.c.b16 %v1830, %v1826
        %v2299 = vpack.c.b16 %v1831, %v1827
        %v2300 = vpack.c.b16 %v1836, %v1832
        %v2301 = vpack.c.b16 %v1837, %v1833
        %v2302 = vpack.c.b16 %v1838, %v1834
        %v2303 = vpack.c.b16 %v1839, %v1835
        %v2304 = vpack.c.b16 %v1844, %v1840
        %v2305 = vpack.c.b16 %v1845, %v1841
        %v2306 = vpack.c.b16 %v1846, %v1842
        %v2307 = vpack.c.b16 %v1847, %v1843
        %v2308 = vpack.c.b16 %v1852, %v1848
        %v2309 = vpack.c.b16 %v1853, %v1849
        %v2310 = vpack.c.b16 %v1854, %v1850
        %v2311 = vpack.c.b16 %v1855, %v1851
        %v2312 = vpack.c.b16 %v1860, %v1856
        %v2313 = vpack.c.b16 %v1861, %v1857
        %v2314 = vpack.c.b16 %v1862, %v1858
        %v2315 = vpack.c.b16 %v1863, %v1859
        %v2316 = vpack.c.b16 %v1868, %v1864
        %v2317 = vpack.c.b16 %v1869, %v1865
        %v2318 = vpack.c.b16 %v1870, %v1866
        %v2319 = vpack.c.b16 %v1871, %v1867
        %v2320 = vpack.c.b16 %v1876, %v1872
        %v2321 = vpack.c.b16 %v1877, %v1873
        %v2322 = vpack.c.b16 %v1878, %v1874
        %v2323 = vpack.c.b16 %v1879, %v1875
        %v2324 = vpack.c.b16 %v1884, %v1880
        %v2325 = vpack.c.b16 %v1885, %v1881
        %v2326 = vpack.c.b16 %v1886, %v1882
        %v2327 = vpack.c.b16 %v1887, %v1883
        %v2328 = vpack.c.b16 %v1892, %v1888
        %v2329 = vpack.c.b16 %v1893, %v1889
        %v2330 = vpack.c.b16 %v1894, %v1890
        %v2331 = vpack.c.b16 %v1895, %v1891
        %v2332 = vpack.c.b16 %v1900, %v1896
        %v2333 = vpack.c.b16 %v1901, %v1897
        %v2334 = vpack.c.b16 %v1902, %v1898
        %v2335 = vpack.c.b16 %v1903, %v1899
        %v2336 = vpack.c.b16 %v1908, %v1904
        %v2337 = vpack.c.b16 %v1909, %v1905
        %v2338 = vpack.c.b16 %v1910, %v1906
        %v2339 = vpack.c.b16 %v1911, %v1907
        %v2340 = vpack.c.b16 %v1916, %v1912
        %v2341 = vpack.c.b16 %v1917, %v1913
        %v2342 = vpack.c.b16 %v1918, %v1914
        %v2343 = vpack.c.b16 %v1919, %v1915
        %v2344 = vpack.c.b16 %v1924, %v1920
        %v2345 = vpack.c.b16 %v1925, %v1921
        %v2346 = vpack.c.b16 %v1926, %v1922
        %v2347 = vpack.c.b16 %v1927, %v1923
        %v2348 = vpack.c.b16 %v1932, %v1928
        %v2349 = vpack.c.b16 %v1933, %v1929
        %v2350 = vpack.c.b16 %v1934, %v1930
        %v2351 = vpack.c.b16 %v1935, %v1931
        %v2352 = vpack.c.b16 %v1940, %v1936
        %v2353 = vpack.c.b16 %v1941, %v1937
        %v2354 = vpack.c.b16 %v1942, %v1938
        %v2355 = vpack.c.b16 %v1943, %v1939
        %v2356 = vpack.c.b16 %v1948, %v1944
        %v2357 = vpack.c.b16 %v1949, %v1945
        %v2358 = vpack.c.b16 %v1950, %v1946
        %v2359 = vpack.c.b16 %v1951, %v1947
        %v2360 = vpack.c.b16 %v1956, %v1952
        %v2361 = vpack.c.b16 %v1957, %v1953
        %v2362 = vpack.c.b16 %v1958, %v1954
        %v2363 = vpack.c.b16 %v1959, %v1955
        %v2364 = vpack.c.b16 %v1964, %v1960
        %v2365 = vpack.c.b16 %v1965, %v1961
        %v2366 = vpack.c.b16 %v1966, %v1962
        %v2367 = vpack.c.b16 %v1967, %v1963
        %v2368 = vpack.c.b16 %v1972, %v1968
        %v2369 = vpack.c.b16 %v1973, %v1969
        %v2370 = vpack.c.b16 %v1974, %v1970
        %v2371 = vpack.c.b16 %v1975, %v1971
        %v2372 = vpack.c.b16 %v1980, %v1976
        %v2373 = vpack.c.b16 %v1981, %v1977
        %v2374 = vpack.c.b16 %v1982, %v1978
        %v2375 = vpack.c.b16 %v1983, %v1979
        %v2376 = vpack.c.b16 %v1988, %v1984
        %v2377 = vpack.c.b16 %v1989, %v1985
        %v2378 = vpack.c.b16 %v1990, %v1986
        %v2379 = vpack.c.b16 %v1991, %v1987
        %v2380 = vpack.c.b16 %v1996, %v1992
        %v2381 = vpack.c.b16 %v1997, %v1993
        %v2382 = vpack.c.b16 %v1998, %v1994
        %v2383 = vpack.c.b16 %v1999, %v1995
        %v2384 = vpack.c.b16 %v2004, %v2000
        %v2385 = vpack.c.b16 %v2005, %v2001
        %v2386 = vpack.c.b16 %v2006, %v2002
        %v2387 = vpack.c.b16 %v2007, %v2003
        %v2388 = vpack.c.b16 %v2012, %v2008
        %v2389 = vpack.c.b16 %v2013, %v2009
        %v2390 = vpack.c.b16 %v2014, %v2010
        %v2391 = vpack.c.b16 %v2015, %v2011
        %v2392 = vpack.c.b16 %v2020, %v2016
        %v2393 = vpack.c.b16 %v2021, %v2017
        %v2394 = vpack.c.b16 %v2022, %v2018
        %v2395 = vpack.c.b16 %v2023, %v2019
        %v2396 = vpack.c.b16 %v2028, %v2024
        %v2397 = vpack.c.b16 %v2029, %v2025
        %v2398 = vpack.c.b16 %v2030, %v2026
        %v2399 = vpack.c.b16 %v2031, %v2027
        %v2400 = vpack.c.b16 %v2036, %v2032
        %v2401 = vpack.c.b16 %v2037, %v2033
        %v2402 = vpack.c.b16 %v2038, %v2034
        %v2403 = vpack.c.b16 %v2039, %v2035
        %v2404 = vpack.c.b16 %v2044, %v2040
        %v2405 = vpack.c.b16 %v2045, %v2041
        %v2406 = vpack.c.b16 %v2046, %v2042
        %v2407 = vpack.c.b16 %v2047, %v2043
        %v2408 = vpack.c.b16 %v2052, %v2048
        %v2409 = vpack.c.b16 %v2053, %v2049
        %v2410 = vpack.c.b16 %v2054, %v2050
        %v2411 = vpack.c.b16 %v2055, %v2051
        %v2412 = vpack.c.b16 %v2060, %v2056
        %v2413 = vpack.c.b16 %v2061, %v2057
        %v2414 = vpack.c.b16 %v2062, %v2058
        %v2415 = vpack.c.b16 %v2063, %v2059
        %v2416 = vpack.c.b16 %v2068, %v2064
        %v2417 = vpack.c.b16 %v2069, %v2065
        %v2418 = vpack.c.b16 %v2070, %v2066
        %v2419 = vpack.c.b16 %v2071, %v2067
        %v2420 = vpack.c.b16 %v2076, %v2072
        %v2421 = vpack.c.b16 %v2077, %v2073
        %v2422 = vpack.c.b16 %v2078, %v2074
        %v2423 = vpack.c.b16 %v2079, %v2075
        %v2424 = vpack.c.b16 %v2084, %v2080
        %v2425 = vpack.c.b16 %v2085, %v2081
        %v2426 = vpack.c.b16 %v2086, %v2082
        %v2427 = vpack.c.b16 %v2087, %v2083
        %v2428 = vpack.c.b16 %v2092, %v2088
        %v2429 = vpack.c.b16 %v2093, %v2089
        %v2430 = vpack.c.b16 %v2094, %v2090
        %v2431 = vpack.c.b16 %v2095, %v2091
        %v2432 = vpack.c.b16 %v2100, %v2096
        %v2433 = vpack.c.b16 %v2101, %v2097
        %v2434 = vpack.c.b16 %v2102, %v2098
        %v2435 = vpack.c.b16 %v2103, %v2099
        %v2436 = vpack.c.b16 %v2108, %v2104
        %v2437 = vpack.c.b16 %v2109, %v2105
        %v2438 = vpack.c.b16 %v2110, %v2106
        %v2439 = vpack.c.b16 %v2111, %v2107
        %v2440 = vpack.c.b16 %v2116, %v2112
        %v2441 = vpack.c.b16 %v2117, %v2113
        %v2442 = vpack.c.b16 %v2118, %v2114
        %v2443 = vpack.c.b16 %v2119, %v2115
        %v2444 = vpack.c.b16 %v2124, %v2120
        %v2445 = vpack.c.b16 %v2125, %v2121
        %v2446 = vpack.c.b16 %v2126, %v2122
        %v2447 = vpack.c.b16 %v2127, %v2123
        %v2448 = vpack.c.b16 %v2132, %v2128
        %v2449 = vpack.c.b16 %v2133, %v2129
        %v2450 = vpack.c.b16 %v2134, %v2130
        %v2451 = vpack.c.b16 %v2135, %v2131
        %v2452 = vpack.c.b16 %v2140, %v2136
        %v2453 = vpack.c.b16 %v2141, %v2137
        %v2454 = vpack.c.b16 %v2142, %v2138
        %v2455 = vpack.c.b16 %v2143, %v2139
        %v2456 = vpack.c.b16 %v2148, %v2144
        %v2457 = vpack.c.b16 %v2149, %v2145
        %v2458 = vpack.c.b16 %v2150, %v2146
        %v2459 = vpack.c.b16 %v2151, %v2147
        %v2460 = vpack.c.b16 %v2156, %v2152
        %v2461 = vpack.c.b16 %v2157, %v2153
        %v2462 = vpack.c.b16 %v2158, %v2154
        %v2463 = vpack.c.b16 %v2159, %v2155
        %v2464 = vpack.c.b16 %v2164, %v2160
        %v2465 = vpack.c.b16 %v2165, %v2161
        %v2466 = vpack.c.b16 %v2166, %v2162
        %v2467 = vpack.c.b16 %v2167, %v2163
        %v2468 = vpack.c.b16 %v2172, %v2168
        %v2469 = vpack.c.b16 %v2173, %v2169
        %v2470 = vpack.c.b16 %v2174, %v2170
        %v2471 = vpack.c.b16 %v2175, %v2171
        %v2472 = vpack.c.b16 %v2180, %v2176
        %v2473 = vpack.c.b16 %v2181, %v2177
        %v2474 = vpack.c.b16 %v2182, %v2178
        %v2475 = vpack.c.b16 %v2183, %v2179
        %v2476 = vpack.c.b16 %v2188, %v2184
        %v2477 = vpack.c.b16 %v2189, %v2185
        %v2478 = vpack.c.b16 %v2190, %v2186
        %v2479 = vpack.c.b16 %v2191, %v2187
        %v2480 = vpack.c.b16 %v2196, %v2192
        %v2481 = vpack.c.b16 %v2197, %v2193
        %v2482 = vpack.c.b16 %v2198, %v2194
        %v2483 = vpack.c.b16 %v2199, %v2195
        %v2484 = vpack.c.b16 %v2204, %v2200
        %v2485 = vpack.c.b16 %v2205, %v2201
        %v2486 = vpack.c.b16 %v2206, %v2202
        %v2487 = vpack.c.b16 %v2207, %v2203
        %v2488 = vpack.c.b16 %v2212, %v2208
        %v2489 = vpack.c.b16 %v2213, %v2209
        %v2490 = vpack.c.b16 %v2214, %v2210
        %v2491 = vpack.c.b16 %v2215, %v2211
        %v2492 = vpack.c.b16 %v2220, %v2216
        %v2493 = vpack.c.b16 %v2221, %v2217
        %v2494 = vpack.c.b16 %v2222, %v2218
        %v2495 = vpack.c.b16 %v2223, %v2219
        %v2496 = vpack.c.b16 %v2228, %v2224
        %v2497 = vpack.c.b16 %v2229, %v2225
        %v2498 = vpack.c.b16 %v2230, %v2226
        %v2499 = vpack.c.b16 %v2231, %v2227
        %v2500 = vpack.c.b16 %v2236, %v2232
        %v2501 = vpack.c.b16 %v2237, %v2233
        %v2502 = vpack.c.b16 %v2238, %v2234
        %v2503 = vpack.c.b16 %v2239, %v2235
        %v2504 = vpack.c.b16 %v2244, %v2240
        %v2505 = vpack.c.b16 %v2245, %v2241
        %v2506 = vpack.c.b16 %v2246, %v2242
        %v2507 = vpack.c.b16 %v2247, %v2243
        %v2508 = vpack.c.b16 %v2252, %v2248
        %v2509 = vpack.c.b16 %v2253, %v2249
        %v2510 = vpack.c.b16 %v2254, %v2250
        %v2511 = vpack.c.b16 %v2255, %v2251
        %2768 = vmatprep.subr.bf16.mxu0 %v2257
        %2769 = vmatpush1.bf16.msra.mxu0 %v2256
        %2770 = vmatprep.subr.bf16.mxu0 %v2261
        %2771 = vmatpush1.bf16.msra.mxu0 %v2260
        %2772 = vmatprep.subr.bf16.mxu0 %v2265
        %2773 = vmatpush1.bf16.msra.mxu0 %v2264
        %2774 = vmatprep.subr.bf16.mxu0 %v2269
        %2775 = vmatpush1.bf16.msra.mxu0 %v2268
        %2776 = vmatprep.subr.bf16.mxu0 %v2273
        %2777 = vmatpush1.bf16.msra.mxu0 %v2272
        %2778 = vmatprep.subr.bf16.mxu0 %v2277
        %2779 = vmatpush1.bf16.msra.mxu0 %v2276
        %2780 = vmatprep.subr.bf16.mxu0 %v2281
        %2781 = vmatpush1.bf16.msra.mxu0 %v2280
        %2782 = vmatprep.subr.bf16.mxu0 %v2285
        %2783 = vmatpush1.bf16.msra.mxu0 %v2284
        %2784 = vmatprep.subr.bf16.mxu0 %v2289
        %2785 = vmatpush1.bf16.msra.mxu0 %v2288
        %2786 = vmatprep.subr.bf16.mxu0 %v2293
        %2787 = vmatpush1.bf16.msra.mxu0 %v2292
        %2788 = vmatprep.subr.bf16.mxu0 %v2297
        %2789 = vmatpush1.bf16.msra.mxu0 %v2296
        %2790 = vmatprep.subr.bf16.mxu0 %v2301
        %2791 = vmatpush1.bf16.msra.mxu0 %v2300
        %2792 = vmatprep.subr.bf16.mxu0 %v2305
        %2793 = vmatpush1.bf16.msra.mxu0 %v2304
        %2794 = vmatprep.subr.bf16.mxu0 %v2309
        %2795 = vmatpush1.bf16.msra.mxu0 %v2308
        %2796 = vmatprep.subr.bf16.mxu0 %v2313
        %2797 = vmatpush1.bf16.msra.mxu0 %v2312
        %2798 = vmatprep.subr.bf16.mxu0 %v2317
        %2799 = vmatpush1.bf16.msra.mxu0 %v2316
        %2800 = vmatprep.mubr.bf16.mxu0 %v1203
        %2801 = vmatmul.mubr.bf16.gmra.mrb[0].mxu0 %v1202
        %v2802 = vpop.f32.mrb[0].mxu0
        %v2803 = vadd.f32 %v1471, %v2802
        %v2804 = vpop.f32.mrb[0].mxu0
        %v2805 = vadd.f32 %v1475, %v2804
        %v2806 = vpop.f32.mrb[0].mxu0
        %v2807 = vpop.f32.mrb[0].mxu0
        %2808 = vdwg.mxu0
        %2809 = vmatprep.subr.bf16.mxu0 %v2321
        %2810 = vmatpush1.bf16.msra.mxu0 %v2320
        %2811 = vmatprep.subr.bf16.mxu0 %v2325
        %2812 = vmatpush1.bf16.msra.mxu0 %v2324
        %2813 = vmatprep.subr.bf16.mxu0 %v2329
        %2814 = vmatpush1.bf16.msra.mxu0 %v2328
        %2815 = vmatprep.subr.bf16.mxu0 %v2333
        %2816 = vmatpush1.bf16.msra.mxu0 %v2332
        %2817 = vmatprep.subr.bf16.mxu0 %v2337
        %2818 = vmatpush1.bf16.msra.mxu0 %v2336
        %2819 = vmatprep.subr.bf16.mxu0 %v2341
        %2820 = vmatpush1.bf16.msra.mxu0 %v2340
        %2821 = vmatprep.subr.bf16.mxu0 %v2345
        %2822 = vmatpush1.bf16.msra.mxu0 %v2344
        %2823 = vmatprep.subr.bf16.mxu0 %v2349
        %2824 = vmatpush1.bf16.msra.mxu0 %v2348
        %2825 = vmatprep.subr.bf16.mxu0 %v2353
        %2826 = vmatpush1.bf16.msra.mxu0 %v2352
        %2827 = vmatprep.subr.bf16.mxu0 %v2357
        %2828 = vmatpush1.bf16.msra.mxu0 %v2356
        %2829 = vmatprep.subr.bf16.mxu0 %v2361
        %2830 = vmatpush1.bf16.msra.mxu0 %v2360
        %2831 = vmatprep.subr.bf16.mxu0 %v2365
        %2832 = vmatpush1.bf16.msra.mxu0 %v2364
        %2833 = vmatprep.subr.bf16.mxu0 %v2369
        %2834 = vmatpush1.bf16.msra.mxu0 %v2368
        %2835 = vmatprep.subr.bf16.mxu0 %v2373
        %2836 = vmatpush1.bf16.msra.mxu0 %v2372
        %2837 = vmatprep.subr.bf16.mxu0 %v2377
        %2838 = vmatpush1.bf16.msra.mxu0 %v2376
        %2839 = vmatprep.subr.bf16.mxu0 %v2381
        %2840 = vmatpush1.bf16.msra.mxu0 %v2380
        %2841 = vmatprep.mubr.bf16.mxu0 %v1205
        %2842 = vmatmul.mubr.bf16.gmra.mrb[0].mxu0 %v1204
        %v2843 = vpop.f32.mrb[0].mxu0
        %v2844 = vadd.f32 %v2803, %v2843
        %v2845 = vpop.f32.mrb[0].mxu0
        %v2846 = vadd.f32 %v2805, %v2845
        %v2847 = vpop.f32.mrb[0].mxu0
        %v2848 = vpop.f32.mrb[0].mxu0
        %2849 = vdwg.mxu0
        %2850 = vmatprep.subr.bf16.mxu0 %v2385
        %2851 = vmatpush1.bf16.msra.mxu0 %v2384
        %2852 = vmatprep.subr.bf16.mxu0 %v2389
        %2853 = vmatpush1.bf16.msra.mxu0 %v2388
        %2854 = vmatprep.subr.bf16.mxu0 %v2393
        %2855 = vmatpush1.bf16.msra.mxu0 %v2392
        %2856 = vmatprep.subr.bf16.mxu0 %v2397
        %2857 = vmatpush1.bf16.msra.mxu0 %v2396
        %2858 = vmatprep.subr.bf16.mxu0 %v2401
        %2859 = vmatpush1.bf16.msra.mxu0 %v2400
        %2860 = vmatprep.subr.bf16.mxu0 %v2405
        %2861 = vmatpush1.bf16.msra.mxu0 %v2404
        %2862 = vmatprep.subr.bf16.mxu0 %v2409
        %2863 = vmatpush1.bf16.msra.mxu0 %v2408
        %2864 = vmatprep.subr.bf16.mxu0 %v2413
        %2865 = vmatpush1.bf16.msra.mxu0 %v2412
        %2866 = vmatprep.subr.bf16.mxu0 %v2417
        %2867 = vmatpush1.bf16.msra.mxu0 %v2416
        %2868 = vmatprep.subr.bf16.mxu0 %v2421
        %2869 = vmatpush1.bf16.msra.mxu0 %v2420
        %2870 = vmatprep.subr.bf16.mxu0 %v2425
        %2871 = vmatpush1.bf16.msra.mxu0 %v2424
        %2872 = vmatprep.subr.bf16.mxu0 %v2429
        %2873 = vmatpush1.bf16.msra.mxu0 %v2428
        %2874 = vmatprep.subr.bf16.mxu0 %v2433
        %2875 = vmatpush1.bf16.msra.mxu0 %v2432
        %2876 = vmatprep.subr.bf16.mxu0 %v2437
        %2877 = vmatpush1.bf16.msra.mxu0 %v2436
        %2878 = vmatprep.subr.bf16.mxu0 %v2441
        %2879 = vmatpush1.bf16.msra.mxu0 %v2440
        %2880 = vmatprep.subr.bf16.mxu0 %v2445
        %2881 = vmatpush1.bf16.msra.mxu0 %v2444
        %2882 = vmatprep.mubr.bf16.mxu0 %v1207
        %2883 = vmatmul.mubr.bf16.gmra.mrb[0].mxu0 %v1206
        %v2884 = vpop.f32.mrb[0].mxu0
        %v2885 = vadd.f32 %v2844, %v2884
        %v2886 = vpop.f32.mrb[0].mxu0
        %v2887 = vadd.f32 %v2846, %v2886
        %v2888 = vpop.f32.mrb[0].mxu0
        %v2889 = vpop.f32.mrb[0].mxu0
        %2890 = vdwg.mxu0
        %2891 = vmatprep.subr.bf16.mxu0 %v2449
        %2892 = vmatpush1.bf16.msra.mxu0 %v2448
        %2893 = vmatprep.subr.bf16.mxu0 %v2453
        %2894 = vmatpush1.bf16.msra.mxu0 %v2452
        %2895 = vmatprep.subr.bf16.mxu0 %v2457
        %2896 = vmatpush1.bf16.msra.mxu0 %v2456
        %2897 = vmatprep.subr.bf16.mxu0 %v2461
        %2898 = vmatpush1.bf16.msra.mxu0 %v2460
        %2899 = vmatprep.subr.bf16.mxu0 %v2465
        %2900 = vmatpush1.bf16.msra.mxu0 %v2464
        %2901 = vmatprep.subr.bf16.mxu0 %v2469
        %2902 = vmatpush1.bf16.msra.mxu0 %v2468
        %2903 = vmatprep.subr.bf16.mxu0 %v2473
        %2904 = vmatpush1.bf16.msra.mxu0 %v2472
        %2905 = vmatprep.subr.bf16.mxu0 %v2477
        %2906 = vmatpush1.bf16.msra.mxu0 %v2476
        %2907 = vmatprep.subr.bf16.mxu0 %v2481
        %2908 = vmatpush1.bf16.msra.mxu0 %v2480
        %2909 = vmatprep.subr.bf16.mxu0 %v2485
        %2910 = vmatpush1.bf16.msra.mxu0 %v2484
        %2911 = vmatprep.subr.bf16.mxu0 %v2489
        %2912 = vmatpush1.bf16.msra.mxu0 %v2488
        %2913 = vmatprep.subr.bf16.mxu0 %v2493
        %2914 = vmatpush1.bf16.msra.mxu0 %v2492
        %2915 = vmatprep.subr.bf16.mxu0 %v2497
        %2916 = vmatpush1.bf16.msra.mxu0 %v2496
        %2917 = vmatprep.subr.bf16.mxu0 %v2501
        %2918 = vmatpush1.bf16.msra.mxu0 %v2500
        %2919 = vmatprep.subr.bf16.mxu0 %v2505
        %2920 = vmatpush1.bf16.msra.mxu0 %v2504
        %2921 = vmatprep.subr.bf16.mxu0 %v2509
        %2922 = vmatpush1.bf16.msra.mxu0 %v2508
        %2923 = vmatprep.mubr.bf16.mxu0 %v1209
        %2924 = vmatmul.mubr.bf16.gmra.mrb[0].mxu0 %v1208
        %v2925 = vpop.f32.mrb[0].mxu0
        %v2926 = vadd.f32 %v2885, %v2925
        %v2927 = vpop.f32.mrb[0].mxu0
        %v2928 = vadd.f32 %v2887, %v2927
        %v2929 = vpop.f32.mrb[0].mxu0
        %v2930 = vpop.f32.mrb[0].mxu0
        %2931 = vdwg.mxu0
        %2932 = vmatprep.subr.bf16.mxu0 %v2259
        %2933 = vmatpush1.bf16.msra.mxu0 %v2258
        %2934 = vmatprep.subr.bf16.mxu0 %v2263
        %2935 = vmatpush1.bf16.msra.mxu0 %v2262
        %2936 = vmatprep.subr.bf16.mxu0 %v2267
        %2937 = vmatpush1.bf16.msra.mxu0 %v2266
        %2938 = vmatprep.subr.bf16.mxu0 %v2271
        %2939 = vmatpush1.bf16.msra.mxu0 %v2270
        %2940 = vmatprep.subr.bf16.mxu0 %v2275
        %2941 = vmatpush1.bf16.msra.mxu0 %v2274
        %2942 = vmatprep.subr.bf16.mxu0 %v2279
        %2943 = vmatpush1.bf16.msra.mxu0 %v2278
        %2944 = vmatprep.subr.bf16.mxu0 %v2283
        %2945 = vmatpush1.bf16.msra.mxu0 %v2282
        %2946 = vmatprep.subr.bf16.mxu0 %v2287
        %2947 = vmatpush1.bf16.msra.mxu0 %v2286
        %2948 = vmatprep.subr.bf16.mxu0 %v2291
        %2949 = vmatpush1.bf16.msra.mxu0 %v2290
        %2950 = vmatprep.subr.bf16.mxu0 %v2295
        %2951 = vmatpush1.bf16.msra.mxu0 %v2294
        %2952 = vmatprep.subr.bf16.mxu0 %v2299
        %2953 = vmatpush1.bf16.msra.mxu0 %v2298
        %2954 = vmatprep.subr.bf16.mxu0 %v2303
        %2955 = vmatpush1.bf16.msra.mxu0 %v2302
        %2956 = vmatprep.subr.bf16.mxu0 %v2307
        %2957 = vmatpush1.bf16.msra.mxu0 %v2306
        %2958 = vmatprep.subr.bf16.mxu0 %v2311
        %2959 = vmatpush1.bf16.msra.mxu0 %v2310
        %2960 = vmatprep.subr.bf16.mxu0 %v2315
        %2961 = vmatpush1.bf16.msra.mxu0 %v2314
        %2962 = vmatprep.subr.bf16.mxu0 %v2319
        %2963 = vmatpush1.bf16.msra.mxu0 %v2318
        %2964 = vmatprep.mubr.bf16.mxu0 %v1203
        %2965 = vmatmul.mubr.bf16.gmra.mrb[0].mxu0 %v1202
        %v2966 = vpop.f32.mrb[0].mxu0
        %v2967 = vadd.f32 %v1479, %v2966
        %v2968 = vpop.f32.mrb[0].mxu0
        %v2969 = vadd.f32 %v1483, %v2968
        %v2970 = vpop.f32.mrb[0].mxu0
        %v2971 = vpop.f32.mrb[0].mxu0
        %2972 = vdwg.mxu0
        %2973 = vmatprep.subr.bf16.mxu0 %v2323
        %2974 = vmatpush1.bf16.msra.mxu0 %v2322
        %2975 = vmatprep.subr.bf16.mxu0 %v2327
        %2976 = vmatpush1.bf16.msra.mxu0 %v2326
        %2977 = vmatprep.subr.bf16.mxu0 %v2331
        %2978 = vmatpush1.bf16.msra.mxu0 %v2330
        %2979 = vmatprep.subr.bf16.mxu0 %v2335
        %2980 = vmatpush1.bf16.msra.mxu0 %v2334
        %2981 = vmatprep.subr.bf16.mxu0 %v2339
        %2982 = vmatpush1.bf16.msra.mxu0 %v2338
        %2983 = vmatprep.subr.bf16.mxu0 %v2343
        %2984 = vmatpush1.bf16.msra.mxu0 %v2342
        %2985 = vmatprep.subr.bf16.mxu0 %v2347
        %2986 = vmatpush1.bf16.msra.mxu0 %v2346
        %2987 = vmatprep.subr.bf16.mxu0 %v2351
        %2988 = vmatpush1.bf16.msra.mxu0 %v2350
        %2989 = vmatprep.subr.bf16.mxu0 %v2355
        %2990 = vmatpush1.bf16.msra.mxu0 %v2354
        %2991 = vmatprep.subr.bf16.mxu0 %v2359
        %2992 = vmatpush1.bf16.msra.mxu0 %v2358
        %2993 = vmatprep.subr.bf16.mxu0 %v2363
        %2994 = vmatpush1.bf16.msra.mxu0 %v2362
        %2995 = vmatprep.subr.bf16.mxu0 %v2367
        %2996 = vmatpush1.bf16.msra.mxu0 %v2366
        %2997 = vmatprep.subr.bf16.mxu0 %v2371
        %2998 = vmatpush1.bf16.msra.mxu0 %v2370
        %2999 = vmatprep.subr.bf16.mxu0 %v2375
        %3000 = vmatpush1.bf16.msra.mxu0 %v2374
        %3001 = vmatprep.subr.bf16.mxu0 %v2379
        %3002 = vmatpush1.bf16.msra.mxu0 %v2378
        %3003 = vmatprep.subr.bf16.mxu0 %v2383
        %3004 = vmatpush1.bf16.msra.mxu0 %v2382
        %3005 = vmatprep.mubr.bf16.mxu0 %v1205
        %3006 = vmatmul.mubr.bf16.gmra.mrb[0].mxu0 %v1204
        %v3007 = vpop.f32.mrb[0].mxu0
        %v3008 = vadd.f32 %v2967, %v3007
        %v3009 = vpop.f32.mrb[0].mxu0
        %v3010 = vadd.f32 %v2969, %v3009
        %v3011 = vpop.f32.mrb[0].mxu0
        %v3012 = vpop.f32.mrb[0].mxu0
        %3013 = vdwg.mxu0
        %3014 = vmatprep.subr.bf16.mxu0 %v2387
        %3015 = vmatpush1.bf16.msra.mxu0 %v2386
        %3016 = vmatprep.subr.bf16.mxu0 %v2391
        %3017 = vmatpush1.bf16.msra.mxu0 %v2390
        %3018 = vmatprep.subr.bf16.mxu0 %v2395
        %3019 = vmatpush1.bf16.msra.mxu0 %v2394
        %3020 = vmatprep.subr.bf16.mxu0 %v2399
        %3021 = vmatpush1.bf16.msra.mxu0 %v2398
        %3022 = vmatprep.subr.bf16.mxu0 %v2403
        %3023 = vmatpush1.bf16.msra.mxu0 %v2402
        %3024 = vmatprep.subr.bf16.mxu0 %v2407
        %3025 = vmatpush1.bf16.msra.mxu0 %v2406
        %3026 = vmatprep.subr.bf16.mxu0 %v2411
        %3027 = vmatpush1.bf16.msra.mxu0 %v2410
        %3028 = vmatprep.subr.bf16.mxu0 %v2415
        %3029 = vmatpush1.bf16.msra.mxu0 %v2414
        %3030 = vmatprep.subr.bf16.mxu0 %v2419
        %3031 = vmatpush1.bf16.msra.mxu0 %v2418
        %3032 = vmatprep.subr.bf16.mxu0 %v2423
        %3033 = vmatpush1.bf16.msra.mxu0 %v2422
        %3034 = vmatprep.subr.bf16.mxu0 %v2427
        %3035 = vmatpush1.bf16.msra.mxu0 %v2426
        %3036 = vmatprep.subr.bf16.mxu0 %v2431
        %3037 = vmatpush1.bf16.msra.mxu0 %v2430
        %3038 = vmatprep.subr.bf16.mxu0 %v2435
        %3039 = vmatpush1.bf16.msra.mxu0 %v2434
        %3040 = vmatprep.subr.bf16.mxu0 %v2439
        %3041 = vmatpush1.bf16.msra.mxu0 %v2438
        %3042 = vmatprep.subr.bf16.mxu0 %v2443
        %3043 = vmatpush1.bf16.msra.mxu0 %v2442
        %3044 = vmatprep.subr.bf16.mxu0 %v2447
        %3045 = vmatpush1.bf16.msra.mxu0 %v2446
        %3046 = vmatprep.mubr.bf16.mxu0 %v1207
        %3047 = vmatmul.mubr.bf16.gmra.mrb[0].mxu0 %v1206
        %v3048 = vpop.f32.mrb[0].mxu0
        %v3049 = vadd.f32 %v3008, %v3048
        %v3050 = vpop.f32.mrb[0].mxu0
        %v3051 = vadd.f32 %v3010, %v3050
        %v3052 = vpop.f32.mrb[0].mxu0
        %v3053 = vpop.f32.mrb[0].mxu0
        %3054 = vdwg.mxu0
        %3055 = vmatprep.subr.bf16.mxu0 %v2451
        %3056 = vmatpush1.bf16.msra.mxu0 %v2450
        %3057 = vmatprep.subr.bf16.mxu0 %v2455
        %3058 = vmatpush1.bf16.msra.mxu0 %v2454
        %3059 = vmatprep.subr.bf16.mxu0 %v2459
        %3060 = vmatpush1.bf16.msra.mxu0 %v2458
        %3061 = vmatprep.subr.bf16.mxu0 %v2463
        %3062 = vmatpush1.bf16.msra.mxu0 %v2462
        %3063 = vmatprep.subr.bf16.mxu0 %v2467
        %3064 = vmatpush1.bf16.msra.mxu0 %v2466
        %3065 = vmatprep.subr.bf16.mxu0 %v2471
        %3066 = vmatpush1.bf16.msra.mxu0 %v2470
        %3067 = vmatprep.subr.bf16.mxu0 %v2475
        %3068 = vmatpush1.bf16.msra.mxu0 %v2474
        %3069 = vmatprep.subr.bf16.mxu0 %v2479
        %3070 = vmatpush1.bf16.msra.mxu0 %v2478
        %3071 = vmatprep.subr.bf16.mxu0 %v2483
        %3072 = vmatpush1.bf16.msra.mxu0 %v2482
        %3073 = vmatprep.subr.bf16.mxu0 %v2487
        %3074 = vmatpush1.bf16.msra.mxu0 %v2486
        %3075 = vmatprep.subr.bf16.mxu0 %v2491
        %3076 = vmatpush1.bf16.msra.mxu0 %v2490
        %3077 = vmatprep.subr.bf16.mxu0 %v2495
        %3078 = vmatpush1.bf16.msra.mxu0 %v2494
        %3079 = vmatprep.subr.bf16.mxu0 %v2499
        %3080 = vmatpush1.bf16.msra.mxu0 %v2498
        %3081 = vmatprep.subr.bf16.mxu0 %v2503
        %3082 = vmatpush1.bf16.msra.mxu0 %v2502
        %3083 = vmatprep.subr.bf16.mxu0 %v2507
        %3084 = vmatpush1.bf16.msra.mxu0 %v2506
        %3085 = vmatprep.subr.bf16.mxu0 %v2511
        %3086 = vmatpush1.bf16.msra.mxu0 %v2510
        %3087 = vmatprep.mubr.bf16.mxu0 %v1209
        %3088 = vmatmul.mubr.bf16.gmra.mrb[0].mxu0 %v1208
        %v3089 = vpop.f32.mrb[0].mxu0
        %v3090 = vadd.f32 %v3049, %v3089
        %v3091 = vpop.f32.mrb[0].mxu0
        %v3092 = vadd.f32 %v3051, %v3091
        %v3093 = vpop.f32.mrb[0].mxu0
        %v3094 = vpop.f32.mrb[0].mxu0
        %3095 = vdwg.mxu0
        %v3096 = vmax.f32 %v2926, 0.0
        %v3097 = vmax.f32 %v2928, 0.0
        %v3098 = vmax.f32 %v3090, 0.0
        %v3099 = vmax.f32 %v3092, 0.0
        %v3100 = vpack.c.bf16 %v3096, %v3096
        %v3101 = vpack.c.bf16 %v3097, %v3097
        %v3102 = vpack.c.bf16 %v3098, %v3098
        %v3103 = vpack.c.bf16 %v3099, %v3099
        %v3104 = vld [vmem:[#allocation12] sm:$0xf]
        %v3105 = vld [vmem:[#allocation12 + $0x4] sm:$0xf]
        %v3106 = vld [vmem:[#allocation12 + $0x8] sm:$0xf]
        %v3107 = vld [vmem:[#allocation12 + $0xc] sm:$0xf]
        %v3108 = vld [vmem:[#allocation12 + $0x10] sm:$0xf]
        %v3109 = vld [vmem:[#allocation12 + $0x14] sm:$0xf]
        %v3110 = vld [vmem:[#allocation12 + $0x18] sm:$0xf]
        %v3111 = vld [vmem:[#allocation12 + $0x1c] sm:$0xf]
        %v3112 = vld [vmem:[#allocation12 + $0x20] sm:$0xf]
        %v3113 = vld [vmem:[#allocation12 + $0x24] sm:$0xf]
        %v3114 = vld [vmem:[#allocation12 + $0x28] sm:$0xf]
        %v3115 = vld [vmem:[#allocation12 + $0x2c] sm:$0xf]
        %v3116 = vld [vmem:[#allocation12 + $0x30] sm:$0xf]
        %v3117 = vld [vmem:[#allocation12 + $0x34] sm:$0xf]
        %v3118 = vld [vmem:[#allocation12 + $0x38] sm:$0xf]
        %v3119 = vld [vmem:[#allocation12 + $0x3c] sm:$0xf]
        %v3120 = vld [vmem:[#allocation12 + $0x40] sm:$0xf]
        %v3121 = vld [vmem:[#allocation12 + $0x44] sm:$0xf]
        %v3122 = vld [vmem:[#allocation12 + $0x48] sm:$0xf]
        %v3123 = vld [vmem:[#allocation12 + $0x4c] sm:$0xf]
        %v3124 = vld [vmem:[#allocation12 + $0x50] sm:$0xf]
        %v3125 = vld [vmem:[#allocation12 + $0x54] sm:$0xf]
        %v3126 = vld [vmem:[#allocation12 + $0x58] sm:$0xf]
        %v3127 = vld [vmem:[#allocation12 + $0x5c] sm:$0xf]
        %v3128 = vld [vmem:[#allocation12 + $0x60] sm:$0xf]
        %v3129 = vld [vmem:[#allocation12 + $0x64] sm:$0xf]
        %v3130 = vld [vmem:[#allocation12 + $0x68] sm:$0xf]
        %v3131 = vld [vmem:[#allocation12 + $0x6c] sm:$0xf]
        %v3132 = vld [vmem:[#allocation12 + $0x70] sm:$0xf]
        %v3133 = vld [vmem:[#allocation12 + $0x74] sm:$0xf]
        %v3134 = vld [vmem:[#allocation12 + $0x78] sm:$0xf]
        %v3135 = vld [vmem:[#allocation12 + $0x7c] sm:$0xf]
        %v3136 = vld [vmem:[#allocation12 + $0x80] sm:$0xf]
        %v3137 = vld [vmem:[#allocation12 + $0x84] sm:$0xf]
        %v3138 = vld [vmem:[#allocation12 + $0x88] sm:$0xf]
        %v3139 = vld [vmem:[#allocation12 + $0x8c] sm:$0xf]
        %v3140 = vld [vmem:[#allocation12 + $0x90] sm:$0xf]
        %v3141 = vld [vmem:[#allocation12 + $0x94] sm:$0xf]
        %v3142 = vld [vmem:[#allocation12 + $0x98] sm:$0xf]
        %v3143 = vld [vmem:[#allocation12 + $0x9c] sm:$0xf]
        %v3144 = vld [vmem:[#allocation12 + $0xa0] sm:$0xf]
        %v3145 = vld [vmem:[#allocation12 + $0xa4] sm:$0xf]
        %v3146 = vld [vmem:[#allocation12 + $0xa8] sm:$0xf]
        %v3147 = vld [vmem:[#allocation12 + $0xac] sm:$0xf]
        %v3148 = vld [vmem:[#allocation12 + $0xb0] sm:$0xf]
        %v3149 = vld [vmem:[#allocation12 + $0xb4] sm:$0xf]
        %v3150 = vld [vmem:[#allocation12 + $0xb8] sm:$0xf]
        %v3151 = vld [vmem:[#allocation12 + $0xbc] sm:$0xf]
        %v3152 = vld [vmem:[#allocation12 + $0xc0] sm:$0xf]
        %v3153 = vld [vmem:[#allocation12 + $0xc4] sm:$0xf]
        %v3154 = vld [vmem:[#allocation12 + $0xc8] sm:$0xf]
        %v3155 = vld [vmem:[#allocation12 + $0xcc] sm:$0xf]
        %v3156 = vld [vmem:[#allocation12 + $0xd0] sm:$0xf]
        %v3157 = vld [vmem:[#allocation12 + $0xd4] sm:$0xf]
        %v3158 = vld [vmem:[#allocation12 + $0xd8] sm:$0xf]
        %v3159 = vld [vmem:[#allocation12 + $0xdc] sm:$0xf]
        %v3160 = vld [vmem:[#allocation12 + $0xe0] sm:$0xf]
        %v3161 = vld [vmem:[#allocation12 + $0xe4] sm:$0xf]
        %v3162 = vld [vmem:[#allocation12 + $0xe8] sm:$0xf]
        %v3163 = vld [vmem:[#allocation12 + $0xec] sm:$0xf]
        %v3164 = vld [vmem:[#allocation12 + $0xf0] sm:$0xf]
        %v3165 = vld [vmem:[#allocation12 + $0xf4] sm:$0xf]
        %v3166 = vld [vmem:[#allocation12 + $0xf8] sm:$0xf]
        %v3167 = vld [vmem:[#allocation12 + $0xfc] sm:$0xf]
        %v3168 = vld [vmem:[#allocation14] sm:$0x1]
        %v3170 = vlaneseq
        %v3171 = vshrl.u32 %v3170, 7
        %v3172 = vsub.s32 0, %v3171
        %v3173 = vrot.slane %v3168, %v3172
        %v3239 = vunpack.c.l.b16 %v3104
        %v3240 = vunpack.c.l.b16 %v3105
        %v3241 = vunpack.c.l.b16 %v3106
        %v3242 = vunpack.c.l.b16 %v3107
        %v3243 = vunpack.c.l.b16 %v3108
        %v3244 = vunpack.c.l.b16 %v3109
        %v3245 = vunpack.c.l.b16 %v3110
        %v3246 = vunpack.c.l.b16 %v3111
        %v3247 = vunpack.c.l.b16 %v3112
        %v3248 = vunpack.c.l.b16 %v3113
        %v3249 = vunpack.c.l.b16 %v3114
        %v3250 = vunpack.c.l.b16 %v3115
        %v3251 = vunpack.c.l.b16 %v3116
        %v3252 = vunpack.c.l.b16 %v3117
        %v3253 = vunpack.c.l.b16 %v3118
        %v3254 = vunpack.c.l.b16 %v3119
        %v3255 = vunpack.c.l.b16 %v3120
        %v3256 = vunpack.c.l.b16 %v3121
        %v3257 = vunpack.c.l.b16 %v3122
        %v3258 = vunpack.c.l.b16 %v3123
        %v3259 = vunpack.c.l.b16 %v3124
        %v3260 = vunpack.c.l.b16 %v3125
        %v3261 = vunpack.c.l.b16 %v3126
        %v3262 = vunpack.c.l.b16 %v3127
        %v3263 = vunpack.c.l.b16 %v3128
        %v3264 = vunpack.c.l.b16 %v3129
        %v3265 = vunpack.c.l.b16 %v3130
        %v3266 = vunpack.c.l.b16 %v3131
        %v3267 = vunpack.c.l.b16 %v3132
        %v3268 = vunpack.c.l.b16 %v3133
        %v3269 = vunpack.c.l.b16 %v3134
        %v3270 = vunpack.c.l.b16 %v3135
        %v3271 = vunpack.c.l.b16 %v3136
        %v3272 = vunpack.c.l.b16 %v3137
        %v3273 = vunpack.c.l.b16 %v3138
        %v3274 = vunpack.c.l.b16 %v3139
        %v3275 = vunpack.c.l.b16 %v3140
        %v3276 = vunpack.c.l.b16 %v3141
        %v3277 = vunpack.c.l.b16 %v3142
        %v3278 = vunpack.c.l.b16 %v3143
        %v3279 = vunpack.c.l.b16 %v3144
        %v3280 = vunpack.c.l.b16 %v3145
        %v3281 = vunpack.c.l.b16 %v3146
        %v3282 = vunpack.c.l.b16 %v3147
        %v3283 = vunpack.c.l.b16 %v3148
        %v3284 = vunpack.c.l.b16 %v3149
        %v3285 = vunpack.c.l.b16 %v3150
        %v3286 = vunpack.c.l.b16 %v3151
        %v3287 = vunpack.c.l.b16 %v3152
        %v3288 = vunpack.c.l.b16 %v3153
        %v3289 = vunpack.c.l.b16 %v3154
        %v3290 = vunpack.c.l.b16 %v3155
        %v3291 = vunpack.c.l.b16 %v3156
        %v3292 = vunpack.c.l.b16 %v3157
        %v3293 = vunpack.c.l.b16 %v3158
        %v3294 = vunpack.c.l.b16 %v3159
        %v3295 = vunpack.c.l.b16 %v3160
        %v3296 = vunpack.c.l.b16 %v3161
        %v3297 = vunpack.c.l.b16 %v3162
        %v3298 = vunpack.c.l.b16 %v3163
        %v3299 = vunpack.c.l.b16 %v3164
        %v3300 = vunpack.c.l.b16 %v3165
        %v3301 = vunpack.c.l.b16 %v3166
        %v3302 = vunpack.c.l.b16 %v3167
        %v3303 = vpack.c.b16 %v3240, %v3239
        %v3304 = vpack.c.b16 %v3242, %v3241
        %v3305 = vpack.c.b16 %v3244, %v3243
        %v3306 = vpack.c.b16 %v3246, %v3245
        %v3307 = vpack.c.b16 %v3248, %v3247
        %v3308 = vpack.c.b16 %v3250, %v3249
        %v3309 = vpack.c.b16 %v3252, %v3251
        %v3310 = vpack.c.b16 %v3254, %v3253
        %v3311 = vpack.c.b16 %v3256, %v3255
        %v3312 = vpack.c.b16 %v3258, %v3257
        %v3313 = vpack.c.b16 %v3260, %v3259
        %v3314 = vpack.c.b16 %v3262, %v3261
        %v3315 = vpack.c.b16 %v3264, %v3263
        %v3316 = vpack.c.b16 %v3266, %v3265
        %v3317 = vpack.c.b16 %v3268, %v3267
        %v3318 = vpack.c.b16 %v3270, %v3269
        %v3319 = vpack.c.b16 %v3272, %v3271
        %v3320 = vpack.c.b16 %v3274, %v3273
        %v3321 = vpack.c.b16 %v3276, %v3275
        %v3322 = vpack.c.b16 %v3278, %v3277
        %v3323 = vpack.c.b16 %v3280, %v3279
        %v3324 = vpack.c.b16 %v3282, %v3281
        %v3325 = vpack.c.b16 %v3284, %v3283
        %v3326 = vpack.c.b16 %v3286, %v3285
        %v3327 = vpack.c.b16 %v3288, %v3287
        %v3328 = vpack.c.b16 %v3290, %v3289
        %v3329 = vpack.c.b16 %v3292, %v3291
        %v3330 = vpack.c.b16 %v3294, %v3293
        %v3331 = vpack.c.b16 %v3296, %v3295
        %v3332 = vpack.c.b16 %v3298, %v3297
        %v3333 = vpack.c.b16 %v3300, %v3299
        %v3334 = vpack.c.b16 %v3302, %v3301
        %3367 = vmatprep.subr.bf16.mxu0 0
        %3368 = vmatpush1.bf16.msra.mxu0 %v3303
        %3369 = vmatprep.subr.bf16.mxu0 0
        %3370 = vmatpush1.bf16.msra.mxu0 %v3304
        %3371 = vmatprep.subr.bf16.mxu0 0
        %3372 = vmatpush1.bf16.msra.mxu0 %v3305
        %3373 = vmatprep.subr.bf16.mxu0 0
        %3374 = vmatpush1.bf16.msra.mxu0 %v3306
        %3375 = vmatprep.subr.bf16.mxu0 0
        %3376 = vmatpush1.bf16.msra.mxu0 %v3307
        %3377 = vmatprep.subr.bf16.mxu0 0
        %3378 = vmatpush1.bf16.msra.mxu0 %v3308
        %3379 = vmatprep.subr.bf16.mxu0 0
        %3380 = vmatpush1.bf16.msra.mxu0 %v3309
        %3381 = vmatprep.subr.bf16.mxu0 0
        %3382 = vmatpush1.bf16.msra.mxu0 %v3310
        %3383 = vmatprep.subr.bf16.mxu0 0
        %3384 = vmatpush1.bf16.msra.mxu0 %v3311
        %3385 = vmatprep.subr.bf16.mxu0 0
        %3386 = vmatpush1.bf16.msra.mxu0 %v3312
        %3387 = vmatprep.subr.bf16.mxu0 0
        %3388 = vmatpush1.bf16.msra.mxu0 %v3313
        %3389 = vmatprep.subr.bf16.mxu0 0
        %3390 = vmatpush1.bf16.msra.mxu0 %v3314
        %3391 = vmatprep.subr.bf16.mxu0 0
        %3392 = vmatpush1.bf16.msra.mxu0 %v3315
        %3393 = vmatprep.subr.bf16.mxu0 0
        %3394 = vmatpush1.bf16.msra.mxu0 %v3316
        %3395 = vmatprep.subr.bf16.mxu0 0
        %3396 = vmatpush1.bf16.msra.mxu0 %v3317
        %3397 = vmatprep.subr.bf16.mxu0 0
        %3398 = vmatpush1.bf16.msra.mxu0 %v3318
        %3399 = vmatprep.mubr.bf16.mxu0 %v3101
        %3400 = vmatmul.mubr.bf16.gmra.mrb[0].mxu0 %v3100
        %v3401 = vpop.f32.mrb[0].mxu0
        %v3402 = vadd.f32 %v3173, %v3401
        %v3403 = vpop.f32.mrb[0].mxu0
        %v3404 = vpop.f32.mrb[0].mxu0
        %v3405 = vpop.f32.mrb[0].mxu0
        %3406 = vdwg.mxu0
        %3407 = vmatprep.subr.bf16.mxu0 0
        %3408 = vmatpush1.bf16.msra.mxu0 %v3319
        %3409 = vmatprep.subr.bf16.mxu0 0
        %3410 = vmatpush1.bf16.msra.mxu0 %v3320
        %3411 = vmatprep.subr.bf16.mxu0 0
        %3412 = vmatpush1.bf16.msra.mxu0 %v3321
        %3413 = vmatprep.subr.bf16.mxu0 0
        %3414 = vmatpush1.bf16.msra.mxu0 %v3322
        %3415 = vmatprep.subr.bf16.mxu0 0
        %3416 = vmatpush1.bf16.msra.mxu0 %v3323
        %3417 = vmatprep.subr.bf16.mxu0 0
        %3418 = vmatpush1.bf16.msra.mxu0 %v3324
        %3419 = vmatprep.subr.bf16.mxu0 0
        %3420 = vmatpush1.bf16.msra.mxu0 %v3325
        %3421 = vmatprep.subr.bf16.mxu0 0
        %3422 = vmatpush1.bf16.msra.mxu0 %v3326
        %3423 = vmatprep.subr.bf16.mxu0 0
        %3424 = vmatpush1.bf16.msra.mxu0 %v3327
        %3425 = vmatprep.subr.bf16.mxu0 0
        %3426 = vmatpush1.bf16.msra.mxu0 %v3328
        %3427 = vmatprep.subr.bf16.mxu0 0
        %3428 = vmatpush1.bf16.msra.mxu0 %v3329
        %3429 = vmatprep.subr.bf16.mxu0 0
        %3430 = vmatpush1.bf16.msra.mxu0 %v3330
        %3431 = vmatprep.subr.bf16.mxu0 0
        %3432 = vmatpush1.bf16.msra.mxu0 %v3331
        %3433 = vmatprep.subr.bf16.mxu0 0
        %3434 = vmatpush1.bf16.msra.mxu0 %v3332
        %3435 = vmatprep.subr.bf16.mxu0 0
        %3436 = vmatpush1.bf16.msra.mxu0 %v3333
        %3437 = vmatprep.subr.bf16.mxu0 0
        %3438 = vmatpush1.bf16.msra.mxu0 %v3334
        %3439 = vmatprep.mubr.bf16.mxu0 %v3103
        %3440 = vmatmul.mubr.bf16.gmra.mrb[0].mxu0 %v3102
        %v3441 = vpop.f32.mrb[0].mxu0
        %v3442 = vadd.f32 %v3402, %v3441
        %v3443 = vpop.f32.mrb[0].mxu0
        %v3444 = vpop.f32.mrb[0].mxu0
        %v3445 = vpop.f32.mrb[0].mxu0
        %3446 = vdwg.mxu0
        %v3447 = vmax.f32 %v3442, 0.0
        %v3448 = vpack.c.bf16 %v3447, %v3447
        %v3449 = vld [vmem:[#allocation15] sm:$0xff]
        %v3450 = vld [vmem:[#allocation15 + $0x8] sm:$0xff]
        %v3451 = vld [vmem:[#allocation15 + $0x10] sm:$0xff]
        %v3452 = vld [vmem:[#allocation15 + $0x18] sm:$0xff]
        %v3453 = vld [vmem:[#allocation15 + $0x20] sm:$0xff]
        %v3454 = vld [vmem:[#allocation15 + $0x28] sm:$0xff]
        %v3455 = vld [vmem:[#allocation15 + $0x30] sm:$0xff]
        %v3456 = vld [vmem:[#allocation15 + $0x38] sm:$0xff]
        %v3457 = vld [vmem:[#allocation17] sm:$0xff]
        %v3459 = vlaneseq
        %v3460 = vshrl.u32 %v3459, 7
        %v3461 = vsub.s32 0, %v3460
        %v3462 = vrot.slane %v3457, %v3461
        %v3463 = vlaneseq
        %v3464 = vshrl.u32 %v3463, 7
        %v3465 = vsub.s32 1, %v3464
        %v3466 = vrot.slane %v3457, %v3465
        %v3467 = vlaneseq
        %v3468 = vshrl.u32 %v3467, 7
        %v3469 = vsub.s32 2, %v3468
        %v3470 = vrot.slane %v3457, %v3469
        %v3471 = vlaneseq
        %v3472 = vshrl.u32 %v3471, 7
        %v3473 = vsub.s32 3, %v3472
        %v3474 = vrot.slane %v3457, %v3473
        %v3475 = vlaneseq
        %v3476 = vshrl.u32 %v3475, 7
        %v3477 = vsub.s32 4, %v3476
        %v3478 = vrot.slane %v3457, %v3477
        %v3479 = vlaneseq
        %v3480 = vshrl.u32 %v3479, 7
        %v3481 = vsub.s32 5, %v3480
        %v3482 = vrot.slane %v3457, %v3481
        %v3483 = vlaneseq
        %v3484 = vshrl.u32 %v3483, 7
        %v3485 = vsub.s32 6, %v3484
        %v3486 = vrot.slane %v3457, %v3485
        %v3487 = vlaneseq
        %v3488 = vshrl.u32 %v3487, 7
        %v3489 = vsub.s32 7, %v3488
        %v3490 = vrot.slane %v3457, %v3489
        %v3507 = vunpack.c.l.b16 %v3449
        %v3508 = vunpack.c.h.b16 %v3449
        %v3509 = vunpack.c.l.b16 %v3450
        %v3510 = vunpack.c.h.b16 %v3450
        %v3511 = vunpack.c.l.b16 %v3451
        %v3512 = vunpack.c.h.b16 %v3451
        %v3513 = vunpack.c.l.b16 %v3452
        %v3514 = vunpack.c.h.b16 %v3452
        %v3515 = vunpack.c.l.b16 %v3453
        %v3516 = vunpack.c.h.b16 %v3453
        %v3517 = vunpack.c.l.b16 %v3454
        %v3518 = vunpack.c.h.b16 %v3454
        %v3519 = vunpack.c.l.b16 %v3455
        %v3520 = vunpack.c.h.b16 %v3455
        %v3521 = vunpack.c.l.b16 %v3456
        %v3522 = vunpack.c.h.b16 %v3456
        %v3523 = vpack.c.b16 %v3515, %v3507
        %v3524 = vpack.c.b16 %v3516, %v3508
        %v3525 = vpack.c.b16 %v3517, %v3509
        %v3526 = vpack.c.b16 %v3518, %v3510
        %v3527 = vpack.c.b16 %v3519, %v3511
        %v3528 = vpack.c.b16 %v3520, %v3512
        %v3529 = vpack.c.b16 %v3521, %v3513
        %v3530 = vpack.c.b16 %v3522, %v3514
        %v3540 = vsel %vm1026, %v935, 0
        %3542 = vmatprep.subr.bf16.mxu0 %v3524
        %3543 = vmatpush1.bf16.msra.mxu0 %v3523
        %3544 = vmatprep.subr.bf16.mxu0 0
        %3545 = vmatpush1.bf16.msra.mxu0 0
        %3546 = vmatprep.subr.bf16.mxu0 0
        %3547 = vmatpush1.bf16.msra.mxu0 0
        %3548 = vmatprep.subr.bf16.mxu0 0
        %3549 = vmatpush1.bf16.msra.mxu0 0
        %3550 = vmatprep.subr.bf16.mxu0 0
        %3551 = vmatpush1.bf16.msra.mxu0 0
        %3552 = vmatprep.subr.bf16.mxu0 0
        %3553 = vmatpush1.bf16.msra.mxu0 0
        %3554 = vmatprep.subr.bf16.mxu0 0
        %3555 = vmatpush1.bf16.msra.mxu0 0
        %3556 = vmatprep.subr.bf16.mxu0 0
        %3557 = vmatpush1.bf16.msra.mxu0 0
        %3558 = vmatprep.subr.bf16.mxu0 0
        %3559 = vmatpush1.bf16.msra.mxu0 0
        %3560 = vmatprep.subr.bf16.mxu0 0
        %3561 = vmatpush1.bf16.msra.mxu0 0
        %3562 = vmatprep.subr.bf16.mxu0 0
        %3563 = vmatpush1.bf16.msra.mxu0 0
        %3564 = vmatprep.subr.bf16.mxu0 0
        %3565 = vmatpush1.bf16.msra.mxu0 0
        %3566 = vmatprep.subr.bf16.mxu0 0
        %3567 = vmatpush1.bf16.msra.mxu0 0
        %3568 = vmatprep.subr.bf16.mxu0 0
        %3569 = vmatpush1.bf16.msra.mxu0 0
        %3570 = vmatprep.subr.bf16.mxu0 0
        %3571 = vmatpush1.bf16.msra.mxu0 0
        %3572 = vmatprep.subr.bf16.mxu0 0
        %3573 = vmatpush1.bf16.msra.mxu0 0
        %3574 = vmatprep.mubr.bf16.mxu0 0
        %3575 = vmatmul.mubr.bf16.gmra.mrb[0].mxu0 %v3540
        %v3576 = vpop.f32.mrb[0].mxu0
        %v3577 = vadd.f32 %v3462, %v3576
        %v3578 = vpop.f32.mrb[0].mxu0
        %v3579 = vadd.f32 %v3466, %v3578
        %v3580 = vpop.f32.mrb[0].mxu0
        %v3581 = vpop.f32.mrb[0].mxu0
        %3582 = vdwg.mxu0
        %3583 = vmatprep.subr.bf16.mxu0 %v3526
        %3584 = vmatpush1.bf16.msra.mxu0 %v3525
        %3585 = vmatprep.subr.bf16.mxu0 0
        %3586 = vmatpush1.bf16.msra.mxu0 0
        %3587 = vmatprep.subr.bf16.mxu0 0
        %3588 = vmatpush1.bf16.msra.mxu0 0
        %3589 = vmatprep.subr.bf16.mxu0 0
        %3590 = vmatpush1.bf16.msra.mxu0 0
        %3591 = vmatprep.subr.bf16.mxu0 0
        %3592 = vmatpush1.bf16.msra.mxu0 0
        %3593 = vmatprep.subr.bf16.mxu0 0
        %3594 = vmatpush1.bf16.msra.mxu0 0
        %3595 = vmatprep.subr.bf16.mxu0 0
        %3596 = vmatpush1.bf16.msra.mxu0 0
        %3597 = vmatprep.subr.bf16.mxu0 0
        %3598 = vmatpush1.bf16.msra.mxu0 0
        %3599 = vmatprep.subr.bf16.mxu0 0
        %3600 = vmatpush1.bf16.msra.mxu0 0
        %3601 = vmatprep.subr.bf16.mxu0 0
        %3602 = vmatpush1.bf16.msra.mxu0 0
        %3603 = vmatprep.subr.bf16.mxu0 0
        %3604 = vmatpush1.bf16.msra.mxu0 0
        %3605 = vmatprep.subr.bf16.mxu0 0
        %3606 = vmatpush1.bf16.msra.mxu0 0
        %3607 = vmatprep.subr.bf16.mxu0 0
        %3608 = vmatpush1.bf16.msra.mxu0 0
        %3609 = vmatprep.subr.bf16.mxu0 0
        %3610 = vmatpush1.bf16.msra.mxu0 0
        %3611 = vmatprep.subr.bf16.mxu0 0
        %3612 = vmatpush1.bf16.msra.mxu0 0
        %3613 = vmatprep.subr.bf16.mxu0 0
        %3614 = vmatpush1.bf16.msra.mxu0 0
        %3615 = vmatprep.mubr.bf16.mxu0 0
        %3616 = vmatmul.mubr.bf16.gmra.mrb[0].mxu0 %v3540
        %v3617 = vpop.f32.mrb[0].mxu0
        %v3618 = vadd.f32 %v3470, %v3617
        %v3619 = vpop.f32.mrb[0].mxu0
        %v3620 = vadd.f32 %v3474, %v3619
        %v3621 = vpop.f32.mrb[0].mxu0
        %v3622 = vpop.f32.mrb[0].mxu0
        %3623 = vdwg.mxu0
        %3624 = vmatprep.subr.bf16.mxu0 %v3528
        %3625 = vmatpush1.bf16.msra.mxu0 %v3527
        %3626 = vmatprep.subr.bf16.mxu0 0
        %3627 = vmatpush1.bf16.msra.mxu0 0
        %3628 = vmatprep.subr.bf16.mxu0 0
        %3629 = vmatpush1.bf16.msra.mxu0 0
        %3630 = vmatprep.subr.bf16.mxu0 0
        %3631 = vmatpush1.bf16.msra.mxu0 0
        %3632 = vmatprep.subr.bf16.mxu0 0
        %3633 = vmatpush1.bf16.msra.mxu0 0
        %3634 = vmatprep.subr.bf16.mxu0 0
        %3635 = vmatpush1.bf16.msra.mxu0 0
        %3636 = vmatprep.subr.bf16.mxu0 0
        %3637 = vmatpush1.bf16.msra.mxu0 0
        %3638 = vmatprep.subr.bf16.mxu0 0
        %3639 = vmatpush1.bf16.msra.mxu0 0
        %3640 = vmatprep.subr.bf16.mxu0 0
        %3641 = vmatpush1.bf16.msra.mxu0 0
        %3642 = vmatprep.subr.bf16.mxu0 0
        %3643 = vmatpush1.bf16.msra.mxu0 0
        %3644 = vmatprep.subr.bf16.mxu0 0
        %3645 = vmatpush1.bf16.msra.mxu0 0
        %3646 = vmatprep.subr.bf16.mxu0 0
        %3647 = vmatpush1.bf16.msra.mxu0 0
        %3648 = vmatprep.subr.bf16.mxu0 0
        %3649 = vmatpush1.bf16.msra.mxu0 0
        %3650 = vmatprep.subr.bf16.mxu0 0
        %3651 = vmatpush1.bf16.msra.mxu0 0
        %3652 = vmatprep.subr.bf16.mxu0 0
        %3653 = vmatpush1.bf16.msra.mxu0 0
        %3654 = vmatprep.subr.bf16.mxu0 0
        %3655 = vmatpush1.bf16.msra.mxu0 0
        %3656 = vmatprep.mubr.bf16.mxu0 0
        %3657 = vmatmul.mubr.bf16.gmra.mrb[0].mxu0 %v3540
        %v3658 = vpop.f32.mrb[0].mxu0
        %v3659 = vadd.f32 %v3478, %v3658
        %v3660 = vpop.f32.mrb[0].mxu0
        %v3661 = vadd.f32 %v3482, %v3660
        %v3662 = vpop.f32.mrb[0].mxu0
        %v3663 = vpop.f32.mrb[0].mxu0
        %3664 = vdwg.mxu0
        %3665 = vmatprep.subr.bf16.mxu0 %v3530
        %3666 = vmatpush1.bf16.msra.mxu0 %v3529
        %3667 = vmatprep.subr.bf16.mxu0 0
        %3668 = vmatpush1.bf16.msra.mxu0 0
        %3669 = vmatprep.subr.bf16.mxu0 0
        %3670 = vmatpush1.bf16.msra.mxu0 0
        %3671 = vmatprep.subr.bf16.mxu0 0
        %3672 = vmatpush1.bf16.msra.mxu0 0
        %3673 = vmatprep.subr.bf16.mxu0 0
        %3674 = vmatpush1.bf16.msra.mxu0 0
        %3675 = vmatprep.subr.bf16.mxu0 0
        %3676 = vmatpush1.bf16.msra.mxu0 0
        %3677 = vmatprep.subr.bf16.mxu0 0
        %3678 = vmatpush1.bf16.msra.mxu0 0
        %3679 = vmatprep.subr.bf16.mxu0 0
        %3680 = vmatpush1.bf16.msra.mxu0 0
        %3681 = vmatprep.subr.bf16.mxu0 0
        %3682 = vmatpush1.bf16.msra.mxu0 0
        %3683 = vmatprep.subr.bf16.mxu0 0
        %3684 = vmatpush1.bf16.msra.mxu0 0
        %3685 = vmatprep.subr.bf16.mxu0 0
        %3686 = vmatpush1.bf16.msra.mxu0 0
        %3687 = vmatprep.subr.bf16.mxu0 0
        %3688 = vmatpush1.bf16.msra.mxu0 0
        %3689 = vmatprep.subr.bf16.mxu0 0
        %3690 = vmatpush1.bf16.msra.mxu0 0
        %3691 = vmatprep.subr.bf16.mxu0 0
        %3692 = vmatpush1.bf16.msra.mxu0 0
        %3693 = vmatprep.subr.bf16.mxu0 0
        %3694 = vmatpush1.bf16.msra.mxu0 0
        %3695 = vmatprep.subr.bf16.mxu0 0
        %3696 = vmatpush1.bf16.msra.mxu0 0
        %3697 = vmatprep.mubr.bf16.mxu0 0
        %3698 = vmatmul.mubr.bf16.gmra.mrb[0].mxu0 %v3540
        %v3699 = vpop.f32.mrb[0].mxu0
        %v3700 = vadd.f32 %v3486, %v3699
        %v3701 = vpop.f32.mrb[0].mxu0
        %v3702 = vadd.f32 %v3490, %v3701
        %v3703 = vpop.f32.mrb[0].mxu0
        %v3704 = vpop.f32.mrb[0].mxu0
        %3705 = vdwg.mxu0
        %v3706 = vmax.f32 %v3577, 0.0
        %v3707 = vmax.f32 %v3579, 0.0
        %v3708 = vmax.f32 %v3618, 0.0
        %v3709 = vmax.f32 %v3620, 0.0
        %v3710 = vmax.f32 %v3659, 0.0
        %v3711 = vmax.f32 %v3661, 0.0
        %v3712 = vmax.f32 %v3700, 0.0
        %v3713 = vmax.f32 %v3702, 0.0
        %v3714 = vpack.c.bf16 %v3706, %v3706
        %v3715 = vpack.c.bf16 %v3707, %v3707
        %v3716 = vpack.c.bf16 %v3708, %v3708
        %v3717 = vpack.c.bf16 %v3709, %v3709
        %v3718 = vpack.c.bf16 %v3710, %v3710
        %v3719 = vpack.c.bf16 %v3711, %v3711
        %v3720 = vpack.c.bf16 %v3712, %v3712
        %v3721 = vpack.c.bf16 %v3713, %v3713
        %v3722 = vld [vmem:[#allocation18] sm:$0xff]
        %v3723 = vld [vmem:[#allocation18 + $0x8] sm:$0xff]
        %v3724 = vld [vmem:[#allocation18 + $0x10] sm:$0xff]
        %v3725 = vld [vmem:[#allocation18 + $0x18] sm:$0xff]
        %v3726 = vld [vmem:[#allocation18 + $0x20] sm:$0xff]
        %v3727 = vld [vmem:[#allocation18 + $0x28] sm:$0xff]
        %v3728 = vld [vmem:[#allocation18 + $0x30] sm:$0xff]
        %v3729 = vld [vmem:[#allocation18 + $0x38] sm:$0xff]
        %v3730 = vld [vmem:[#allocation18 + $0x40] sm:$0xff]
        %v3731 = vld [vmem:[#allocation18 + $0x48] sm:$0xff]
        %v3732 = vld [vmem:[#allocation18 + $0x50] sm:$0xff]
        %v3733 = vld [vmem:[#allocation18 + $0x58] sm:$0xff]
        %v3734 = vld [vmem:[#allocation18 + $0x60] sm:$0xff]
        %v3735 = vld [vmem:[#allocation18 + $0x68] sm:$0xff]
        %v3736 = vld [vmem:[#allocation18 + $0x70] sm:$0xff]
        %v3737 = vld [vmem:[#allocation18 + $0x78] sm:$0xff]
        %v3738 = vld [vmem:[#allocation18 + $0x80] sm:$0xff]
        %v3739 = vld [vmem:[#allocation18 + $0x88] sm:$0xff]
        %v3740 = vld [vmem:[#allocation18 + $0x90] sm:$0xff]
        %v3741 = vld [vmem:[#allocation18 + $0x98] sm:$0xff]
        %v3742 = vld [vmem:[#allocation18 + $0xa0] sm:$0xff]
        %v3743 = vld [vmem:[#allocation18 + $0xa8] sm:$0xff]
        %v3744 = vld [vmem:[#allocation18 + $0xb0] sm:$0xff]
        %v3745 = vld [vmem:[#allocation18 + $0xb8] sm:$0xff]
        %v3746 = vld [vmem:[#allocation18 + $0xc0] sm:$0xff]
        %v3747 = vld [vmem:[#allocation18 + $0xc8] sm:$0xff]
        %v3748 = vld [vmem:[#allocation18 + $0xd0] sm:$0xff]
        %v3749 = vld [vmem:[#allocation18 + $0xd8] sm:$0xff]
        %v3750 = vld [vmem:[#allocation18 + $0xe0] sm:$0xff]
        %v3751 = vld [vmem:[#allocation18 + $0xe8] sm:$0xff]
        %v3752 = vld [vmem:[#allocation18 + $0xf0] sm:$0xff]
        %v3753 = vld [vmem:[#allocation18 + $0xf8] sm:$0xff]
        %v3754 = vld [vmem:[#allocation18 + $0x100] sm:$0xff]
        %v3755 = vld [vmem:[#allocation18 + $0x108] sm:$0xff]
        %v3756 = vld [vmem:[#allocation18 + $0x110] sm:$0xff]
        %v3757 = vld [vmem:[#allocation18 + $0x118] sm:$0xff]
        %v3758 = vld [vmem:[#allocation18 + $0x120] sm:$0xff]
        %v3759 = vld [vmem:[#allocation18 + $0x128] sm:$0xff]
        %v3760 = vld [vmem:[#allocation18 + $0x130] sm:$0xff]
        %v3761 = vld [vmem:[#allocation18 + $0x138] sm:$0xff]
        %v3762 = vld [vmem:[#allocation18 + $0x140] sm:$0xff]
        %v3763 = vld [vmem:[#allocation18 + $0x148] sm:$0xff]
        %v3764 = vld [vmem:[#allocation18 + $0x150] sm:$0xff]
        %v3765 = vld [vmem:[#allocation18 + $0x158] sm:$0xff]
        %v3766 = vld [vmem:[#allocation18 + $0x160] sm:$0xff]
        %v3767 = vld [vmem:[#allocation18 + $0x168] sm:$0xff]
        %v3768 = vld [vmem:[#allocation18 + $0x170] sm:$0xff]
        %v3769 = vld [vmem:[#allocation18 + $0x178] sm:$0xff]
        %v3770 = vld [vmem:[#allocation18 + $0x180] sm:$0xff]
        %v3771 = vld [vmem:[#allocation18 + $0x188] sm:$0xff]
        %v3772 = vld [vmem:[#allocation18 + $0x190] sm:$0xff]
        %v3773 = vld [vmem:[#allocation18 + $0x198] sm:$0xff]
        %v3774 = vld [vmem:[#allocation18 + $0x1a0] sm:$0xff]
        %v3775 = vld [vmem:[#allocation18 + $0x1a8] sm:$0xff]
        %v3776 = vld [vmem:[#allocation18 + $0x1b0] sm:$0xff]
        %v3777 = vld [vmem:[#allocation18 + $0x1b8] sm:$0xff]
        %v3778 = vld [vmem:[#allocation18 + $0x1c0] sm:$0xff]
        %v3779 = vld [vmem:[#allocation18 + $0x1c8] sm:$0xff]
        %v3780 = vld [vmem:[#allocation18 + $0x1d0] sm:$0xff]
        %v3781 = vld [vmem:[#allocation18 + $0x1d8] sm:$0xff]
        %v3782 = vld [vmem:[#allocation18 + $0x1e0] sm:$0xff]
        %v3783 = vld [vmem:[#allocation18 + $0x1e8] sm:$0xff]
        %v3784 = vld [vmem:[#allocation18 + $0x1f0] sm:$0xff]
        %v3785 = vld [vmem:[#allocation18 + $0x1f8] sm:$0xff]
        %v3786 = vld [vmem:[#allocation18 + $0x200] sm:$0xff]
        %v3787 = vld [vmem:[#allocation18 + $0x208] sm:$0xff]
        %v3788 = vld [vmem:[#allocation18 + $0x210] sm:$0xff]
        %v3789 = vld [vmem:[#allocation18 + $0x218] sm:$0xff]
        %v3790 = vld [vmem:[#allocation18 + $0x220] sm:$0xff]
        %v3791 = vld [vmem:[#allocation18 + $0x228] sm:$0xff]
        %v3792 = vld [vmem:[#allocation18 + $0x230] sm:$0xff]
        %v3793 = vld [vmem:[#allocation18 + $0x238] sm:$0xff]
        %v3794 = vld [vmem:[#allocation18 + $0x240] sm:$0xff]
        %v3795 = vld [vmem:[#allocation18 + $0x248] sm:$0xff]
        %v3796 = vld [vmem:[#allocation18 + $0x250] sm:$0xff]
        %v3797 = vld [vmem:[#allocation18 + $0x258] sm:$0xff]
        %v3798 = vld [vmem:[#allocation18 + $0x260] sm:$0xff]
        %v3799 = vld [vmem:[#allocation18 + $0x268] sm:$0xff]
        %v3800 = vld [vmem:[#allocation18 + $0x270] sm:$0xff]
        %v3801 = vld [vmem:[#allocation18 + $0x278] sm:$0xff]
        %v3802 = vld [vmem:[#allocation18 + $0x280] sm:$0xff]
        %v3803 = vld [vmem:[#allocation18 + $0x288] sm:$0xff]
        %v3804 = vld [vmem:[#allocation18 + $0x290] sm:$0xff]
        %v3805 = vld [vmem:[#allocation18 + $0x298] sm:$0xff]
        %v3806 = vld [vmem:[#allocation18 + $0x2a0] sm:$0xff]
        %v3807 = vld [vmem:[#allocation18 + $0x2a8] sm:$0xff]
        %v3808 = vld [vmem:[#allocation18 + $0x2b0] sm:$0xff]
        %v3809 = vld [vmem:[#allocation18 + $0x2b8] sm:$0xff]
        %v3810 = vld [vmem:[#allocation18 + $0x2c0] sm:$0xff]
        %v3811 = vld [vmem:[#allocation18 + $0x2c8] sm:$0xff]
        %v3812 = vld [vmem:[#allocation18 + $0x2d0] sm:$0xff]
        %v3813 = vld [vmem:[#allocation18 + $0x2d8] sm:$0xff]
        %v3814 = vld [vmem:[#allocation18 + $0x2e0] sm:$0xff]
        %v3815 = vld [vmem:[#allocation18 + $0x2e8] sm:$0xff]
        %v3816 = vld [vmem:[#allocation18 + $0x2f0] sm:$0xff]
        %v3817 = vld [vmem:[#allocation18 + $0x2f8] sm:$0xff]
        %v3818 = vld [vmem:[#allocation18 + $0x300] sm:$0xff]
        %v3819 = vld [vmem:[#allocation18 + $0x308] sm:$0xff]
        %v3820 = vld [vmem:[#allocation18 + $0x310] sm:$0xff]
        %v3821 = vld [vmem:[#allocation18 + $0x318] sm:$0xff]
        %v3822 = vld [vmem:[#allocation18 + $0x320] sm:$0xff]
        %v3823 = vld [vmem:[#allocation18 + $0x328] sm:$0xff]
        %v3824 = vld [vmem:[#allocation18 + $0x330] sm:$0xff]
        %v3825 = vld [vmem:[#allocation18 + $0x338] sm:$0xff]
        %v3826 = vld [vmem:[#allocation18 + $0x340] sm:$0xff]
        %v3827 = vld [vmem:[#allocation18 + $0x348] sm:$0xff]
        %v3828 = vld [vmem:[#allocation18 + $0x350] sm:$0xff]
        %v3829 = vld [vmem:[#allocation18 + $0x358] sm:$0xff]
        %v3830 = vld [vmem:[#allocation18 + $0x360] sm:$0xff]
        %v3831 = vld [vmem:[#allocation18 + $0x368] sm:$0xff]
        %v3832 = vld [vmem:[#allocation18 + $0x370] sm:$0xff]
        %v3833 = vld [vmem:[#allocation18 + $0x378] sm:$0xff]
        %v3834 = vld [vmem:[#allocation18 + $0x380] sm:$0xff]
        %v3835 = vld [vmem:[#allocation18 + $0x388] sm:$0xff]
        %v3836 = vld [vmem:[#allocation18 + $0x390] sm:$0xff]
        %v3837 = vld [vmem:[#allocation18 + $0x398] sm:$0xff]
        %v3838 = vld [vmem:[#allocation18 + $0x3a0] sm:$0xff]
        %v3839 = vld [vmem:[#allocation18 + $0x3a8] sm:$0xff]
        %v3840 = vld [vmem:[#allocation18 + $0x3b0] sm:$0xff]
        %v3841 = vld [vmem:[#allocation18 + $0x3b8] sm:$0xff]
        %v3842 = vld [vmem:[#allocation18 + $0x3c0] sm:$0xff]
        %v3843 = vld [vmem:[#allocation18 + $0x3c8] sm:$0xff]
        %v3844 = vld [vmem:[#allocation18 + $0x3d0] sm:$0xff]
        %v3845 = vld [vmem:[#allocation18 + $0x3d8] sm:$0xff]
        %v3846 = vld [vmem:[#allocation18 + $0x3e0] sm:$0xff]
        %v3847 = vld [vmem:[#allocation18 + $0x3e8] sm:$0xff]
        %v3848 = vld [vmem:[#allocation18 + $0x3f0] sm:$0xff]
        %v3849 = vld [vmem:[#allocation18 + $0x3f8] sm:$0xff]
        %v3850 = vld [vmem:[#allocation18 + $0x400] sm:$0xff]
        %v3851 = vld [vmem:[#allocation18 + $0x408] sm:$0xff]
        %v3852 = vld [vmem:[#allocation18 + $0x410] sm:$0xff]
        %v3853 = vld [vmem:[#allocation18 + $0x418] sm:$0xff]
        %v3854 = vld [vmem:[#allocation18 + $0x420] sm:$0xff]
        %v3855 = vld [vmem:[#allocation18 + $0x428] sm:$0xff]
        %v3856 = vld [vmem:[#allocation18 + $0x430] sm:$0xff]
        %v3857 = vld [vmem:[#allocation18 + $0x438] sm:$0xff]
        %v3858 = vld [vmem:[#allocation18 + $0x440] sm:$0xff]
        %v3859 = vld [vmem:[#allocation18 + $0x448] sm:$0xff]
        %v3860 = vld [vmem:[#allocation18 + $0x450] sm:$0xff]
        %v3861 = vld [vmem:[#allocation18 + $0x458] sm:$0xff]
        %v3862 = vld [vmem:[#allocation18 + $0x460] sm:$0xff]
        %v3863 = vld [vmem:[#allocation18 + $0x468] sm:$0xff]
        %v3864 = vld [vmem:[#allocation18 + $0x470] sm:$0xff]
        %v3865 = vld [vmem:[#allocation18 + $0x478] sm:$0xff]
        %v3866 = vld [vmem:[#allocation18 + $0x480] sm:$0xff]
        %v3867 = vld [vmem:[#allocation18 + $0x488] sm:$0xff]
        %v3868 = vld [vmem:[#allocation18 + $0x490] sm:$0xff]
        %v3869 = vld [vmem:[#allocation18 + $0x498] sm:$0xff]
        %v3870 = vld [vmem:[#allocation18 + $0x4a0] sm:$0xff]
        %v3871 = vld [vmem:[#allocation18 + $0x4a8] sm:$0xff]
        %v3872 = vld [vmem:[#allocation18 + $0x4b0] sm:$0xff]
        %v3873 = vld [vmem:[#allocation18 + $0x4b8] sm:$0xff]
        %v3874 = vld [vmem:[#allocation18 + $0x4c0] sm:$0xff]
        %v3875 = vld [vmem:[#allocation18 + $0x4c8] sm:$0xff]
        %v3876 = vld [vmem:[#allocation18 + $0x4d0] sm:$0xff]
        %v3877 = vld [vmem:[#allocation18 + $0x4d8] sm:$0xff]
        %v3878 = vld [vmem:[#allocation18 + $0x4e0] sm:$0xff]
        %v3879 = vld [vmem:[#allocation18 + $0x4e8] sm:$0xff]
        %v3880 = vld [vmem:[#allocation18 + $0x4f0] sm:$0xff]
        %v3881 = vld [vmem:[#allocation18 + $0x4f8] sm:$0xff]
        %v3882 = vld [vmem:[#allocation18 + $0x500] sm:$0xff]
        %v3883 = vld [vmem:[#allocation18 + $0x508] sm:$0xff]
        %v3884 = vld [vmem:[#allocation18 + $0x510] sm:$0xff]
        %v3885 = vld [vmem:[#allocation18 + $0x518] sm:$0xff]
        %v3886 = vld [vmem:[#allocation18 + $0x520] sm:$0xff]
        %v3887 = vld [vmem:[#allocation18 + $0x528] sm:$0xff]
        %v3888 = vld [vmem:[#allocation18 + $0x530] sm:$0xff]
        %v3889 = vld [vmem:[#allocation18 + $0x538] sm:$0xff]
        %v3890 = vld [vmem:[#allocation18 + $0x540] sm:$0xff]
        %v3891 = vld [vmem:[#allocation18 + $0x548] sm:$0xff]
        %v3892 = vld [vmem:[#allocation18 + $0x550] sm:$0xff]
        %v3893 = vld [vmem:[#allocation18 + $0x558] sm:$0xff]
        %v3894 = vld [vmem:[#allocation18 + $0x560] sm:$0xff]
        %v3895 = vld [vmem:[#allocation18 + $0x568] sm:$0xff]
        %v3896 = vld [vmem:[#allocation18 + $0x570] sm:$0xff]
        %v3897 = vld [vmem:[#allocation18 + $0x578] sm:$0xff]
        %v3898 = vld [vmem:[#allocation18 + $0x580] sm:$0xff]
        %v3899 = vld [vmem:[#allocation18 + $0x588] sm:$0xff]
        %v3900 = vld [vmem:[#allocation18 + $0x590] sm:$0xff]
        %v3901 = vld [vmem:[#allocation18 + $0x598] sm:$0xff]
        %v3902 = vld [vmem:[#allocation18 + $0x5a0] sm:$0xff]
        %v3903 = vld [vmem:[#allocation18 + $0x5a8] sm:$0xff]
        %v3904 = vld [vmem:[#allocation18 + $0x5b0] sm:$0xff]
        %v3905 = vld [vmem:[#allocation18 + $0x5b8] sm:$0xff]
        %v3906 = vld [vmem:[#allocation18 + $0x5c0] sm:$0xff]
        %v3907 = vld [vmem:[#allocation18 + $0x5c8] sm:$0xff]
        %v3908 = vld [vmem:[#allocation18 + $0x5d0] sm:$0xff]
        %v3909 = vld [vmem:[#allocation18 + $0x5d8] sm:$0xff]
        %v3910 = vld [vmem:[#allocation18 + $0x5e0] sm:$0xff]
        %v3911 = vld [vmem:[#allocation18 + $0x5e8] sm:$0xff]
        %v3912 = vld [vmem:[#allocation18 + $0x5f0] sm:$0xff]
        %v3913 = vld [vmem:[#allocation18 + $0x5f8] sm:$0xff]
        %v3914 = vld [vmem:[#allocation18 + $0x600] sm:$0xff]
        %v3915 = vld [vmem:[#allocation18 + $0x608] sm:$0xff]
        %v3916 = vld [vmem:[#allocation18 + $0x610] sm:$0xff]
        %v3917 = vld [vmem:[#allocation18 + $0x618] sm:$0xff]
        %v3918 = vld [vmem:[#allocation18 + $0x620] sm:$0xff]
        %v3919 = vld [vmem:[#allocation18 + $0x628] sm:$0xff]
        %v3920 = vld [vmem:[#allocation18 + $0x630] sm:$0xff]
        %v3921 = vld [vmem:[#allocation18 + $0x638] sm:$0xff]
        %v3922 = vld [vmem:[#allocation18 + $0x640] sm:$0xff]
        %v3923 = vld [vmem:[#allocation18 + $0x648] sm:$0xff]
        %v3924 = vld [vmem:[#allocation18 + $0x650] sm:$0xff]
        %v3925 = vld [vmem:[#allocation18 + $0x658] sm:$0xff]
        %v3926 = vld [vmem:[#allocation18 + $0x660] sm:$0xff]
        %v3927 = vld [vmem:[#allocation18 + $0x668] sm:$0xff]
        %v3928 = vld [vmem:[#allocation18 + $0x670] sm:$0xff]
        %v3929 = vld [vmem:[#allocation18 + $0x678] sm:$0xff]
        %v3930 = vld [vmem:[#allocation18 + $0x680] sm:$0xff]
        %v3931 = vld [vmem:[#allocation18 + $0x688] sm:$0xff]
        %v3932 = vld [vmem:[#allocation18 + $0x690] sm:$0xff]
        %v3933 = vld [vmem:[#allocation18 + $0x698] sm:$0xff]
        %v3934 = vld [vmem:[#allocation18 + $0x6a0] sm:$0xff]
        %v3935 = vld [vmem:[#allocation18 + $0x6a8] sm:$0xff]
        %v3936 = vld [vmem:[#allocation18 + $0x6b0] sm:$0xff]
        %v3937 = vld [vmem:[#allocation18 + $0x6b8] sm:$0xff]
        %v3938 = vld [vmem:[#allocation18 + $0x6c0] sm:$0xff]
        %v3939 = vld [vmem:[#allocation18 + $0x6c8] sm:$0xff]
        %v3940 = vld [vmem:[#allocation18 + $0x6d0] sm:$0xff]
        %v3941 = vld [vmem:[#allocation18 + $0x6d8] sm:$0xff]
        %v3942 = vld [vmem:[#allocation18 + $0x6e0] sm:$0xff]
        %v3943 = vld [vmem:[#allocation18 + $0x6e8] sm:$0xff]
        %v3944 = vld [vmem:[#allocation18 + $0x6f0] sm:$0xff]
        %v3945 = vld [vmem:[#allocation18 + $0x6f8] sm:$0xff]
        %v3946 = vld [vmem:[#allocation18 + $0x700] sm:$0xff]
        %v3947 = vld [vmem:[#allocation18 + $0x708] sm:$0xff]
        %v3948 = vld [vmem:[#allocation18 + $0x710] sm:$0xff]
        %v3949 = vld [vmem:[#allocation18 + $0x718] sm:$0xff]
        %v3950 = vld [vmem:[#allocation18 + $0x720] sm:$0xff]
        %v3951 = vld [vmem:[#allocation18 + $0x728] sm:$0xff]
        %v3952 = vld [vmem:[#allocation18 + $0x730] sm:$0xff]
        %v3953 = vld [vmem:[#allocation18 + $0x738] sm:$0xff]
        %v3954 = vld [vmem:[#allocation18 + $0x740] sm:$0xff]
        %v3955 = vld [vmem:[#allocation18 + $0x748] sm:$0xff]
        %v3956 = vld [vmem:[#allocation18 + $0x750] sm:$0xff]
        %v3957 = vld [vmem:[#allocation18 + $0x758] sm:$0xff]
        %v3958 = vld [vmem:[#allocation18 + $0x760] sm:$0xff]
        %v3959 = vld [vmem:[#allocation18 + $0x768] sm:$0xff]
        %v3960 = vld [vmem:[#allocation18 + $0x770] sm:$0xff]
        %v3961 = vld [vmem:[#allocation18 + $0x778] sm:$0xff]
        %v3962 = vld [vmem:[#allocation18 + $0x780] sm:$0xff]
        %v3963 = vld [vmem:[#allocation18 + $0x788] sm:$0xff]
        %v3964 = vld [vmem:[#allocation18 + $0x790] sm:$0xff]
        %v3965 = vld [vmem:[#allocation18 + $0x798] sm:$0xff]
        %v3966 = vld [vmem:[#allocation18 + $0x7a0] sm:$0xff]
        %v3967 = vld [vmem:[#allocation18 + $0x7a8] sm:$0xff]
        %v3968 = vld [vmem:[#allocation18 + $0x7b0] sm:$0xff]
        %v3969 = vld [vmem:[#allocation18 + $0x7b8] sm:$0xff]
        %v3970 = vld [vmem:[#allocation18 + $0x7c0] sm:$0xff]
        %v3971 = vld [vmem:[#allocation18 + $0x7c8] sm:$0xff]
        %v3972 = vld [vmem:[#allocation18 + $0x7d0] sm:$0xff]
        %v3973 = vld [vmem:[#allocation18 + $0x7d8] sm:$0xff]
        %v3974 = vld [vmem:[#allocation18 + $0x7e0] sm:$0xff]
        %v3975 = vld [vmem:[#allocation18 + $0x7e8] sm:$0xff]
        %v3976 = vld [vmem:[#allocation18 + $0x7f0] sm:$0xff]
        %v3977 = vld [vmem:[#allocation18 + $0x7f8] sm:$0xff]
        %v3978 = vld [vmem:[#allocation20] sm:$0xf]
        %v3980 = vlaneseq
        %v3981 = vshrl.u32 %v3980, 7
        %v3982 = vsub.s32 0, %v3981
        %v3983 = vrot.slane %v3978, %v3982
        %v3984 = vlaneseq
        %v3985 = vshrl.u32 %v3984, 7
        %v3986 = vsub.s32 1, %v3985
        %v3987 = vrot.slane %v3978, %v3986
        %v3988 = vlaneseq
        %v3989 = vshrl.u32 %v3988, 7
        %v3990 = vsub.s32 2, %v3989
        %v3991 = vrot.slane %v3978, %v3990
        %v3992 = vlaneseq
        %v3993 = vshrl.u32 %v3992, 7
        %v3994 = vsub.s32 3, %v3993
        %v3995 = vrot.slane %v3978, %v3994
        %v4256 = vunpack.c.l.b16 %v3722
        %v4257 = vunpack.c.h.b16 %v3722
        %v4258 = vunpack.c.l.b16 %v3723
        %v4259 = vunpack.c.h.b16 %v3723
        %v4260 = vunpack.c.l.b16 %v3724
        %v4261 = vunpack.c.h.b16 %v3724
        %v4262 = vunpack.c.l.b16 %v3725
        %v4263 = vunpack.c.h.b16 %v3725
        %v4264 = vunpack.c.l.b16 %v3726
        %v4265 = vunpack.c.h.b16 %v3726
        %v4266 = vunpack.c.l.b16 %v3727
        %v4267 = vunpack.c.h.b16 %v3727
        %v4268 = vunpack.c.l.b16 %v3728
        %v4269 = vunpack.c.h.b16 %v3728
        %v4270 = vunpack.c.l.b16 %v3729
        %v4271 = vunpack.c.h.b16 %v3729
        %v4272 = vunpack.c.l.b16 %v3730
        %v4273 = vunpack.c.h.b16 %v3730
        %v4274 = vunpack.c.l.b16 %v3731
        %v4275 = vunpack.c.h.b16 %v3731
        %v4276 = vunpack.c.l.b16 %v3732
        %v4277 = vunpack.c.h.b16 %v3732
        %v4278 = vunpack.c.l.b16 %v3733
        %v4279 = vunpack.c.h.b16 %v3733
        %v4280 = vunpack.c.l.b16 %v3734
        %v4281 = vunpack.c.h.b16 %v3734
        %v4282 = vunpack.c.l.b16 %v3735
        %v4283 = vunpack.c.h.b16 %v3735
        %v4284 = vunpack.c.l.b16 %v3736
        %v4285 = vunpack.c.h.b16 %v3736
        %v4286 = vunpack.c.l.b16 %v3737
        %v4287 = vunpack.c.h.b16 %v3737
        %v4288 = vunpack.c.l.b16 %v3738
        %v4289 = vunpack.c.h.b16 %v3738
        %v4290 = vunpack.c.l.b16 %v3739
        %v4291 = vunpack.c.h.b16 %v3739
        %v4292 = vunpack.c.l.b16 %v3740
        %v4293 = vunpack.c.h.b16 %v3740
        %v4294 = vunpack.c.l.b16 %v3741
        %v4295 = vunpack.c.h.b16 %v3741
        %v4296 = vunpack.c.l.b16 %v3742
        %v4297 = vunpack.c.h.b16 %v3742
        %v4298 = vunpack.c.l.b16 %v3743
        %v4299 = vunpack.c.h.b16 %v3743
        %v4300 = vunpack.c.l.b16 %v3744
        %v4301 = vunpack.c.h.b16 %v3744
        %v4302 = vunpack.c.l.b16 %v3745
        %v4303 = vunpack.c.h.b16 %v3745
        %v4304 = vunpack.c.l.b16 %v3746
        %v4305 = vunpack.c.h.b16 %v3746
        %v4306 = vunpack.c.l.b16 %v3747
        %v4307 = vunpack.c.h.b16 %v3747
        %v4308 = vunpack.c.l.b16 %v3748
        %v4309 = vunpack.c.h.b16 %v3748
        %v4310 = vunpack.c.l.b16 %v3749
        %v4311 = vunpack.c.h.b16 %v3749
        %v4312 = vunpack.c.l.b16 %v3750
        %v4313 = vunpack.c.h.b16 %v3750
        %v4314 = vunpack.c.l.b16 %v3751
        %v4315 = vunpack.c.h.b16 %v3751
        %v4316 = vunpack.c.l.b16 %v3752
        %v4317 = vunpack.c.h.b16 %v3752
        %v4318 = vunpack.c.l.b16 %v3753
        %v4319 = vunpack.c.h.b16 %v3753
        %v4320 = vunpack.c.l.b16 %v3754
        %v4321 = vunpack.c.h.b16 %v3754
        %v4322 = vunpack.c.l.b16 %v3755
        %v4323 = vunpack.c.h.b16 %v3755
        %v4324 = vunpack.c.l.b16 %v3756
        %v4325 = vunpack.c.h.b16 %v3756
        %v4326 = vunpack.c.l.b16 %v3757
        %v4327 = vunpack.c.h.b16 %v3757
        %v4328 = vunpack.c.l.b16 %v3758
        %v4329 = vunpack.c.h.b16 %v3758
        %v4330 = vunpack.c.l.b16 %v3759
        %v4331 = vunpack.c.h.b16 %v3759
        %v4332 = vunpack.c.l.b16 %v3760
        %v4333 = vunpack.c.h.b16 %v3760
        %v4334 = vunpack.c.l.b16 %v3761
        %v4335 = vunpack.c.h.b16 %v3761
        %v4336 = vunpack.c.l.b16 %v3762
        %v4337 = vunpack.c.h.b16 %v3762
        %v4338 = vunpack.c.l.b16 %v3763
        %v4339 = vunpack.c.h.b16 %v3763
        %v4340 = vunpack.c.l.b16 %v3764
        %v4341 = vunpack.c.h.b16 %v3764
        %v4342 = vunpack.c.l.b16 %v3765
        %v4343 = vunpack.c.h.b16 %v3765
        %v4344 = vunpack.c.l.b16 %v3766
        %v4345 = vunpack.c.h.b16 %v3766
        %v4346 = vunpack.c.l.b16 %v3767
        %v4347 = vunpack.c.h.b16 %v3767
        %v4348 = vunpack.c.l.b16 %v3768
        %v4349 = vunpack.c.h.b16 %v3768
        %v4350 = vunpack.c.l.b16 %v3769
        %v4351 = vunpack.c.h.b16 %v3769
        %v4352 = vunpack.c.l.b16 %v3770
        %v4353 = vunpack.c.h.b16 %v3770
        %v4354 = vunpack.c.l.b16 %v3771
        %v4355 = vunpack.c.h.b16 %v3771
        %v4356 = vunpack.c.l.b16 %v3772
        %v4357 = vunpack.c.h.b16 %v3772
        %v4358 = vunpack.c.l.b16 %v3773
        %v4359 = vunpack.c.h.b16 %v3773
        %v4360 = vunpack.c.l.b16 %v3774
        %v4361 = vunpack.c.h.b16 %v3774
        %v4362 = vunpack.c.l.b16 %v3775
        %v4363 = vunpack.c.h.b16 %v3775
        %v4364 = vunpack.c.l.b16 %v3776
        %v4365 = vunpack.c.h.b16 %v3776
        %v4366 = vunpack.c.l.b16 %v3777
        %v4367 = vunpack.c.h.b16 %v3777
        %v4368 = vunpack.c.l.b16 %v3778
        %v4369 = vunpack.c.h.b16 %v3778
        %v4370 = vunpack.c.l.b16 %v3779
        %v4371 = vunpack.c.h.b16 %v3779
        %v4372 = vunpack.c.l.b16 %v3780
        %v4373 = vunpack.c.h.b16 %v3780
        %v4374 = vunpack.c.l.b16 %v3781
        %v4375 = vunpack.c.h.b16 %v3781
        %v4376 = vunpack.c.l.b16 %v3782
        %v4377 = vunpack.c.h.b16 %v3782
        %v4378 = vunpack.c.l.b16 %v3783
        %v4379 = vunpack.c.h.b16 %v3783
        %v4380 = vunpack.c.l.b16 %v3784
        %v4381 = vunpack.c.h.b16 %v3784
        %v4382 = vunpack.c.l.b16 %v3785
        %v4383 = vunpack.c.h.b16 %v3785
        %v4384 = vunpack.c.l.b16 %v3786
        %v4385 = vunpack.c.h.b16 %v3786
        %v4386 = vunpack.c.l.b16 %v3787
        %v4387 = vunpack.c.h.b16 %v3787
        %v4388 = vunpack.c.l.b16 %v3788
        %v4389 = vunpack.c.h.b16 %v3788
        %v4390 = vunpack.c.l.b16 %v3789
        %v4391 = vunpack.c.h.b16 %v3789
        %v4392 = vunpack.c.l.b16 %v3790
        %v4393 = vunpack.c.h.b16 %v3790
        %v4394 = vunpack.c.l.b16 %v3791
        %v4395 = vunpack.c.h.b16 %v3791
        %v4396 = vunpack.c.l.b16 %v3792
        %v4397 = vunpack.c.h.b16 %v3792
        %v4398 = vunpack.c.l.b16 %v3793
        %v4399 = vunpack.c.h.b16 %v3793
        %v4400 = vunpack.c.l.b16 %v3794
        %v4401 = vunpack.c.h.b16 %v3794
        %v4402 = vunpack.c.l.b16 %v3795
        %v4403 = vunpack.c.h.b16 %v3795
        %v4404 = vunpack.c.l.b16 %v3796
        %v4405 = vunpack.c.h.b16 %v3796
        %v4406 = vunpack.c.l.b16 %v3797
        %v4407 = vunpack.c.h.b16 %v3797
        %v4408 = vunpack.c.l.b16 %v3798
        %v4409 = vunpack.c.h.b16 %v3798
        %v4410 = vunpack.c.l.b16 %v3799
        %v4411 = vunpack.c.h.b16 %v3799
        %v4412 = vunpack.c.l.b16 %v3800
        %v4413 = vunpack.c.h.b16 %v3800
        %v4414 = vunpack.c.l.b16 %v3801
        %v4415 = vunpack.c.h.b16 %v3801
        %v4416 = vunpack.c.l.b16 %v3802
        %v4417 = vunpack.c.h.b16 %v3802
        %v4418 = vunpack.c.l.b16 %v3803
        %v4419 = vunpack.c.h.b16 %v3803
        %v4420 = vunpack.c.l.b16 %v3804
        %v4421 = vunpack.c.h.b16 %v3804
        %v4422 = vunpack.c.l.b16 %v3805
        %v4423 = vunpack.c.h.b16 %v3805
        %v4424 = vunpack.c.l.b16 %v3806
        %v4425 = vunpack.c.h.b16 %v3806
        %v4426 = vunpack.c.l.b16 %v3807
        %v4427 = vunpack.c.h.b16 %v3807
        %v4428 = vunpack.c.l.b16 %v3808
        %v4429 = vunpack.c.h.b16 %v3808
        %v4430 = vunpack.c.l.b16 %v3809
        %v4431 = vunpack.c.h.b16 %v3809
        %v4432 = vunpack.c.l.b16 %v3810
        %v4433 = vunpack.c.h.b16 %v3810
        %v4434 = vunpack.c.l.b16 %v3811
        %v4435 = vunpack.c.h.b16 %v3811
        %v4436 = vunpack.c.l.b16 %v3812
        %v4437 = vunpack.c.h.b16 %v3812
        %v4438 = vunpack.c.l.b16 %v3813
        %v4439 = vunpack.c.h.b16 %v3813
        %v4440 = vunpack.c.l.b16 %v3814
        %v4441 = vunpack.c.h.b16 %v3814
        %v4442 = vunpack.c.l.b16 %v3815
        %v4443 = vunpack.c.h.b16 %v3815
        %v4444 = vunpack.c.l.b16 %v3816
        %v4445 = vunpack.c.h.b16 %v3816
        %v4446 = vunpack.c.l.b16 %v3817
        %v4447 = vunpack.c.h.b16 %v3817
        %v4448 = vunpack.c.l.b16 %v3818
        %v4449 = vunpack.c.h.b16 %v3818
        %v4450 = vunpack.c.l.b16 %v3819
        %v4451 = vunpack.c.h.b16 %v3819
        %v4452 = vunpack.c.l.b16 %v3820
        %v4453 = vunpack.c.h.b16 %v3820
        %v4454 = vunpack.c.l.b16 %v3821
        %v4455 = vunpack.c.h.b16 %v3821
        %v4456 = vunpack.c.l.b16 %v3822
        %v4457 = vunpack.c.h.b16 %v3822
        %v4458 = vunpack.c.l.b16 %v3823
        %v4459 = vunpack.c.h.b16 %v3823
        %v4460 = vunpack.c.l.b16 %v3824
        %v4461 = vunpack.c.h.b16 %v3824
        %v4462 = vunpack.c.l.b16 %v3825
        %v4463 = vunpack.c.h.b16 %v3825
        %v4464 = vunpack.c.l.b16 %v3826
        %v4465 = vunpack.c.h.b16 %v3826
        %v4466 = vunpack.c.l.b16 %v3827
        %v4467 = vunpack.c.h.b16 %v3827
        %v4468 = vunpack.c.l.b16 %v3828
        %v4469 = vunpack.c.h.b16 %v3828
        %v4470 = vunpack.c.l.b16 %v3829
        %v4471 = vunpack.c.h.b16 %v3829
        %v4472 = vunpack.c.l.b16 %v3830
        %v4473 = vunpack.c.h.b16 %v3830
        %v4474 = vunpack.c.l.b16 %v3831
        %v4475 = vunpack.c.h.b16 %v3831
        %v4476 = vunpack.c.l.b16 %v3832
        %v4477 = vunpack.c.h.b16 %v3832
        %v4478 = vunpack.c.l.b16 %v3833
        %v4479 = vunpack.c.h.b16 %v3833
        %v4480 = vunpack.c.l.b16 %v3834
        %v4481 = vunpack.c.h.b16 %v3834
        %v4482 = vunpack.c.l.b16 %v3835
        %v4483 = vunpack.c.h.b16 %v3835
        %v4484 = vunpack.c.l.b16 %v3836
        %v4485 = vunpack.c.h.b16 %v3836
        %v4486 = vunpack.c.l.b16 %v3837
        %v4487 = vunpack.c.h.b16 %v3837
        %v4488 = vunpack.c.l.b16 %v3838
        %v4489 = vunpack.c.h.b16 %v3838
        %v4490 = vunpack.c.l.b16 %v3839
        %v4491 = vunpack.c.h.b16 %v3839
        %v4492 = vunpack.c.l.b16 %v3840
        %v4493 = vunpack.c.h.b16 %v3840
        %v4494 = vunpack.c.l.b16 %v3841
        %v4495 = vunpack.c.h.b16 %v3841
        %v4496 = vunpack.c.l.b16 %v3842
        %v4497 = vunpack.c.h.b16 %v3842
        %v4498 = vunpack.c.l.b16 %v3843
        %v4499 = vunpack.c.h.b16 %v3843
        %v4500 = vunpack.c.l.b16 %v3844
        %v4501 = vunpack.c.h.b16 %v3844
        %v4502 = vunpack.c.l.b16 %v3845
        %v4503 = vunpack.c.h.b16 %v3845
        %v4504 = vunpack.c.l.b16 %v3846
        %v4505 = vunpack.c.h.b16 %v3846
        %v4506 = vunpack.c.l.b16 %v3847
        %v4507 = vunpack.c.h.b16 %v3847
        %v4508 = vunpack.c.l.b16 %v3848
        %v4509 = vunpack.c.h.b16 %v3848
        %v4510 = vunpack.c.l.b16 %v3849
        %v4511 = vunpack.c.h.b16 %v3849
        %v4512 = vunpack.c.l.b16 %v3850
        %v4513 = vunpack.c.h.b16 %v3850
        %v4514 = vunpack.c.l.b16 %v3851
        %v4515 = vunpack.c.h.b16 %v3851
        %v4516 = vunpack.c.l.b16 %v3852
        %v4517 = vunpack.c.h.b16 %v3852
        %v4518 = vunpack.c.l.b16 %v3853
        %v4519 = vunpack.c.h.b16 %v3853
        %v4520 = vunpack.c.l.b16 %v3854
        %v4521 = vunpack.c.h.b16 %v3854
        %v4522 = vunpack.c.l.b16 %v3855
        %v4523 = vunpack.c.h.b16 %v3855
        %v4524 = vunpack.c.l.b16 %v3856
        %v4525 = vunpack.c.h.b16 %v3856
        %v4526 = vunpack.c.l.b16 %v3857
        %v4527 = vunpack.c.h.b16 %v3857
        %v4528 = vunpack.c.l.b16 %v3858
        %v4529 = vunpack.c.h.b16 %v3858
        %v4530 = vunpack.c.l.b16 %v3859
        %v4531 = vunpack.c.h.b16 %v3859
        %v4532 = vunpack.c.l.b16 %v3860
        %v4533 = vunpack.c.h.b16 %v3860
        %v4534 = vunpack.c.l.b16 %v3861
        %v4535 = vunpack.c.h.b16 %v3861
        %v4536 = vunpack.c.l.b16 %v3862
        %v4537 = vunpack.c.h.b16 %v3862
        %v4538 = vunpack.c.l.b16 %v3863
        %v4539 = vunpack.c.h.b16 %v3863
        %v4540 = vunpack.c.l.b16 %v3864
        %v4541 = vunpack.c.h.b16 %v3864
        %v4542 = vunpack.c.l.b16 %v3865
        %v4543 = vunpack.c.h.b16 %v3865
        %v4544 = vunpack.c.l.b16 %v3866
        %v4545 = vunpack.c.h.b16 %v3866
        %v4546 = vunpack.c.l.b16 %v3867
        %v4547 = vunpack.c.h.b16 %v3867
        %v4548 = vunpack.c.l.b16 %v3868
        %v4549 = vunpack.c.h.b16 %v3868
        %v4550 = vunpack.c.l.b16 %v3869
        %v4551 = vunpack.c.h.b16 %v3869
        %v4552 = vunpack.c.l.b16 %v3870
        %v4553 = vunpack.c.h.b16 %v3870
        %v4554 = vunpack.c.l.b16 %v3871
        %v4555 = vunpack.c.h.b16 %v3871
        %v4556 = vunpack.c.l.b16 %v3872
        %v4557 = vunpack.c.h.b16 %v3872
        %v4558 = vunpack.c.l.b16 %v3873
        %v4559 = vunpack.c.h.b16 %v3873
        %v4560 = vunpack.c.l.b16 %v3874
        %v4561 = vunpack.c.h.b16 %v3874
        %v4562 = vunpack.c.l.b16 %v3875
        %v4563 = vunpack.c.h.b16 %v3875
        %v4564 = vunpack.c.l.b16 %v3876
        %v4565 = vunpack.c.h.b16 %v3876
        %v4566 = vunpack.c.l.b16 %v3877
        %v4567 = vunpack.c.h.b16 %v3877
        %v4568 = vunpack.c.l.b16 %v3878
        %v4569 = vunpack.c.h.b16 %v3878
        %v4570 = vunpack.c.l.b16 %v3879
        %v4571 = vunpack.c.h.b16 %v3879
        %v4572 = vunpack.c.l.b16 %v3880
        %v4573 = vunpack.c.h.b16 %v3880
        %v4574 = vunpack.c.l.b16 %v3881
        %v4575 = vunpack.c.h.b16 %v3881
        %v4576 = vunpack.c.l.b16 %v3882
        %v4577 = vunpack.c.h.b16 %v3882
        %v4578 = vunpack.c.l.b16 %v3883
        %v4579 = vunpack.c.h.b16 %v3883
        %v4580 = vunpack.c.l.b16 %v3884
        %v4581 = vunpack.c.h.b16 %v3884
        %v4582 = vunpack.c.l.b16 %v3885
        %v4583 = vunpack.c.h.b16 %v3885
        %v4584 = vunpack.c.l.b16 %v3886
        %v4585 = vunpack.c.h.b16 %v3886
        %v4586 = vunpack.c.l.b16 %v3887
        %v4587 = vunpack.c.h.b16 %v3887
        %v4588 = vunpack.c.l.b16 %v3888
        %v4589 = vunpack.c.h.b16 %v3888
        %v4590 = vunpack.c.l.b16 %v3889
        %v4591 = vunpack.c.h.b16 %v3889
        %v4592 = vunpack.c.l.b16 %v3890
        %v4593 = vunpack.c.h.b16 %v3890
        %v4594 = vunpack.c.l.b16 %v3891
        %v4595 = vunpack.c.h.b16 %v3891
        %v4596 = vunpack.c.l.b16 %v3892
        %v4597 = vunpack.c.h.b16 %v3892
        %v4598 = vunpack.c.l.b16 %v3893
        %v4599 = vunpack.c.h.b16 %v3893
        %v4600 = vunpack.c.l.b16 %v3894
        %v4601 = vunpack.c.h.b16 %v3894
        %v4602 = vunpack.c.l.b16 %v3895
        %v4603 = vunpack.c.h.b16 %v3895
        %v4604 = vunpack.c.l.b16 %v3896
        %v4605 = vunpack.c.h.b16 %v3896
        %v4606 = vunpack.c.l.b16 %v3897
        %v4607 = vunpack.c.h.b16 %v3897
        %v4608 = vunpack.c.l.b16 %v3898
        %v4609 = vunpack.c.h.b16 %v3898
        %v4610 = vunpack.c.l.b16 %v3899
        %v4611 = vunpack.c.h.b16 %v3899
        %v4612 = vunpack.c.l.b16 %v3900
        %v4613 = vunpack.c.h.b16 %v3900
        %v4614 = vunpack.c.l.b16 %v3901
        %v4615 = vunpack.c.h.b16 %v3901
        %v4616 = vunpack.c.l.b16 %v3902
        %v4617 = vunpack.c.h.b16 %v3902
        %v4618 = vunpack.c.l.b16 %v3903
        %v4619 = vunpack.c.h.b16 %v3903
        %v4620 = vunpack.c.l.b16 %v3904
        %v4621 = vunpack.c.h.b16 %v3904
        %v4622 = vunpack.c.l.b16 %v3905
        %v4623 = vunpack.c.h.b16 %v3905
        %v4624 = vunpack.c.l.b16 %v3906
        %v4625 = vunpack.c.h.b16 %v3906
        %v4626 = vunpack.c.l.b16 %v3907
        %v4627 = vunpack.c.h.b16 %v3907
        %v4628 = vunpack.c.l.b16 %v3908
        %v4629 = vunpack.c.h.b16 %v3908
        %v4630 = vunpack.c.l.b16 %v3909
        %v4631 = vunpack.c.h.b16 %v3909
        %v4632 = vunpack.c.l.b16 %v3910
        %v4633 = vunpack.c.h.b16 %v3910
        %v4634 = vunpack.c.l.b16 %v3911
        %v4635 = vunpack.c.h.b16 %v3911
        %v4636 = vunpack.c.l.b16 %v3912
        %v4637 = vunpack.c.h.b16 %v3912
        %v4638 = vunpack.c.l.b16 %v3913
        %v4639 = vunpack.c.h.b16 %v3913
        %v4640 = vunpack.c.l.b16 %v3914
        %v4641 = vunpack.c.h.b16 %v3914
        %v4642 = vunpack.c.l.b16 %v3915
        %v4643 = vunpack.c.h.b16 %v3915
        %v4644 = vunpack.c.l.b16 %v3916
        %v4645 = vunpack.c.h.b16 %v3916
        %v4646 = vunpack.c.l.b16 %v3917
        %v4647 = vunpack.c.h.b16 %v3917
        %v4648 = vunpack.c.l.b16 %v3918
        %v4649 = vunpack.c.h.b16 %v3918
        %v4650 = vunpack.c.l.b16 %v3919
        %v4651 = vunpack.c.h.b16 %v3919
        %v4652 = vunpack.c.l.b16 %v3920
        %v4653 = vunpack.c.h.b16 %v3920
        %v4654 = vunpack.c.l.b16 %v3921
        %v4655 = vunpack.c.h.b16 %v3921
        %v4656 = vunpack.c.l.b16 %v3922
        %v4657 = vunpack.c.h.b16 %v3922
        %v4658 = vunpack.c.l.b16 %v3923
        %v4659 = vunpack.c.h.b16 %v3923
        %v4660 = vunpack.c.l.b16 %v3924
        %v4661 = vunpack.c.h.b16 %v3924
        %v4662 = vunpack.c.l.b16 %v3925
        %v4663 = vunpack.c.h.b16 %v3925
        %v4664 = vunpack.c.l.b16 %v3926
        %v4665 = vunpack.c.h.b16 %v3926
        %v4666 = vunpack.c.l.b16 %v3927
        %v4667 = vunpack.c.h.b16 %v3927
        %v4668 = vunpack.c.l.b16 %v3928
        %v4669 = vunpack.c.h.b16 %v3928
        %v4670 = vunpack.c.l.b16 %v3929
        %v4671 = vunpack.c.h.b16 %v3929
        %v4672 = vunpack.c.l.b16 %v3930
        %v4673 = vunpack.c.h.b16 %v3930
        %v4674 = vunpack.c.l.b16 %v3931
        %v4675 = vunpack.c.h.b16 %v3931
        %v4676 = vunpack.c.l.b16 %v3932
        %v4677 = vunpack.c.h.b16 %v3932
        %v4678 = vunpack.c.l.b16 %v3933
        %v4679 = vunpack.c.h.b16 %v3933
        %v4680 = vunpack.c.l.b16 %v3934
        %v4681 = vunpack.c.h.b16 %v3934
        %v4682 = vunpack.c.l.b16 %v3935
        %v4683 = vunpack.c.h.b16 %v3935
        %v4684 = vunpack.c.l.b16 %v3936
        %v4685 = vunpack.c.h.b16 %v3936
        %v4686 = vunpack.c.l.b16 %v3937
        %v4687 = vunpack.c.h.b16 %v3937
        %v4688 = vunpack.c.l.b16 %v3938
        %v4689 = vunpack.c.h.b16 %v3938
        %v4690 = vunpack.c.l.b16 %v3939
        %v4691 = vunpack.c.h.b16 %v3939
        %v4692 = vunpack.c.l.b16 %v3940
        %v4693 = vunpack.c.h.b16 %v3940
        %v4694 = vunpack.c.l.b16 %v3941
        %v4695 = vunpack.c.h.b16 %v3941
        %v4696 = vunpack.c.l.b16 %v3942
        %v4697 = vunpack.c.h.b16 %v3942
        %v4698 = vunpack.c.l.b16 %v3943
        %v4699 = vunpack.c.h.b16 %v3943
        %v4700 = vunpack.c.l.b16 %v3944
        %v4701 = vunpack.c.h.b16 %v3944
        %v4702 = vunpack.c.l.b16 %v3945
        %v4703 = vunpack.c.h.b16 %v3945
        %v4704 = vunpack.c.l.b16 %v3946
        %v4705 = vunpack.c.h.b16 %v3946
        %v4706 = vunpack.c.l.b16 %v3947
        %v4707 = vunpack.c.h.b16 %v3947
        %v4708 = vunpack.c.l.b16 %v3948
        %v4709 = vunpack.c.h.b16 %v3948
        %v4710 = vunpack.c.l.b16 %v3949
        %v4711 = vunpack.c.h.b16 %v3949
        %v4712 = vunpack.c.l.b16 %v3950
        %v4713 = vunpack.c.h.b16 %v3950
        %v4714 = vunpack.c.l.b16 %v3951
        %v4715 = vunpack.c.h.b16 %v3951
        %v4716 = vunpack.c.l.b16 %v3952
        %v4717 = vunpack.c.h.b16 %v3952
        %v4718 = vunpack.c.l.b16 %v3953
        %v4719 = vunpack.c.h.b16 %v3953
        %v4720 = vunpack.c.l.b16 %v3954
        %v4721 = vunpack.c.h.b16 %v3954
        %v4722 = vunpack.c.l.b16 %v3955
        %v4723 = vunpack.c.h.b16 %v3955
        %v4724 = vunpack.c.l.b16 %v3956
        %v4725 = vunpack.c.h.b16 %v3956
        %v4726 = vunpack.c.l.b16 %v3957
        %v4727 = vunpack.c.h.b16 %v3957
        %v4728 = vunpack.c.l.b16 %v3958
        %v4729 = vunpack.c.h.b16 %v3958
        %v4730 = vunpack.c.l.b16 %v3959
        %v4731 = vunpack.c.h.b16 %v3959
        %v4732 = vunpack.c.l.b16 %v3960
        %v4733 = vunpack.c.h.b16 %v3960
        %v4734 = vunpack.c.l.b16 %v3961
        %v4735 = vunpack.c.h.b16 %v3961
        %v4736 = vunpack.c.l.b16 %v3962
        %v4737 = vunpack.c.h.b16 %v3962
        %v4738 = vunpack.c.l.b16 %v3963
        %v4739 = vunpack.c.h.b16 %v3963
        %v4740 = vunpack.c.l.b16 %v3964
        %v4741 = vunpack.c.h.b16 %v3964
        %v4742 = vunpack.c.l.b16 %v3965
        %v4743 = vunpack.c.h.b16 %v3965
        %v4744 = vunpack.c.l.b16 %v3966
        %v4745 = vunpack.c.h.b16 %v3966
        %v4746 = vunpack.c.l.b16 %v3967
        %v4747 = vunpack.c.h.b16 %v3967
        %v4748 = vunpack.c.l.b16 %v3968
        %v4749 = vunpack.c.h.b16 %v3968
        %v4750 = vunpack.c.l.b16 %v3969
        %v4751 = vunpack.c.h.b16 %v3969
        %v4752 = vunpack.c.l.b16 %v3970
        %v4753 = vunpack.c.h.b16 %v3970
        %v4754 = vunpack.c.l.b16 %v3971
        %v4755 = vunpack.c.h.b16 %v3971
        %v4756 = vunpack.c.l.b16 %v3972
        %v4757 = vunpack.c.h.b16 %v3972
        %v4758 = vunpack.c.l.b16 %v3973
        %v4759 = vunpack.c.h.b16 %v3973
        %v4760 = vunpack.c.l.b16 %v3974
        %v4761 = vunpack.c.h.b16 %v3974
        %v4762 = vunpack.c.l.b16 %v3975
        %v4763 = vunpack.c.h.b16 %v3975
        %v4764 = vunpack.c.l.b16 %v3976
        %v4765 = vunpack.c.h.b16 %v3976
        %v4766 = vunpack.c.l.b16 %v3977
        %v4767 = vunpack.c.h.b16 %v3977
        %v4768 = vpack.c.b16 %v4260, %v4256
        %v4769 = vpack.c.b16 %v4261, %v4257
        %v4770 = vpack.c.b16 %v4262, %v4258
        %v4771 = vpack.c.b16 %v4263, %v4259
        %v4772 = vpack.c.b16 %v4268, %v4264
        %v4773 = vpack.c.b16 %v4269, %v4265
        %v4774 = vpack.c.b16 %v4270, %v4266
        %v4775 = vpack.c.b16 %v4271, %v4267
        %v4776 = vpack.c.b16 %v4276, %v4272
        %v4777 = vpack.c.b16 %v4277, %v4273
        %v4778 = vpack.c.b16 %v4278, %v4274
        %v4779 = vpack.c.b16 %v4279, %v4275
        %v4780 = vpack.c.b16 %v4284, %v4280
        %v4781 = vpack.c.b16 %v4285, %v4281
        %v4782 = vpack.c.b16 %v4286, %v4282
        %v4783 = vpack.c.b16 %v4287, %v4283
        %v4784 = vpack.c.b16 %v4292, %v4288
        %v4785 = vpack.c.b16 %v4293, %v4289
        %v4786 = vpack.c.b16 %v4294, %v4290
        %v4787 = vpack.c.b16 %v4295, %v4291
        %v4788 = vpack.c.b16 %v4300, %v4296
        %v4789 = vpack.c.b16 %v4301, %v4297
        %v4790 = vpack.c.b16 %v4302, %v4298
        %v4791 = vpack.c.b16 %v4303, %v4299
        %v4792 = vpack.c.b16 %v4308, %v4304
        %v4793 = vpack.c.b16 %v4309, %v4305
        %v4794 = vpack.c.b16 %v4310, %v4306
        %v4795 = vpack.c.b16 %v4311, %v4307
        %v4796 = vpack.c.b16 %v4316, %v4312
        %v4797 = vpack.c.b16 %v4317, %v4313
        %v4798 = vpack.c.b16 %v4318, %v4314
        %v4799 = vpack.c.b16 %v4319, %v4315
        %v4800 = vpack.c.b16 %v4324, %v4320
        %v4801 = vpack.c.b16 %v4325, %v4321
        %v4802 = vpack.c.b16 %v4326, %v4322
        %v4803 = vpack.c.b16 %v4327, %v4323
        %v4804 = vpack.c.b16 %v4332, %v4328
        %v4805 = vpack.c.b16 %v4333, %v4329
        %v4806 = vpack.c.b16 %v4334, %v4330
        %v4807 = vpack.c.b16 %v4335, %v4331
        %v4808 = vpack.c.b16 %v4340, %v4336
        %v4809 = vpack.c.b16 %v4341, %v4337
        %v4810 = vpack.c.b16 %v4342, %v4338
        %v4811 = vpack.c.b16 %v4343, %v4339
        %v4812 = vpack.c.b16 %v4348, %v4344
        %v4813 = vpack.c.b16 %v4349, %v4345
        %v4814 = vpack.c.b16 %v4350, %v4346
        %v4815 = vpack.c.b16 %v4351, %v4347
        %v4816 = vpack.c.b16 %v4356, %v4352
        %v4817 = vpack.c.b16 %v4357, %v4353
        %v4818 = vpack.c.b16 %v4358, %v4354
        %v4819 = vpack.c.b16 %v4359, %v4355
        %v4820 = vpack.c.b16 %v4364, %v4360
        %v4821 = vpack.c.b16 %v4365, %v4361
        %v4822 = vpack.c.b16 %v4366, %v4362
        %v4823 = vpack.c.b16 %v4367, %v4363
        %v4824 = vpack.c.b16 %v4372, %v4368
        %v4825 = vpack.c.b16 %v4373, %v4369
        %v4826 = vpack.c.b16 %v4374, %v4370
        %v4827 = vpack.c.b16 %v4375, %v4371
        %v4828 = vpack.c.b16 %v4380, %v4376
        %v4829 = vpack.c.b16 %v4381, %v4377
        %v4830 = vpack.c.b16 %v4382, %v4378
        %v4831 = vpack.c.b16 %v4383, %v4379
        %v4832 = vpack.c.b16 %v4388, %v4384
        %v4833 = vpack.c.b16 %v4389, %v4385
        %v4834 = vpack.c.b16 %v4390, %v4386
        %v4835 = vpack.c.b16 %v4391, %v4387
        %v4836 = vpack.c.b16 %v4396, %v4392
        %v4837 = vpack.c.b16 %v4397, %v4393
        %v4838 = vpack.c.b16 %v4398, %v4394
        %v4839 = vpack.c.b16 %v4399, %v4395
        %v4840 = vpack.c.b16 %v4404, %v4400
        %v4841 = vpack.c.b16 %v4405, %v4401
        %v4842 = vpack.c.b16 %v4406, %v4402
        %v4843 = vpack.c.b16 %v4407, %v4403
        %v4844 = vpack.c.b16 %v4412, %v4408
        %v4845 = vpack.c.b16 %v4413, %v4409
        %v4846 = vpack.c.b16 %v4414, %v4410
        %v4847 = vpack.c.b16 %v4415, %v4411
        %v4848 = vpack.c.b16 %v4420, %v4416
        %v4849 = vpack.c.b16 %v4421, %v4417
        %v4850 = vpack.c.b16 %v4422, %v4418
        %v4851 = vpack.c.b16 %v4423, %v4419
        %v4852 = vpack.c.b16 %v4428, %v4424
        %v4853 = vpack.c.b16 %v4429, %v4425
        %v4854 = vpack.c.b16 %v4430, %v4426
        %v4855 = vpack.c.b16 %v4431, %v4427
        %v4856 = vpack.c.b16 %v4436, %v4432
        %v4857 = vpack.c.b16 %v4437, %v4433
        %v4858 = vpack.c.b16 %v4438, %v4434
        %v4859 = vpack.c.b16 %v4439, %v4435
        %v4860 = vpack.c.b16 %v4444, %v4440
        %v4861 = vpack.c.b16 %v4445, %v4441
        %v4862 = vpack.c.b16 %v4446, %v4442
        %v4863 = vpack.c.b16 %v4447, %v4443
        %v4864 = vpack.c.b16 %v4452, %v4448
        %v4865 = vpack.c.b16 %v4453, %v4449
        %v4866 = vpack.c.b16 %v4454, %v4450
        %v4867 = vpack.c.b16 %v4455, %v4451
        %v4868 = vpack.c.b16 %v4460, %v4456
        %v4869 = vpack.c.b16 %v4461, %v4457
        %v4870 = vpack.c.b16 %v4462, %v4458
        %v4871 = vpack.c.b16 %v4463, %v4459
        %v4872 = vpack.c.b16 %v4468, %v4464
        %v4873 = vpack.c.b16 %v4469, %v4465
        %v4874 = vpack.c.b16 %v4470, %v4466
        %v4875 = vpack.c.b16 %v4471, %v4467
        %v4876 = vpack.c.b16 %v4476, %v4472
        %v4877 = vpack.c.b16 %v4477, %v4473
        %v4878 = vpack.c.b16 %v4478, %v4474
        %v4879 = vpack.c.b16 %v4479, %v4475
        %v4880 = vpack.c.b16 %v4484, %v4480
        %v4881 = vpack.c.b16 %v4485, %v4481
        %v4882 = vpack.c.b16 %v4486, %v4482
        %v4883 = vpack.c.b16 %v4487, %v4483
        %v4884 = vpack.c.b16 %v4492, %v4488
        %v4885 = vpack.c.b16 %v4493, %v4489
        %v4886 = vpack.c.b16 %v4494, %v4490
        %v4887 = vpack.c.b16 %v4495, %v4491
        %v4888 = vpack.c.b16 %v4500, %v4496
        %v4889 = vpack.c.b16 %v4501, %v4497
        %v4890 = vpack.c.b16 %v4502, %v4498
        %v4891 = vpack.c.b16 %v4503, %v4499
        %v4892 = vpack.c.b16 %v4508, %v4504
        %v4893 = vpack.c.b16 %v4509, %v4505
        %v4894 = vpack.c.b16 %v4510, %v4506
        %v4895 = vpack.c.b16 %v4511, %v4507
        %v4896 = vpack.c.b16 %v4516, %v4512
        %v4897 = vpack.c.b16 %v4517, %v4513
        %v4898 = vpack.c.b16 %v4518, %v4514
        %v4899 = vpack.c.b16 %v4519, %v4515
        %v4900 = vpack.c.b16 %v4524, %v4520
        %v4901 = vpack.c.b16 %v4525, %v4521
        %v4902 = vpack.c.b16 %v4526, %v4522
        %v4903 = vpack.c.b16 %v4527, %v4523
        %v4904 = vpack.c.b16 %v4532, %v4528
        %v4905 = vpack.c.b16 %v4533, %v4529
        %v4906 = vpack.c.b16 %v4534, %v4530
        %v4907 = vpack.c.b16 %v4535, %v4531
        %v4908 = vpack.c.b16 %v4540, %v4536
        %v4909 = vpack.c.b16 %v4541, %v4537
        %v4910 = vpack.c.b16 %v4542, %v4538
        %v4911 = vpack.c.b16 %v4543, %v4539
        %v4912 = vpack.c.b16 %v4548, %v4544
        %v4913 = vpack.c.b16 %v4549, %v4545
        %v4914 = vpack.c.b16 %v4550, %v4546
        %v4915 = vpack.c.b16 %v4551, %v4547
        %v4916 = vpack.c.b16 %v4556, %v4552
        %v4917 = vpack.c.b16 %v4557, %v4553
        %v4918 = vpack.c.b16 %v4558, %v4554
        %v4919 = vpack.c.b16 %v4559, %v4555
        %v4920 = vpack.c.b16 %v4564, %v4560
        %v4921 = vpack.c.b16 %v4565, %v4561
        %v4922 = vpack.c.b16 %v4566, %v4562
        %v4923 = vpack.c.b16 %v4567, %v4563
        %v4924 = vpack.c.b16 %v4572, %v4568
        %v4925 = vpack.c.b16 %v4573, %v4569
        %v4926 = vpack.c.b16 %v4574, %v4570
        %v4927 = vpack.c.b16 %v4575, %v4571
        %v4928 = vpack.c.b16 %v4580, %v4576
        %v4929 = vpack.c.b16 %v4581, %v4577
        %v4930 = vpack.c.b16 %v4582, %v4578
        %v4931 = vpack.c.b16 %v4583, %v4579
        %v4932 = vpack.c.b16 %v4588, %v4584
        %v4933 = vpack.c.b16 %v4589, %v4585
        %v4934 = vpack.c.b16 %v4590, %v4586
        %v4935 = vpack.c.b16 %v4591, %v4587
        %v4936 = vpack.c.b16 %v4596, %v4592
        %v4937 = vpack.c.b16 %v4597, %v4593
        %v4938 = vpack.c.b16 %v4598, %v4594
        %v4939 = vpack.c.b16 %v4599, %v4595
        %v4940 = vpack.c.b16 %v4604, %v4600
        %v4941 = vpack.c.b16 %v4605, %v4601
        %v4942 = vpack.c.b16 %v4606, %v4602
        %v4943 = vpack.c.b16 %v4607, %v4603
        %v4944 = vpack.c.b16 %v4612, %v4608
        %v4945 = vpack.c.b16 %v4613, %v4609
        %v4946 = vpack.c.b16 %v4614, %v4610
        %v4947 = vpack.c.b16 %v4615, %v4611
        %v4948 = vpack.c.b16 %v4620, %v4616
        %v4949 = vpack.c.b16 %v4621, %v4617
        %v4950 = vpack.c.b16 %v4622, %v4618
        %v4951 = vpack.c.b16 %v4623, %v4619
        %v4952 = vpack.c.b16 %v4628, %v4624
        %v4953 = vpack.c.b16 %v4629, %v4625
        %v4954 = vpack.c.b16 %v4630, %v4626
        %v4955 = vpack.c.b16 %v4631, %v4627
        %v4956 = vpack.c.b16 %v4636, %v4632
        %v4957 = vpack.c.b16 %v4637, %v4633
        %v4958 = vpack.c.b16 %v4638, %v4634
        %v4959 = vpack.c.b16 %v4639, %v4635
        %v4960 = vpack.c.b16 %v4644, %v4640
        %v4961 = vpack.c.b16 %v4645, %v4641
        %v4962 = vpack.c.b16 %v4646, %v4642
        %v4963 = vpack.c.b16 %v4647, %v4643
        %v4964 = vpack.c.b16 %v4652, %v4648
        %v4965 = vpack.c.b16 %v4653, %v4649
        %v4966 = vpack.c.b16 %v4654, %v4650
        %v4967 = vpack.c.b16 %v4655, %v4651
        %v4968 = vpack.c.b16 %v4660, %v4656
        %v4969 = vpack.c.b16 %v4661, %v4657
        %v4970 = vpack.c.b16 %v4662, %v4658
        %v4971 = vpack.c.b16 %v4663, %v4659
        %v4972 = vpack.c.b16 %v4668, %v4664
        %v4973 = vpack.c.b16 %v4669, %v4665
        %v4974 = vpack.c.b16 %v4670, %v4666
        %v4975 = vpack.c.b16 %v4671, %v4667
        %v4976 = vpack.c.b16 %v4676, %v4672
        %v4977 = vpack.c.b16 %v4677, %v4673
        %v4978 = vpack.c.b16 %v4678, %v4674
        %v4979 = vpack.c.b16 %v4679, %v4675
        %v4980 = vpack.c.b16 %v4684, %v4680
        %v4981 = vpack.c.b16 %v4685, %v4681
        %v4982 = vpack.c.b16 %v4686, %v4682
        %v4983 = vpack.c.b16 %v4687, %v4683
        %v4984 = vpack.c.b16 %v4692, %v4688
        %v4985 = vpack.c.b16 %v4693, %v4689
        %v4986 = vpack.c.b16 %v4694, %v4690
        %v4987 = vpack.c.b16 %v4695, %v4691
        %v4988 = vpack.c.b16 %v4700, %v4696
        %v4989 = vpack.c.b16 %v4701, %v4697
        %v4990 = vpack.c.b16 %v4702, %v4698
        %v4991 = vpack.c.b16 %v4703, %v4699
        %v4992 = vpack.c.b16 %v4708, %v4704
        %v4993 = vpack.c.b16 %v4709, %v4705
        %v4994 = vpack.c.b16 %v4710, %v4706
        %v4995 = vpack.c.b16 %v4711, %v4707
        %v4996 = vpack.c.b16 %v4716, %v4712
        %v4997 = vpack.c.b16 %v4717, %v4713
        %v4998 = vpack.c.b16 %v4718, %v4714
        %v4999 = vpack.c.b16 %v4719, %v4715
        %v5000 = vpack.c.b16 %v4724, %v4720
        %v5001 = vpack.c.b16 %v4725, %v4721
        %v5002 = vpack.c.b16 %v4726, %v4722
        %v5003 = vpack.c.b16 %v4727, %v4723
        %v5004 = vpack.c.b16 %v4732, %v4728
        %v5005 = vpack.c.b16 %v4733, %v4729
        %v5006 = vpack.c.b16 %v4734, %v4730
        %v5007 = vpack.c.b16 %v4735, %v4731
        %v5008 = vpack.c.b16 %v4740, %v4736
        %v5009 = vpack.c.b16 %v4741, %v4737
        %v5010 = vpack.c.b16 %v4742, %v4738
        %v5011 = vpack.c.b16 %v4743, %v4739
        %v5012 = vpack.c.b16 %v4748, %v4744
        %v5013 = vpack.c.b16 %v4749, %v4745
        %v5014 = vpack.c.b16 %v4750, %v4746
        %v5015 = vpack.c.b16 %v4751, %v4747
        %v5016 = vpack.c.b16 %v4756, %v4752
        %v5017 = vpack.c.b16 %v4757, %v4753
        %v5018 = vpack.c.b16 %v4758, %v4754
        %v5019 = vpack.c.b16 %v4759, %v4755
        %v5020 = vpack.c.b16 %v4764, %v4760
        %v5021 = vpack.c.b16 %v4765, %v4761
        %v5022 = vpack.c.b16 %v4766, %v4762
        %v5023 = vpack.c.b16 %v4767, %v4763
        %5280 = vmatprep.subr.bf16.mxu0 %v4769
        %5281 = vmatpush1.bf16.msra.mxu0 %v4768
        %5282 = vmatprep.subr.bf16.mxu0 %v4773
        %5283 = vmatpush1.bf16.msra.mxu0 %v4772
        %5284 = vmatprep.subr.bf16.mxu0 %v4777
        %5285 = vmatpush1.bf16.msra.mxu0 %v4776
        %5286 = vmatprep.subr.bf16.mxu0 %v4781
        %5287 = vmatpush1.bf16.msra.mxu0 %v4780
        %5288 = vmatprep.subr.bf16.mxu0 %v4785
        %5289 = vmatpush1.bf16.msra.mxu0 %v4784
        %5290 = vmatprep.subr.bf16.mxu0 %v4789
        %5291 = vmatpush1.bf16.msra.mxu0 %v4788
        %5292 = vmatprep.subr.bf16.mxu0 %v4793
        %5293 = vmatpush1.bf16.msra.mxu0 %v4792
        %5294 = vmatprep.subr.bf16.mxu0 %v4797
        %5295 = vmatpush1.bf16.msra.mxu0 %v4796
        %5296 = vmatprep.subr.bf16.mxu0 %v4801
        %5297 = vmatpush1.bf16.msra.mxu0 %v4800
        %5298 = vmatprep.subr.bf16.mxu0 %v4805
        %5299 = vmatpush1.bf16.msra.mxu0 %v4804
        %5300 = vmatprep.subr.bf16.mxu0 %v4809
        %5301 = vmatpush1.bf16.msra.mxu0 %v4808
        %5302 = vmatprep.subr.bf16.mxu0 %v4813
        %5303 = vmatpush1.bf16.msra.mxu0 %v4812
        %5304 = vmatprep.subr.bf16.mxu0 %v4817
        %5305 = vmatpush1.bf16.msra.mxu0 %v4816
        %5306 = vmatprep.subr.bf16.mxu0 %v4821
        %5307 = vmatpush1.bf16.msra.mxu0 %v4820
        %5308 = vmatprep.subr.bf16.mxu0 %v4825
        %5309 = vmatpush1.bf16.msra.mxu0 %v4824
        %5310 = vmatprep.subr.bf16.mxu0 %v4829
        %5311 = vmatpush1.bf16.msra.mxu0 %v4828
        %5312 = vmatprep.mubr.bf16.mxu0 %v3715
        %5313 = vmatmul.mubr.bf16.gmra.mrb[0].mxu0 %v3714
        %v5314 = vpop.f32.mrb[0].mxu0
        %v5315 = vadd.f32 %v3983, %v5314
        %v5316 = vpop.f32.mrb[0].mxu0
        %v5317 = vadd.f32 %v3987, %v5316
        %v5318 = vpop.f32.mrb[0].mxu0
        %v5319 = vpop.f32.mrb[0].mxu0
        %5320 = vdwg.mxu0
        %5321 = vmatprep.subr.bf16.mxu0 %v4833
        %5322 = vmatpush1.bf16.msra.mxu0 %v4832
        %5323 = vmatprep.subr.bf16.mxu0 %v4837
        %5324 = vmatpush1.bf16.msra.mxu0 %v4836
        %5325 = vmatprep.subr.bf16.mxu0 %v4841
        %5326 = vmatpush1.bf16.msra.mxu0 %v4840
        %5327 = vmatprep.subr.bf16.mxu0 %v4845
        %5328 = vmatpush1.bf16.msra.mxu0 %v4844
        %5329 = vmatprep.subr.bf16.mxu0 %v4849
        %5330 = vmatpush1.bf16.msra.mxu0 %v4848
        %5331 = vmatprep.subr.bf16.mxu0 %v4853
        %5332 = vmatpush1.bf16.msra.mxu0 %v4852
        %5333 = vmatprep.subr.bf16.mxu0 %v4857
        %5334 = vmatpush1.bf16.msra.mxu0 %v4856
        %5335 = vmatprep.subr.bf16.mxu0 %v4861
        %5336 = vmatpush1.bf16.msra.mxu0 %v4860
        %5337 = vmatprep.subr.bf16.mxu0 %v4865
        %5338 = vmatpush1.bf16.msra.mxu0 %v4864
        %5339 = vmatprep.subr.bf16.mxu0 %v4869
        %5340 = vmatpush1.bf16.msra.mxu0 %v4868
        %5341 = vmatprep.subr.bf16.mxu0 %v4873
        %5342 = vmatpush1.bf16.msra.mxu0 %v4872
        %5343 = vmatprep.subr.bf16.mxu0 %v4877
        %5344 = vmatpush1.bf16.msra.mxu0 %v4876
        %5345 = vmatprep.subr.bf16.mxu0 %v4881
        %5346 = vmatpush1.bf16.msra.mxu0 %v4880
        %5347 = vmatprep.subr.bf16.mxu0 %v4885
        %5348 = vmatpush1.bf16.msra.mxu0 %v4884
        %5349 = vmatprep.subr.bf16.mxu0 %v4889
        %5350 = vmatpush1.bf16.msra.mxu0 %v4888
        %5351 = vmatprep.subr.bf16.mxu0 %v4893
        %5352 = vmatpush1.bf16.msra.mxu0 %v4892
        %5353 = vmatprep.mubr.bf16.mxu0 %v3717
        %5354 = vmatmul.mubr.bf16.gmra.mrb[0].mxu0 %v3716
        %v5355 = vpop.f32.mrb[0].mxu0
        %v5356 = vadd.f32 %v5315, %v5355
        %v5357 = vpop.f32.mrb[0].mxu0
        %v5358 = vadd.f32 %v5317, %v5357
        %v5359 = vpop.f32.mrb[0].mxu0
        %v5360 = vpop.f32.mrb[0].mxu0
        %5361 = vdwg.mxu0
        %5362 = vmatprep.subr.bf16.mxu0 %v4897
        %5363 = vmatpush1.bf16.msra.mxu0 %v4896
        %5364 = vmatprep.subr.bf16.mxu0 %v4901
        %5365 = vmatpush1.bf16.msra.mxu0 %v4900
        %5366 = vmatprep.subr.bf16.mxu0 %v4905
        %5367 = vmatpush1.bf16.msra.mxu0 %v4904
        %5368 = vmatprep.subr.bf16.mxu0 %v4909
        %5369 = vmatpush1.bf16.msra.mxu0 %v4908
        %5370 = vmatprep.subr.bf16.mxu0 %v4913
        %5371 = vmatpush1.bf16.msra.mxu0 %v4912
        %5372 = vmatprep.subr.bf16.mxu0 %v4917
        %5373 = vmatpush1.bf16.msra.mxu0 %v4916
        %5374 = vmatprep.subr.bf16.mxu0 %v4921
        %5375 = vmatpush1.bf16.msra.mxu0 %v4920
        %5376 = vmatprep.subr.bf16.mxu0 %v4925
        %5377 = vmatpush1.bf16.msra.mxu0 %v4924
        %5378 = vmatprep.subr.bf16.mxu0 %v4929
        %5379 = vmatpush1.bf16.msra.mxu0 %v4928
        %5380 = vmatprep.subr.bf16.mxu0 %v4933
        %5381 = vmatpush1.bf16.msra.mxu0 %v4932
        %5382 = vmatprep.subr.bf16.mxu0 %v4937
        %5383 = vmatpush1.bf16.msra.mxu0 %v4936
        %5384 = vmatprep.subr.bf16.mxu0 %v4941
        %5385 = vmatpush1.bf16.msra.mxu0 %v4940
        %5386 = vmatprep.subr.bf16.mxu0 %v4945
        %5387 = vmatpush1.bf16.msra.mxu0 %v4944
        %5388 = vmatprep.subr.bf16.mxu0 %v4949
        %5389 = vmatpush1.bf16.msra.mxu0 %v4948
        %5390 = vmatprep.subr.bf16.mxu0 %v4953
        %5391 = vmatpush1.bf16.msra.mxu0 %v4952
        %5392 = vmatprep.subr.bf16.mxu0 %v4957
        %5393 = vmatpush1.bf16.msra.mxu0 %v4956
        %5394 = vmatprep.mubr.bf16.mxu0 %v3719
        %5395 = vmatmul.mubr.bf16.gmra.mrb[0].mxu0 %v3718
        %v5396 = vpop.f32.mrb[0].mxu0
        %v5397 = vadd.f32 %v5356, %v5396
        %v5398 = vpop.f32.mrb[0].mxu0
        %v5399 = vadd.f32 %v5358, %v5398
        %v5400 = vpop.f32.mrb[0].mxu0
        %v5401 = vpop.f32.mrb[0].mxu0
        %5402 = vdwg.mxu0
        %5403 = vmatprep.subr.bf16.mxu0 %v4961
        %5404 = vmatpush1.bf16.msra.mxu0 %v4960
        %5405 = vmatprep.subr.bf16.mxu0 %v4965
        %5406 = vmatpush1.bf16.msra.mxu0 %v4964
        %5407 = vmatprep.subr.bf16.mxu0 %v4969
        %5408 = vmatpush1.bf16.msra.mxu0 %v4968
        %5409 = vmatprep.subr.bf16.mxu0 %v4973
        %5410 = vmatpush1.bf16.msra.mxu0 %v4972
        %5411 = vmatprep.subr.bf16.mxu0 %v4977
        %5412 = vmatpush1.bf16.msra.mxu0 %v4976
        %5413 = vmatprep.subr.bf16.mxu0 %v4981
        %5414 = vmatpush1.bf16.msra.mxu0 %v4980
        %5415 = vmatprep.subr.bf16.mxu0 %v4985
        %5416 = vmatpush1.bf16.msra.mxu0 %v4984
        %5417 = vmatprep.subr.bf16.mxu0 %v4989
        %5418 = vmatpush1.bf16.msra.mxu0 %v4988
        %5419 = vmatprep.subr.bf16.mxu0 %v4993
        %5420 = vmatpush1.bf16.msra.mxu0 %v4992
        %5421 = vmatprep.subr.bf16.mxu0 %v4997
        %5422 = vmatpush1.bf16.msra.mxu0 %v4996
        %5423 = vmatprep.subr.bf16.mxu0 %v5001
        %5424 = vmatpush1.bf16.msra.mxu0 %v5000
        %5425 = vmatprep.subr.bf16.mxu0 %v5005
        %5426 = vmatpush1.bf16.msra.mxu0 %v5004
        %5427 = vmatprep.subr.bf16.mxu0 %v5009
        %5428 = vmatpush1.bf16.msra.mxu0 %v5008
        %5429 = vmatprep.subr.bf16.mxu0 %v5013
        %5430 = vmatpush1.bf16.msra.mxu0 %v5012
        %5431 = vmatprep.subr.bf16.mxu0 %v5017
        %5432 = vmatpush1.bf16.msra.mxu0 %v5016
        %5433 = vmatprep.subr.bf16.mxu0 %v5021
        %5434 = vmatpush1.bf16.msra.mxu0 %v5020
        %5435 = vmatprep.mubr.bf16.mxu0 %v3721
        %5436 = vmatmul.mubr.bf16.gmra.mrb[0].mxu0 %v3720
        %v5437 = vpop.f32.mrb[0].mxu0
        %v5438 = vadd.f32 %v5397, %v5437
        %v5439 = vpop.f32.mrb[0].mxu0
        %v5440 = vadd.f32 %v5399, %v5439
        %v5441 = vpop.f32.mrb[0].mxu0
        %v5442 = vpop.f32.mrb[0].mxu0
        %5443 = vdwg.mxu0
        %5444 = vmatprep.subr.bf16.mxu0 %v4771
        %5445 = vmatpush1.bf16.msra.mxu0 %v4770
        %5446 = vmatprep.subr.bf16.mxu0 %v4775
        %5447 = vmatpush1.bf16.msra.mxu0 %v4774
        %5448 = vmatprep.subr.bf16.mxu0 %v4779
        %5449 = vmatpush1.bf16.msra.mxu0 %v4778
        %5450 = vmatprep.subr.bf16.mxu0 %v4783
        %5451 = vmatpush1.bf16.msra.mxu0 %v4782
        %5452 = vmatprep.subr.bf16.mxu0 %v4787
        %5453 = vmatpush1.bf16.msra.mxu0 %v4786
        %5454 = vmatprep.subr.bf16.mxu0 %v4791
        %5455 = vmatpush1.bf16.msra.mxu0 %v4790
        %5456 = vmatprep.subr.bf16.mxu0 %v4795
        %5457 = vmatpush1.bf16.msra.mxu0 %v4794
        %5458 = vmatprep.subr.bf16.mxu0 %v4799
        %5459 = vmatpush1.bf16.msra.mxu0 %v4798
        %5460 = vmatprep.subr.bf16.mxu0 %v4803
        %5461 = vmatpush1.bf16.msra.mxu0 %v4802
        %5462 = vmatprep.subr.bf16.mxu0 %v4807
        %5463 = vmatpush1.bf16.msra.mxu0 %v4806
        %5464 = vmatprep.subr.bf16.mxu0 %v4811
        %5465 = vmatpush1.bf16.msra.mxu0 %v4810
        %5466 = vmatprep.subr.bf16.mxu0 %v4815
        %5467 = vmatpush1.bf16.msra.mxu0 %v4814
        %5468 = vmatprep.subr.bf16.mxu0 %v4819
        %5469 = vmatpush1.bf16.msra.mxu0 %v4818
        %5470 = vmatprep.subr.bf16.mxu0 %v4823
        %5471 = vmatpush1.bf16.msra.mxu0 %v4822
        %5472 = vmatprep.subr.bf16.mxu0 %v4827
        %5473 = vmatpush1.bf16.msra.mxu0 %v4826
        %5474 = vmatprep.subr.bf16.mxu0 %v4831
        %5475 = vmatpush1.bf16.msra.mxu0 %v4830
        %5476 = vmatprep.mubr.bf16.mxu0 %v3715
        %5477 = vmatmul.mubr.bf16.gmra.mrb[0].mxu0 %v3714
        %v5478 = vpop.f32.mrb[0].mxu0
        %v5479 = vadd.f32 %v3991, %v5478
        %v5480 = vpop.f32.mrb[0].mxu0
        %v5481 = vadd.f32 %v3995, %v5480
        %v5482 = vpop.f32.mrb[0].mxu0
        %v5483 = vpop.f32.mrb[0].mxu0
        %5484 = vdwg.mxu0
        %5485 = vmatprep.subr.bf16.mxu0 %v4835
        %5486 = vmatpush1.bf16.msra.mxu0 %v4834
        %5487 = vmatprep.subr.bf16.mxu0 %v4839
        %5488 = vmatpush1.bf16.msra.mxu0 %v4838
        %5489 = vmatprep.subr.bf16.mxu0 %v4843
        %5490 = vmatpush1.bf16.msra.mxu0 %v4842
        %5491 = vmatprep.subr.bf16.mxu0 %v4847
        %5492 = vmatpush1.bf16.msra.mxu0 %v4846
        %5493 = vmatprep.subr.bf16.mxu0 %v4851
        %5494 = vmatpush1.bf16.msra.mxu0 %v4850
        %5495 = vmatprep.subr.bf16.mxu0 %v4855
        %5496 = vmatpush1.bf16.msra.mxu0 %v4854
        %5497 = vmatprep.subr.bf16.mxu0 %v4859
        %5498 = vmatpush1.bf16.msra.mxu0 %v4858
        %5499 = vmatprep.subr.bf16.mxu0 %v4863
        %5500 = vmatpush1.bf16.msra.mxu0 %v4862
        %5501 = vmatprep.subr.bf16.mxu0 %v4867
        %5502 = vmatpush1.bf16.msra.mxu0 %v4866
        %5503 = vmatprep.subr.bf16.mxu0 %v4871
        %5504 = vmatpush1.bf16.msra.mxu0 %v4870
        %5505 = vmatprep.subr.bf16.mxu0 %v4875
        %5506 = vmatpush1.bf16.msra.mxu0 %v4874
        %5507 = vmatprep.subr.bf16.mxu0 %v4879
        %5508 = vmatpush1.bf16.msra.mxu0 %v4878
        %5509 = vmatprep.subr.bf16.mxu0 %v4883
        %5510 = vmatpush1.bf16.msra.mxu0 %v4882
        %5511 = vmatprep.subr.bf16.mxu0 %v4887
        %5512 = vmatpush1.bf16.msra.mxu0 %v4886
        %5513 = vmatprep.subr.bf16.mxu0 %v4891
        %5514 = vmatpush1.bf16.msra.mxu0 %v4890
        %5515 = vmatprep.subr.bf16.mxu0 %v4895
        %5516 = vmatpush1.bf16.msra.mxu0 %v4894
        %5517 = vmatprep.mubr.bf16.mxu0 %v3717
        %5518 = vmatmul.mubr.bf16.gmra.mrb[0].mxu0 %v3716
        %v5519 = vpop.f32.mrb[0].mxu0
        %v5520 = vadd.f32 %v5479, %v5519
        %v5521 = vpop.f32.mrb[0].mxu0
        %v5522 = vadd.f32 %v5481, %v5521
        %v5523 = vpop.f32.mrb[0].mxu0
        %v5524 = vpop.f32.mrb[0].mxu0
        %5525 = vdwg.mxu0
        %5526 = vmatprep.subr.bf16.mxu0 %v4899
        %5527 = vmatpush1.bf16.msra.mxu0 %v4898
        %5528 = vmatprep.subr.bf16.mxu0 %v4903
        %5529 = vmatpush1.bf16.msra.mxu0 %v4902
        %5530 = vmatprep.subr.bf16.mxu0 %v4907
        %5531 = vmatpush1.bf16.msra.mxu0 %v4906
        %5532 = vmatprep.subr.bf16.mxu0 %v4911
        %5533 = vmatpush1.bf16.msra.mxu0 %v4910
        %5534 = vmatprep.subr.bf16.mxu0 %v4915
        %5535 = vmatpush1.bf16.msra.mxu0 %v4914
        %5536 = vmatprep.subr.bf16.mxu0 %v4919
        %5537 = vmatpush1.bf16.msra.mxu0 %v4918
        %5538 = vmatprep.subr.bf16.mxu0 %v4923
        %5539 = vmatpush1.bf16.msra.mxu0 %v4922
        %5540 = vmatprep.subr.bf16.mxu0 %v4927
        %5541 = vmatpush1.bf16.msra.mxu0 %v4926
        %5542 = vmatprep.subr.bf16.mxu0 %v4931
        %5543 = vmatpush1.bf16.msra.mxu0 %v4930
        %5544 = vmatprep.subr.bf16.mxu0 %v4935
        %5545 = vmatpush1.bf16.msra.mxu0 %v4934
        %5546 = vmatprep.subr.bf16.mxu0 %v4939
        %5547 = vmatpush1.bf16.msra.mxu0 %v4938
        %5548 = vmatprep.subr.bf16.mxu0 %v4943
        %5549 = vmatpush1.bf16.msra.mxu0 %v4942
        %5550 = vmatprep.subr.bf16.mxu0 %v4947
        %5551 = vmatpush1.bf16.msra.mxu0 %v4946
        %5552 = vmatprep.subr.bf16.mxu0 %v4951
        %5553 = vmatpush1.bf16.msra.mxu0 %v4950
        %5554 = vmatprep.subr.bf16.mxu0 %v4955
        %5555 = vmatpush1.bf16.msra.mxu0 %v4954
        %5556 = vmatprep.subr.bf16.mxu0 %v4959
        %5557 = vmatpush1.bf16.msra.mxu0 %v4958
        %5558 = vmatprep.mubr.bf16.mxu0 %v3719
        %5559 = vmatmul.mubr.bf16.gmra.mrb[0].mxu0 %v3718
        %v5560 = vpop.f32.mrb[0].mxu0
        %v5561 = vadd.f32 %v5520, %v5560
        %v5562 = vpop.f32.mrb[0].mxu0
        %v5563 = vadd.f32 %v5522, %v5562
        %v5564 = vpop.f32.mrb[0].mxu0
        %v5565 = vpop.f32.mrb[0].mxu0
        %5566 = vdwg.mxu0
        %5567 = vmatprep.subr.bf16.mxu0 %v4963
        %5568 = vmatpush1.bf16.msra.mxu0 %v4962
        %5569 = vmatprep.subr.bf16.mxu0 %v4967
        %5570 = vmatpush1.bf16.msra.mxu0 %v4966
        %5571 = vmatprep.subr.bf16.mxu0 %v4971
        %5572 = vmatpush1.bf16.msra.mxu0 %v4970
        %5573 = vmatprep.subr.bf16.mxu0 %v4975
        %5574 = vmatpush1.bf16.msra.mxu0 %v4974
        %5575 = vmatprep.subr.bf16.mxu0 %v4979
        %5576 = vmatpush1.bf16.msra.mxu0 %v4978
        %5577 = vmatprep.subr.bf16.mxu0 %v4983
        %5578 = vmatpush1.bf16.msra.mxu0 %v4982
        %5579 = vmatprep.subr.bf16.mxu0 %v4987
        %5580 = vmatpush1.bf16.msra.mxu0 %v4986
        %5581 = vmatprep.subr.bf16.mxu0 %v4991
        %5582 = vmatpush1.bf16.msra.mxu0 %v4990
        %5583 = vmatprep.subr.bf16.mxu0 %v4995
        %5584 = vmatpush1.bf16.msra.mxu0 %v4994
        %5585 = vmatprep.subr.bf16.mxu0 %v4999
        %5586 = vmatpush1.bf16.msra.mxu0 %v4998
        %5587 = vmatprep.subr.bf16.mxu0 %v5003
        %5588 = vmatpush1.bf16.msra.mxu0 %v5002
        %5589 = vmatprep.subr.bf16.mxu0 %v5007
        %5590 = vmatpush1.bf16.msra.mxu0 %v5006
        %5591 = vmatprep.subr.bf16.mxu0 %v5011
        %5592 = vmatpush1.bf16.msra.mxu0 %v5010
        %5593 = vmatprep.subr.bf16.mxu0 %v5015
        %5594 = vmatpush1.bf16.msra.mxu0 %v5014
        %5595 = vmatprep.subr.bf16.mxu0 %v5019
        %5596 = vmatpush1.bf16.msra.mxu0 %v5018
        %5597 = vmatprep.subr.bf16.mxu0 %v5023
        %5598 = vmatpush1.bf16.msra.mxu0 %v5022
        %5599 = vmatprep.mubr.bf16.mxu0 %v3721
        %5600 = vmatmul.mubr.bf16.gmra.mrb[0].mxu0 %v3720
        %v5601 = vpop.f32.mrb[0].mxu0
        %v5602 = vadd.f32 %v5561, %v5601
        %v5603 = vpop.f32.mrb[0].mxu0
        %v5604 = vadd.f32 %v5563, %v5603
        %v5605 = vpop.f32.mrb[0].mxu0
        %v5606 = vpop.f32.mrb[0].mxu0
        %5607 = vdwg.mxu0
        %v5608 = vmax.f32 %v5438, 0.0
        %v5609 = vmax.f32 %v5440, 0.0
        %v5610 = vmax.f32 %v5602, 0.0
        %v5611 = vmax.f32 %v5604, 0.0
        %v5612 = vpack.c.bf16 %v5608, %v5608
        %v5613 = vpack.c.bf16 %v5609, %v5609
        %v5614 = vpack.c.bf16 %v5610, %v5610
        %v5615 = vpack.c.bf16 %v5611, %v5611
        %v5616 = vld [vmem:[#allocation21] sm:$0xf]
        %v5617 = vld [vmem:[#allocation21 + $0x4] sm:$0xf]
        %v5618 = vld [vmem:[#allocation21 + $0x8] sm:$0xf]
        %v5619 = vld [vmem:[#allocation21 + $0xc] sm:$0xf]
        %v5620 = vld [vmem:[#allocation21 + $0x10] sm:$0xf]
        %v5621 = vld [vmem:[#allocation21 + $0x14] sm:$0xf]
        %v5622 = vld [vmem:[#allocation21 + $0x18] sm:$0xf]
        %v5623 = vld [vmem:[#allocation21 + $0x1c] sm:$0xf]
        %v5624 = vld [vmem:[#allocation21 + $0x20] sm:$0xf]
        %v5625 = vld [vmem:[#allocation21 + $0x24] sm:$0xf]
        %v5626 = vld [vmem:[#allocation21 + $0x28] sm:$0xf]
        %v5627 = vld [vmem:[#allocation21 + $0x2c] sm:$0xf]
        %v5628 = vld [vmem:[#allocation21 + $0x30] sm:$0xf]
        %v5629 = vld [vmem:[#allocation21 + $0x34] sm:$0xf]
        %v5630 = vld [vmem:[#allocation21 + $0x38] sm:$0xf]
        %v5631 = vld [vmem:[#allocation21 + $0x3c] sm:$0xf]
        %v5632 = vld [vmem:[#allocation21 + $0x40] sm:$0xf]
        %v5633 = vld [vmem:[#allocation21 + $0x44] sm:$0xf]
        %v5634 = vld [vmem:[#allocation21 + $0x48] sm:$0xf]
        %v5635 = vld [vmem:[#allocation21 + $0x4c] sm:$0xf]
        %v5636 = vld [vmem:[#allocation21 + $0x50] sm:$0xf]
        %v5637 = vld [vmem:[#allocation21 + $0x54] sm:$0xf]
        %v5638 = vld [vmem:[#allocation21 + $0x58] sm:$0xf]
        %v5639 = vld [vmem:[#allocation21 + $0x5c] sm:$0xf]
        %v5640 = vld [vmem:[#allocation21 + $0x60] sm:$0xf]
        %v5641 = vld [vmem:[#allocation21 + $0x64] sm:$0xf]
        %v5642 = vld [vmem:[#allocation21 + $0x68] sm:$0xf]
        %v5643 = vld [vmem:[#allocation21 + $0x6c] sm:$0xf]
        %v5644 = vld [vmem:[#allocation21 + $0x70] sm:$0xf]
        %v5645 = vld [vmem:[#allocation21 + $0x74] sm:$0xf]
        %v5646 = vld [vmem:[#allocation21 + $0x78] sm:$0xf]
        %v5647 = vld [vmem:[#allocation21 + $0x7c] sm:$0xf]
        %v5648 = vld [vmem:[#allocation21 + $0x80] sm:$0xf]
        %v5649 = vld [vmem:[#allocation21 + $0x84] sm:$0xf]
        %v5650 = vld [vmem:[#allocation21 + $0x88] sm:$0xf]
        %v5651 = vld [vmem:[#allocation21 + $0x8c] sm:$0xf]
        %v5652 = vld [vmem:[#allocation21 + $0x90] sm:$0xf]
        %v5653 = vld [vmem:[#allocation21 + $0x94] sm:$0xf]
        %v5654 = vld [vmem:[#allocation21 + $0x98] sm:$0xf]
        %v5655 = vld [vmem:[#allocation21 + $0x9c] sm:$0xf]
        %v5656 = vld [vmem:[#allocation21 + $0xa0] sm:$0xf]
        %v5657 = vld [vmem:[#allocation21 + $0xa4] sm:$0xf]
        %v5658 = vld [vmem:[#allocation21 + $0xa8] sm:$0xf]
        %v5659 = vld [vmem:[#allocation21 + $0xac] sm:$0xf]
        %v5660 = vld [vmem:[#allocation21 + $0xb0] sm:$0xf]
        %v5661 = vld [vmem:[#allocation21 + $0xb4] sm:$0xf]
        %v5662 = vld [vmem:[#allocation21 + $0xb8] sm:$0xf]
        %v5663 = vld [vmem:[#allocation21 + $0xbc] sm:$0xf]
        %v5664 = vld [vmem:[#allocation21 + $0xc0] sm:$0xf]
        %v5665 = vld [vmem:[#allocation21 + $0xc4] sm:$0xf]
        %v5666 = vld [vmem:[#allocation21 + $0xc8] sm:$0xf]
        %v5667 = vld [vmem:[#allocation21 + $0xcc] sm:$0xf]
        %v5668 = vld [vmem:[#allocation21 + $0xd0] sm:$0xf]
        %v5669 = vld [vmem:[#allocation21 + $0xd4] sm:$0xf]
        %v5670 = vld [vmem:[#allocation21 + $0xd8] sm:$0xf]
        %v5671 = vld [vmem:[#allocation21 + $0xdc] sm:$0xf]
        %v5672 = vld [vmem:[#allocation21 + $0xe0] sm:$0xf]
        %v5673 = vld [vmem:[#allocation21 + $0xe4] sm:$0xf]
        %v5674 = vld [vmem:[#allocation21 + $0xe8] sm:$0xf]
        %v5675 = vld [vmem:[#allocation21 + $0xec] sm:$0xf]
        %v5676 = vld [vmem:[#allocation21 + $0xf0] sm:$0xf]
        %v5677 = vld [vmem:[#allocation21 + $0xf4] sm:$0xf]
        %v5678 = vld [vmem:[#allocation21 + $0xf8] sm:$0xf]
        %v5679 = vld [vmem:[#allocation21 + $0xfc] sm:$0xf]
        %v5680 = vld [vmem:[#allocation23] sm:$0x1]
        %v5682 = vlaneseq
        %v5683 = vshrl.u32 %v5682, 7
        %v5684 = vsub.s32 0, %v5683
        %v5685 = vrot.slane %v5680, %v5684
        %v5751 = vunpack.c.l.b16 %v5616
        %v5752 = vunpack.c.l.b16 %v5617
        %v5753 = vunpack.c.l.b16 %v5618
        %v5754 = vunpack.c.l.b16 %v5619
        %v5755 = vunpack.c.l.b16 %v5620
        %v5756 = vunpack.c.l.b16 %v5621
        %v5757 = vunpack.c.l.b16 %v5622
        %v5758 = vunpack.c.l.b16 %v5623
        %v5759 = vunpack.c.l.b16 %v5624
        %v5760 = vunpack.c.l.b16 %v5625
        %v5761 = vunpack.c.l.b16 %v5626
        %v5762 = vunpack.c.l.b16 %v5627
        %v5763 = vunpack.c.l.b16 %v5628
        %v5764 = vunpack.c.l.b16 %v5629
        %v5765 = vunpack.c.l.b16 %v5630
        %v5766 = vunpack.c.l.b16 %v5631
        %v5767 = vunpack.c.l.b16 %v5632
        %v5768 = vunpack.c.l.b16 %v5633
        %v5769 = vunpack.c.l.b16 %v5634
        %v5770 = vunpack.c.l.b16 %v5635
        %v5771 = vunpack.c.l.b16 %v5636
        %v5772 = vunpack.c.l.b16 %v5637
        %v5773 = vunpack.c.l.b16 %v5638
        %v5774 = vunpack.c.l.b16 %v5639
        %v5775 = vunpack.c.l.b16 %v5640
        %v5776 = vunpack.c.l.b16 %v5641
        %v5777 = vunpack.c.l.b16 %v5642
        %v5778 = vunpack.c.l.b16 %v5643
        %v5779 = vunpack.c.l.b16 %v5644
        %v5780 = vunpack.c.l.b16 %v5645
        %v5781 = vunpack.c.l.b16 %v5646
        %v5782 = vunpack.c.l.b16 %v5647
        %v5783 = vunpack.c.l.b16 %v5648
        %v5784 = vunpack.c.l.b16 %v5649
        %v5785 = vunpack.c.l.b16 %v5650
        %v5786 = vunpack.c.l.b16 %v5651
        %v5787 = vunpack.c.l.b16 %v5652
        %v5788 = vunpack.c.l.b16 %v5653
        %v5789 = vunpack.c.l.b16 %v5654
        %v5790 = vunpack.c.l.b16 %v5655
        %v5791 = vunpack.c.l.b16 %v5656
        %v5792 = vunpack.c.l.b16 %v5657
        %v5793 = vunpack.c.l.b16 %v5658
        %v5794 = vunpack.c.l.b16 %v5659
        %v5795 = vunpack.c.l.b16 %v5660
        %v5796 = vunpack.c.l.b16 %v5661
        %v5797 = vunpack.c.l.b16 %v5662
        %v5798 = vunpack.c.l.b16 %v5663
        %v5799 = vunpack.c.l.b16 %v5664
        %v5800 = vunpack.c.l.b16 %v5665
        %v5801 = vunpack.c.l.b16 %v5666
        %v5802 = vunpack.c.l.b16 %v5667
        %v5803 = vunpack.c.l.b16 %v5668
        %v5804 = vunpack.c.l.b16 %v5669
        %v5805 = vunpack.c.l.b16 %v5670
        %v5806 = vunpack.c.l.b16 %v5671
        %v5807 = vunpack.c.l.b16 %v5672
        %v5808 = vunpack.c.l.b16 %v5673
        %v5809 = vunpack.c.l.b16 %v5674
        %v5810 = vunpack.c.l.b16 %v5675
        %v5811 = vunpack.c.l.b16 %v5676
        %v5812 = vunpack.c.l.b16 %v5677
        %v5813 = vunpack.c.l.b16 %v5678
        %v5814 = vunpack.c.l.b16 %v5679
        %v5815 = vpack.c.b16 %v5752, %v5751
        %v5816 = vpack.c.b16 %v5754, %v5753
        %v5817 = vpack.c.b16 %v5756, %v5755
        %v5818 = vpack.c.b16 %v5758, %v5757
        %v5819 = vpack.c.b16 %v5760, %v5759
        %v5820 = vpack.c.b16 %v5762, %v5761
        %v5821 = vpack.c.b16 %v5764, %v5763
        %v5822 = vpack.c.b16 %v5766, %v5765
        %v5823 = vpack.c.b16 %v5768, %v5767
        %v5824 = vpack.c.b16 %v5770, %v5769
        %v5825 = vpack.c.b16 %v5772, %v5771
        %v5826 = vpack.c.b16 %v5774, %v5773
        %v5827 = vpack.c.b16 %v5776, %v5775
        %v5828 = vpack.c.b16 %v5778, %v5777
        %v5829 = vpack.c.b16 %v5780, %v5779
        %v5830 = vpack.c.b16 %v5782, %v5781
        %v5831 = vpack.c.b16 %v5784, %v5783
        %v5832 = vpack.c.b16 %v5786, %v5785
        %v5833 = vpack.c.b16 %v5788, %v5787
        %v5834 = vpack.c.b16 %v5790, %v5789
        %v5835 = vpack.c.b16 %v5792, %v5791
        %v5836 = vpack.c.b16 %v5794, %v5793
        %v5837 = vpack.c.b16 %v5796, %v5795
        %v5838 = vpack.c.b16 %v5798, %v5797
        %v5839 = vpack.c.b16 %v5800, %v5799
        %v5840 = vpack.c.b16 %v5802, %v5801
        %v5841 = vpack.c.b16 %v5804, %v5803
        %v5842 = vpack.c.b16 %v5806, %v5805
        %v5843 = vpack.c.b16 %v5808, %v5807
        %v5844 = vpack.c.b16 %v5810, %v5809
        %v5845 = vpack.c.b16 %v5812, %v5811
        %v5846 = vpack.c.b16 %v5814, %v5813
        %5879 = vmatprep.subr.bf16.mxu0 0
        %5880 = vmatpush1.bf16.msra.mxu0 %v5815
        %5881 = vmatprep.subr.bf16.mxu0 0
        %5882 = vmatpush1.bf16.msra.mxu0 %v5816
        %5883 = vmatprep.subr.bf16.mxu0 0
        %5884 = vmatpush1.bf16.msra.mxu0 %v5817
        %5885 = vmatprep.subr.bf16.mxu0 0
        %5886 = vmatpush1.bf16.msra.mxu0 %v5818
        %5887 = vmatprep.subr.bf16.mxu0 0
        %5888 = vmatpush1.bf16.msra.mxu0 %v5819
        %5889 = vmatprep.subr.bf16.mxu0 0
        %5890 = vmatpush1.bf16.msra.mxu0 %v5820
        %5891 = vmatprep.subr.bf16.mxu0 0
        %5892 = vmatpush1.bf16.msra.mxu0 %v5821
        %5893 = vmatprep.subr.bf16.mxu0 0
        %5894 = vmatpush1.bf16.msra.mxu0 %v5822
        %5895 = vmatprep.subr.bf16.mxu0 0
        %5896 = vmatpush1.bf16.msra.mxu0 %v5823
        %5897 = vmatprep.subr.bf16.mxu0 0
        %5898 = vmatpush1.bf16.msra.mxu0 %v5824
        %5899 = vmatprep.subr.bf16.mxu0 0
        %5900 = vmatpush1.bf16.msra.mxu0 %v5825
        %5901 = vmatprep.subr.bf16.mxu0 0
        %5902 = vmatpush1.bf16.msra.mxu0 %v5826
        %5903 = vmatprep.subr.bf16.mxu0 0
        %5904 = vmatpush1.bf16.msra.mxu0 %v5827
        %5905 = vmatprep.subr.bf16.mxu0 0
        %5906 = vmatpush1.bf16.msra.mxu0 %v5828
        %5907 = vmatprep.subr.bf16.mxu0 0
        %5908 = vmatpush1.bf16.msra.mxu0 %v5829
        %5909 = vmatprep.subr.bf16.mxu0 0
        %5910 = vmatpush1.bf16.msra.mxu0 %v5830
        %5911 = vmatprep.mubr.bf16.mxu0 %v5613
        %5912 = vmatmul.mubr.bf16.gmra.mrb[0].mxu0 %v5612
        %v5913 = vpop.f32.mrb[0].mxu0
        %v5914 = vadd.f32 %v5685, %v5913
        %v5915 = vpop.f32.mrb[0].mxu0
        %v5916 = vpop.f32.mrb[0].mxu0
        %v5917 = vpop.f32.mrb[0].mxu0
        %5918 = vdwg.mxu0
        %5919 = vmatprep.subr.bf16.mxu0 0
        %5920 = vmatpush1.bf16.msra.mxu0 %v5831
        %5921 = vmatprep.subr.bf16.mxu0 0
        %5922 = vmatpush1.bf16.msra.mxu0 %v5832
        %5923 = vmatprep.subr.bf16.mxu0 0
        %5924 = vmatpush1.bf16.msra.mxu0 %v5833
        %5925 = vmatprep.subr.bf16.mxu0 0
        %5926 = vmatpush1.bf16.msra.mxu0 %v5834
        %5927 = vmatprep.subr.bf16.mxu0 0
        %5928 = vmatpush1.bf16.msra.mxu0 %v5835
        %5929 = vmatprep.subr.bf16.mxu0 0
        %5930 = vmatpush1.bf16.msra.mxu0 %v5836
        %5931 = vmatprep.subr.bf16.mxu0 0
        %5932 = vmatpush1.bf16.msra.mxu0 %v5837
        %5933 = vmatprep.subr.bf16.mxu0 0
        %5934 = vmatpush1.bf16.msra.mxu0 %v5838
        %5935 = vmatprep.subr.bf16.mxu0 0
        %5936 = vmatpush1.bf16.msra.mxu0 %v5839
        %5937 = vmatprep.subr.bf16.mxu0 0
        %5938 = vmatpush1.bf16.msra.mxu0 %v5840
        %5939 = vmatprep.subr.bf16.mxu0 0
        %5940 = vmatpush1.bf16.msra.mxu0 %v5841
        %5941 = vmatprep.subr.bf16.mxu0 0
        %5942 = vmatpush1.bf16.msra.mxu0 %v5842
        %5943 = vmatprep.subr.bf16.mxu0 0
        %5944 = vmatpush1.bf16.msra.mxu0 %v5843
        %5945 = vmatprep.subr.bf16.mxu0 0
        %5946 = vmatpush1.bf16.msra.mxu0 %v5844
        %5947 = vmatprep.subr.bf16.mxu0 0
        %5948 = vmatpush1.bf16.msra.mxu0 %v5845
        %5949 = vmatprep.subr.bf16.mxu0 0
        %5950 = vmatpush1.bf16.msra.mxu0 %v5846
        %5951 = vmatprep.mubr.bf16.mxu0 %v5615
        %5952 = vmatmul.mubr.bf16.gmra.mrb[0].mxu0 %v5614
        %v5953 = vpop.f32.mrb[0].mxu0
        %v5954 = vadd.f32 %v5914, %v5953
        %v5955 = vpop.f32.mrb[0].mxu0
        %v5956 = vpop.f32.mrb[0].mxu0
        %v5957 = vpop.f32.mrb[0].mxu0
        %5958 = vdwg.mxu0
        %v5959 = vmax.f32 %v5954, 0.0
        %v5960 = vpack.c.bf16 %v5959, %v5959
        %v5961 = vld [vmem:[#allocation24] sm:$0xff]
        %v5962 = vld [vmem:[#allocation24 + $0x8] sm:$0xff]
        %v5963 = vld [vmem:[#allocation24 + $0x10] sm:$0xff]
        %v5964 = vld [vmem:[#allocation24 + $0x18] sm:$0xff]
        %v5965 = vld [vmem:[#allocation24 + $0x20] sm:$0xff]
        %v5966 = vld [vmem:[#allocation24 + $0x28] sm:$0xff]
        %v5967 = vld [vmem:[#allocation24 + $0x30] sm:$0xff]
        %v5968 = vld [vmem:[#allocation24 + $0x38] sm:$0xff]
        %v5969 = vld [vmem:[#allocation24 + $0x40] sm:$0xff]
        %v5970 = vld [vmem:[#allocation24 + $0x48] sm:$0xff]
        %v5971 = vld [vmem:[#allocation24 + $0x50] sm:$0xff]
        %v5972 = vld [vmem:[#allocation24 + $0x58] sm:$0xff]
        %v5973 = vld [vmem:[#allocation24 + $0x60] sm:$0xff]
        %v5974 = vld [vmem:[#allocation24 + $0x68] sm:$0xff]
        %v5975 = vld [vmem:[#allocation24 + $0x70] sm:$0xff]
        %v5976 = vld [vmem:[#allocation24 + $0x78] sm:$0xff]
        %v5977 = vld [vmem:[#allocation24 + $0x80] sm:$0xff]
        %v5978 = vld [vmem:[#allocation24 + $0x88] sm:$0xff]
        %v5979 = vld [vmem:[#allocation24 + $0x90] sm:$0xff]
        %v5980 = vld [vmem:[#allocation24 + $0x98] sm:$0xff]
        %v5981 = vld [vmem:[#allocation24 + $0xa0] sm:$0xff]
        %v5982 = vld [vmem:[#allocation24 + $0xa8] sm:$0xff]
        %v5983 = vld [vmem:[#allocation24 + $0xb0] sm:$0xff]
        %v5984 = vld [vmem:[#allocation24 + $0xb8] sm:$0xff]
        %v5985 = vld [vmem:[#allocation24 + $0xc0] sm:$0xff]
        %v5986 = vld [vmem:[#allocation24 + $0xc8] sm:$0xff]
        %v5987 = vld [vmem:[#allocation24 + $0xd0] sm:$0xff]
        %v5988 = vld [vmem:[#allocation24 + $0xd8] sm:$0xff]
        %v5989 = vld [vmem:[#allocation24 + $0xe0] sm:$0xff]
        %v5990 = vld [vmem:[#allocation24 + $0xe8] sm:$0xff]
        %v5991 = vld [vmem:[#allocation24 + $0xf0] sm:$0xff]
        %v5992 = vld [vmem:[#allocation24 + $0xf8] sm:$0xff]
        %v5993 = vld [vmem:[#allocation26] sm:$0x3]
        %v5995 = vlaneseq
        %v5996 = vshrl.u32 %v5995, 7
        %v5997 = vsub.s32 0, %v5996
        %v5998 = vrot.slane %v5993, %v5997
        %v5999 = vlaneseq
        %v6000 = vshrl.u32 %v5999, 7
        %v6001 = vsub.s32 1, %v6000
        %v6002 = vrot.slane %v5993, %v6001
        %v6037 = vunpack.c.l.b16 %v5961
        %v6038 = vunpack.c.h.b16 %v5961
        %v6039 = vunpack.c.l.b16 %v5962
        %v6040 = vunpack.c.h.b16 %v5962
        %v6041 = vunpack.c.l.b16 %v5963
        %v6042 = vunpack.c.h.b16 %v5963
        %v6043 = vunpack.c.l.b16 %v5964
        %v6044 = vunpack.c.h.b16 %v5964
        %v6045 = vunpack.c.l.b16 %v5965
        %v6046 = vunpack.c.h.b16 %v5965
        %v6047 = vunpack.c.l.b16 %v5966
        %v6048 = vunpack.c.h.b16 %v5966
        %v6049 = vunpack.c.l.b16 %v5967
        %v6050 = vunpack.c.h.b16 %v5967
        %v6051 = vunpack.c.l.b16 %v5968
        %v6052 = vunpack.c.h.b16 %v5968
        %v6053 = vunpack.c.l.b16 %v5969
        %v6054 = vunpack.c.h.b16 %v5969
        %v6055 = vunpack.c.l.b16 %v5970
        %v6056 = vunpack.c.h.b16 %v5970
        %v6057 = vunpack.c.l.b16 %v5971
        %v6058 = vunpack.c.h.b16 %v5971
        %v6059 = vunpack.c.l.b16 %v5972
        %v6060 = vunpack.c.h.b16 %v5972
        %v6061 = vunpack.c.l.b16 %v5973
        %v6062 = vunpack.c.h.b16 %v5973
        %v6063 = vunpack.c.l.b16 %v5974
        %v6064 = vunpack.c.h.b16 %v5974
        %v6065 = vunpack.c.l.b16 %v5975
        %v6066 = vunpack.c.h.b16 %v5975
        %v6067 = vunpack.c.l.b16 %v5976
        %v6068 = vunpack.c.h.b16 %v5976
        %v6069 = vunpack.c.l.b16 %v5977
        %v6070 = vunpack.c.h.b16 %v5977
        %v6071 = vunpack.c.l.b16 %v5978
        %v6072 = vunpack.c.h.b16 %v5978
        %v6073 = vunpack.c.l.b16 %v5979
        %v6074 = vunpack.c.h.b16 %v5979
        %v6075 = vunpack.c.l.b16 %v5980
        %v6076 = vunpack.c.h.b16 %v5980
        %v6077 = vunpack.c.l.b16 %v5981
        %v6078 = vunpack.c.h.b16 %v5981
        %v6079 = vunpack.c.l.b16 %v5982
        %v6080 = vunpack.c.h.b16 %v5982
        %v6081 = vunpack.c.l.b16 %v5983
        %v6082 = vunpack.c.h.b16 %v5983
        %v6083 = vunpack.c.l.b16 %v5984
        %v6084 = vunpack.c.h.b16 %v5984
        %v6085 = vunpack.c.l.b16 %v5985
        %v6086 = vunpack.c.h.b16 %v5985
        %v6087 = vunpack.c.l.b16 %v5986
        %v6088 = vunpack.c.h.b16 %v5986
        %v6089 = vunpack.c.l.b16 %v5987
        %v6090 = vunpack.c.h.b16 %v5987
        %v6091 = vunpack.c.l.b16 %v5988
        %v6092 = vunpack.c.h.b16 %v5988
        %v6093 = vunpack.c.l.b16 %v5989
        %v6094 = vunpack.c.h.b16 %v5989
        %v6095 = vunpack.c.l.b16 %v5990
        %v6096 = vunpack.c.h.b16 %v5990
        %v6097 = vunpack.c.l.b16 %v5991
        %v6098 = vunpack.c.h.b16 %v5991
        %v6099 = vunpack.c.l.b16 %v5992
        %v6100 = vunpack.c.h.b16 %v5992
        %v6101 = vpack.c.b16 %v6039, %v6037
        %v6102 = vpack.c.b16 %v6040, %v6038
        %v6103 = vpack.c.b16 %v6043, %v6041
        %v6104 = vpack.c.b16 %v6044, %v6042
        %v6105 = vpack.c.b16 %v6047, %v6045
        %v6106 = vpack.c.b16 %v6048, %v6046
        %v6107 = vpack.c.b16 %v6051, %v6049
        %v6108 = vpack.c.b16 %v6052, %v6050
        %v6109 = vpack.c.b16 %v6055, %v6053
        %v6110 = vpack.c.b16 %v6056, %v6054
        %v6111 = vpack.c.b16 %v6059, %v6057
        %v6112 = vpack.c.b16 %v6060, %v6058
        %v6113 = vpack.c.b16 %v6063, %v6061
        %v6114 = vpack.c.b16 %v6064, %v6062
        %v6115 = vpack.c.b16 %v6067, %v6065
        %v6116 = vpack.c.b16 %v6068, %v6066
        %v6117 = vpack.c.b16 %v6071, %v6069
        %v6118 = vpack.c.b16 %v6072, %v6070
        %v6119 = vpack.c.b16 %v6075, %v6073
        %v6120 = vpack.c.b16 %v6076, %v6074
        %v6121 = vpack.c.b16 %v6079, %v6077
        %v6122 = vpack.c.b16 %v6080, %v6078
        %v6123 = vpack.c.b16 %v6083, %v6081
        %v6124 = vpack.c.b16 %v6084, %v6082
        %v6125 = vpack.c.b16 %v6087, %v6085
        %v6126 = vpack.c.b16 %v6088, %v6086
        %v6127 = vpack.c.b16 %v6091, %v6089
        %v6128 = vpack.c.b16 %v6092, %v6090
        %v6129 = vpack.c.b16 %v6095, %v6093
        %v6130 = vpack.c.b16 %v6096, %v6094
        %v6131 = vpack.c.b16 %v6099, %v6097
        %v6132 = vpack.c.b16 %v6100, %v6098
        %6165 = vmatprep.subr.bf16.mxu0 %v6102
        %6166 = vmatpush1.bf16.msra.mxu0 %v6101
        %6167 = vmatprep.subr.bf16.mxu0 %v6104
        %6168 = vmatpush1.bf16.msra.mxu0 %v6103
        %6169 = vmatprep.subr.bf16.mxu0 %v6106
        %6170 = vmatpush1.bf16.msra.mxu0 %v6105
        %6171 = vmatprep.subr.bf16.mxu0 %v6108
        %6172 = vmatpush1.bf16.msra.mxu0 %v6107
        %6173 = vmatprep.subr.bf16.mxu0 %v6110
        %6174 = vmatpush1.bf16.msra.mxu0 %v6109
        %6175 = vmatprep.subr.bf16.mxu0 %v6112
        %6176 = vmatpush1.bf16.msra.mxu0 %v6111
        %6177 = vmatprep.subr.bf16.mxu0 %v6114
        %6178 = vmatpush1.bf16.msra.mxu0 %v6113
        %6179 = vmatprep.subr.bf16.mxu0 %v6116
        %6180 = vmatpush1.bf16.msra.mxu0 %v6115
        %6181 = vmatprep.subr.bf16.mxu0 %v6118
        %6182 = vmatpush1.bf16.msra.mxu0 %v6117
        %6183 = vmatprep.subr.bf16.mxu0 %v6120
        %6184 = vmatpush1.bf16.msra.mxu0 %v6119
        %6185 = vmatprep.subr.bf16.mxu0 %v6122
        %6186 = vmatpush1.bf16.msra.mxu0 %v6121
        %6187 = vmatprep.subr.bf16.mxu0 %v6124
        %6188 = vmatpush1.bf16.msra.mxu0 %v6123
        %6189 = vmatprep.subr.bf16.mxu0 %v6126
        %6190 = vmatpush1.bf16.msra.mxu0 %v6125
        %6191 = vmatprep.subr.bf16.mxu0 %v6128
        %6192 = vmatpush1.bf16.msra.mxu0 %v6127
        %6193 = vmatprep.subr.bf16.mxu0 %v6130
        %6194 = vmatpush1.bf16.msra.mxu0 %v6129
        %6195 = vmatprep.subr.bf16.mxu0 %v6132
        %6196 = vmatpush1.bf16.msra.mxu0 %v6131
        %6197 = vmatprep.mubr.bf16.mxu0 %v5960
        %6198 = vmatmul.mubr.bf16.gmra.mrb[0].mxu0 %v3448
        %v6199 = vpop.f32.mrb[0].mxu0
        %v6200 = vadd.f32 %v5998, %v6199
        %v6201 = vpop.f32.mrb[0].mxu0
        %v6202 = vadd.f32 %v6002, %v6201
        %v6203 = vpop.f32.mrb[0].mxu0
        %v6204 = vpop.f32.mrb[0].mxu0
        %6205 = vdwg.mxu0
        %v6206 = vmax.f32 %v6200, 0.0
        %v6207 = vmax.f32 %v6202, 0.0
        %v6208 = vpack.c.bf16 %v6206, %v6206
        %v6209 = vpack.c.bf16 %v6207, %v6207
        %v6210 = vld [vmem:[#allocation27] sm:$0xf]
        %v6211 = vld [vmem:[#allocation27 + $0x4] sm:$0xf]
        %v6212 = vld [vmem:[#allocation27 + $0x8] sm:$0xf]
        %v6213 = vld [vmem:[#allocation27 + $0xc] sm:$0xf]
        %v6214 = vld [vmem:[#allocation27 + $0x10] sm:$0xf]
        %v6215 = vld [vmem:[#allocation27 + $0x14] sm:$0xf]
        %v6216 = vld [vmem:[#allocation27 + $0x18] sm:$0xf]
        %v6217 = vld [vmem:[#allocation27 + $0x1c] sm:$0xf]
        %v6218 = vld [vmem:[#allocation27 + $0x20] sm:$0xf]
        %v6219 = vld [vmem:[#allocation27 + $0x24] sm:$0xf]
        %v6220 = vld [vmem:[#allocation27 + $0x28] sm:$0xf]
        %v6221 = vld [vmem:[#allocation27 + $0x2c] sm:$0xf]
        %v6222 = vld [vmem:[#allocation27 + $0x30] sm:$0xf]
        %v6223 = vld [vmem:[#allocation27 + $0x34] sm:$0xf]
        %v6224 = vld [vmem:[#allocation27 + $0x38] sm:$0xf]
        %v6225 = vld [vmem:[#allocation27 + $0x3c] sm:$0xf]
        %v6226 = vld [vmem:[#allocation27 + $0x40] sm:$0xf]
        %v6227 = vld [vmem:[#allocation27 + $0x44] sm:$0xf]
        %v6228 = vld [vmem:[#allocation27 + $0x48] sm:$0xf]
        %v6229 = vld [vmem:[#allocation27 + $0x4c] sm:$0xf]
        %v6230 = vld [vmem:[#allocation27 + $0x50] sm:$0xf]
        %v6231 = vld [vmem:[#allocation27 + $0x54] sm:$0xf]
        %v6232 = vld [vmem:[#allocation27 + $0x58] sm:$0xf]
        %v6233 = vld [vmem:[#allocation27 + $0x5c] sm:$0xf]
        %v6234 = vld [vmem:[#allocation27 + $0x60] sm:$0xf]
        %v6235 = vld [vmem:[#allocation27 + $0x64] sm:$0xf]
        %v6236 = vld [vmem:[#allocation27 + $0x68] sm:$0xf]
        %v6237 = vld [vmem:[#allocation27 + $0x6c] sm:$0xf]
        %v6238 = vld [vmem:[#allocation27 + $0x70] sm:$0xf]
        %v6239 = vld [vmem:[#allocation27 + $0x74] sm:$0xf]
        %v6240 = vld [vmem:[#allocation27 + $0x78] sm:$0xf]
        %v6241 = vld [vmem:[#allocation27 + $0x7c] sm:$0xf]
        %v6242 = vld [vmem:[#allocation29] sm:$0x1]
        %v6244 = vlaneseq
        %v6245 = vshrl.u32 %v6244, 7
        %v6246 = vsub.s32 0, %v6245
        %v6247 = vrot.slane %v6242, %v6246
        %v6281 = vunpack.c.l.b16 %v6210
        %v6282 = vunpack.c.l.b16 %v6211
        %v6283 = vunpack.c.l.b16 %v6212
        %v6284 = vunpack.c.l.b16 %v6213
        %v6285 = vunpack.c.l.b16 %v6214
        %v6286 = vunpack.c.l.b16 %v6215
        %v6287 = vunpack.c.l.b16 %v6216
        %v6288 = vunpack.c.l.b16 %v6217
        %v6289 = vunpack.c.l.b16 %v6218
        %v6290 = vunpack.c.l.b16 %v6219
        %v6291 = vunpack.c.l.b16 %v6220
        %v6292 = vunpack.c.l.b16 %v6221
        %v6293 = vunpack.c.l.b16 %v6222
        %v6294 = vunpack.c.l.b16 %v6223
        %v6295 = vunpack.c.l.b16 %v6224
        %v6296 = vunpack.c.l.b16 %v6225
        %v6297 = vunpack.c.l.b16 %v6226
        %v6298 = vunpack.c.l.b16 %v6227
        %v6299 = vunpack.c.l.b16 %v6228
        %v6300 = vunpack.c.l.b16 %v6229
        %v6301 = vunpack.c.l.b16 %v6230
        %v6302 = vunpack.c.l.b16 %v6231
        %v6303 = vunpack.c.l.b16 %v6232
        %v6304 = vunpack.c.l.b16 %v6233
        %v6305 = vunpack.c.l.b16 %v6234
        %v6306 = vunpack.c.l.b16 %v6235
        %v6307 = vunpack.c.l.b16 %v6236
        %v6308 = vunpack.c.l.b16 %v6237
        %v6309 = vunpack.c.l.b16 %v6238
        %v6310 = vunpack.c.l.b16 %v6239
        %v6311 = vunpack.c.l.b16 %v6240
        %v6312 = vunpack.c.l.b16 %v6241
        %v6313 = vpack.c.b16 %v6282, %v6281
        %v6314 = vpack.c.b16 %v6284, %v6283
        %v6315 = vpack.c.b16 %v6286, %v6285
        %v6316 = vpack.c.b16 %v6288, %v6287
        %v6317 = vpack.c.b16 %v6290, %v6289
        %v6318 = vpack.c.b16 %v6292, %v6291
        %v6319 = vpack.c.b16 %v6294, %v6293
        %v6320 = vpack.c.b16 %v6296, %v6295
        %v6321 = vpack.c.b16 %v6298, %v6297
        %v6322 = vpack.c.b16 %v6300, %v6299
        %v6323 = vpack.c.b16 %v6302, %v6301
        %v6324 = vpack.c.b16 %v6304, %v6303
        %v6325 = vpack.c.b16 %v6306, %v6305
        %v6326 = vpack.c.b16 %v6308, %v6307
        %v6327 = vpack.c.b16 %v6310, %v6309
        %v6328 = vpack.c.b16 %v6312, %v6311
        %6345 = vmatprep.subr.bf16.mxu0 0
        %6346 = vmatpush1.bf16.msra.mxu0 %v6313
        %6347 = vmatprep.subr.bf16.mxu0 0
        %6348 = vmatpush1.bf16.msra.mxu0 %v6314
        %6349 = vmatprep.subr.bf16.mxu0 0
        %6350 = vmatpush1.bf16.msra.mxu0 %v6315
        %6351 = vmatprep.subr.bf16.mxu0 0
        %6352 = vmatpush1.bf16.msra.mxu0 %v6316
        %6353 = vmatprep.subr.bf16.mxu0 0
        %6354 = vmatpush1.bf16.msra.mxu0 %v6317
        %6355 = vmatprep.subr.bf16.mxu0 0
        %6356 = vmatpush1.bf16.msra.mxu0 %v6318
        %6357 = vmatprep.subr.bf16.mxu0 0
        %6358 = vmatpush1.bf16.msra.mxu0 %v6319
        %6359 = vmatprep.subr.bf16.mxu0 0
        %6360 = vmatpush1.bf16.msra.mxu0 %v6320
        %6361 = vmatprep.subr.bf16.mxu0 0
        %6362 = vmatpush1.bf16.msra.mxu0 %v6321
        %6363 = vmatprep.subr.bf16.mxu0 0
        %6364 = vmatpush1.bf16.msra.mxu0 %v6322
        %6365 = vmatprep.subr.bf16.mxu0 0
        %6366 = vmatpush1.bf16.msra.mxu0 %v6323
        %6367 = vmatprep.subr.bf16.mxu0 0
        %6368 = vmatpush1.bf16.msra.mxu0 %v6324
        %6369 = vmatprep.subr.bf16.mxu0 0
        %6370 = vmatpush1.bf16.msra.mxu0 %v6325
        %6371 = vmatprep.subr.bf16.mxu0 0
        %6372 = vmatpush1.bf16.msra.mxu0 %v6326
        %6373 = vmatprep.subr.bf16.mxu0 0
        %6374 = vmatpush1.bf16.msra.mxu0 %v6327
        %6375 = vmatprep.subr.bf16.mxu0 0
        %6376 = vmatpush1.bf16.msra.mxu0 %v6328
        %6377 = vmatprep.mubr.bf16.mxu0 %v6209
        %6378 = vmatmul.mubr.bf16.gmra.mrb[0].mxu0 %v6208
        %v6379 = vpop.f32.mrb[0].mxu0
        %v6380 = vadd.f32 %v6247, %v6379
        %v6381 = vpop.f32.mrb[0].mxu0
        %v6382 = vpop.f32.mrb[0].mxu0
        %v6383 = vpop.f32.mrb[0].mxu0
        %6384 = vdwg.mxu0
        %v6385 = vmax.f32 %v6380, 0.0
        %v6386 = vpack.c.bf16 %v6385, %v6385
        %v6387 = vld [vmem:[#allocation30] sm:$0xf]
        %v6388 = vld [vmem:[#allocation30 + $0x4] sm:$0xf]
        %v6389 = vld [vmem:[#allocation30 + $0x8] sm:$0xf]
        %v6390 = vld [vmem:[#allocation30 + $0xc] sm:$0xf]
        %v6391 = vld [vmem:[#allocation30 + $0x10] sm:$0xf]
        %v6392 = vld [vmem:[#allocation30 + $0x14] sm:$0xf]
        %v6393 = vld [vmem:[#allocation30 + $0x18] sm:$0xf]
        %v6394 = vld [vmem:[#allocation30 + $0x1c] sm:$0xf]
        %v6395 = vld [vmem:[#allocation30 + $0x20] sm:$0xf]
        %v6396 = vld [vmem:[#allocation30 + $0x24] sm:$0xf]
        %v6397 = vld [vmem:[#allocation30 + $0x28] sm:$0xf]
        %v6398 = vld [vmem:[#allocation30 + $0x2c] sm:$0xf]
        %v6399 = vld [vmem:[#allocation30 + $0x30] sm:$0xf]
        %v6400 = vld [vmem:[#allocation30 + $0x34] sm:$0xf]
        %v6401 = vld [vmem:[#allocation30 + $0x38] sm:$0xf]
        %v6402 = vld [vmem:[#allocation30 + $0x3c] sm:$0xf]
        %v6403 = vld [vmem:[#allocation32] sm:$0x1]
        %v6405 = vlaneseq
        %v6406 = vshrl.u32 %v6405, 7
        %v6407 = vsub.s32 0, %v6406
        %v6408 = vrot.slane %v6403, %v6407
        %v6426 = vunpack.c.l.b16 %v6387
        %v6427 = vunpack.c.l.b16 %v6388
        %v6428 = vunpack.c.l.b16 %v6389
        %v6429 = vunpack.c.l.b16 %v6390
        %v6430 = vunpack.c.l.b16 %v6391
        %v6431 = vunpack.c.l.b16 %v6392
        %v6432 = vunpack.c.l.b16 %v6393
        %v6433 = vunpack.c.l.b16 %v6394
        %v6434 = vunpack.c.l.b16 %v6395
        %v6435 = vunpack.c.l.b16 %v6396
        %v6436 = vunpack.c.l.b16 %v6397
        %v6437 = vunpack.c.l.b16 %v6398
        %v6438 = vunpack.c.l.b16 %v6399
        %v6439 = vunpack.c.l.b16 %v6400
        %v6440 = vunpack.c.l.b16 %v6401
        %v6441 = vunpack.c.l.b16 %v6402
        %v6442 = vpack.c.b16 %v6427, %v6426
        %v6443 = vpack.c.b16 %v6429, %v6428
        %v6444 = vpack.c.b16 %v6431, %v6430
        %v6445 = vpack.c.b16 %v6433, %v6432
        %v6446 = vpack.c.b16 %v6435, %v6434
        %v6447 = vpack.c.b16 %v6437, %v6436
        %v6448 = vpack.c.b16 %v6439, %v6438
        %v6449 = vpack.c.b16 %v6441, %v6440
        %6458 = vmatprep.subr.bf16.mxu0 0
        %6459 = vmatpush1.bf16.msra.mxu0 %v6442
        %6460 = vmatprep.subr.bf16.mxu0 0
        %6461 = vmatpush1.bf16.msra.mxu0 %v6443
        %6462 = vmatprep.subr.bf16.mxu0 0
        %6463 = vmatpush1.bf16.msra.mxu0 %v6444
        %6464 = vmatprep.subr.bf16.mxu0 0
        %6465 = vmatpush1.bf16.msra.mxu0 %v6445
        %6466 = vmatprep.subr.bf16.mxu0 0
        %6467 = vmatpush1.bf16.msra.mxu0 %v6446
        %6468 = vmatprep.subr.bf16.mxu0 0
        %6469 = vmatpush1.bf16.msra.mxu0 %v6447
        %6470 = vmatprep.subr.bf16.mxu0 0
        %6471 = vmatpush1.bf16.msra.mxu0 %v6448
        %6472 = vmatprep.subr.bf16.mxu0 0
        %6473 = vmatpush1.bf16.msra.mxu0 %v6449
        %6474 = vmatprep.subr.bf16.mxu0 0
        %6475 = vmatpush1.bf16.msra.mxu0 0
        %6476 = vmatprep.subr.bf16.mxu0 0
        %6477 = vmatpush1.bf16.msra.mxu0 0
        %6478 = vmatprep.subr.bf16.mxu0 0
        %6479 = vmatpush1.bf16.msra.mxu0 0
        %6480 = vmatprep.subr.bf16.mxu0 0
        %6481 = vmatpush1.bf16.msra.mxu0 0
        %6482 = vmatprep.subr.bf16.mxu0 0
        %6483 = vmatpush1.bf16.msra.mxu0 0
        %6484 = vmatprep.subr.bf16.mxu0 0
        %6485 = vmatpush1.bf16.msra.mxu0 0
        %6486 = vmatprep.subr.bf16.mxu0 0
        %6487 = vmatpush1.bf16.msra.mxu0 0
        %6488 = vmatprep.subr.bf16.mxu0 0
        %6489 = vmatpush1.bf16.msra.mxu0 0
        %6490 = vmatprep.mubr.bf16.mxu0 0
        %6491 = vmatmul.mubr.bf16.gmra.mrb[0].mxu0 %v6386
        %v6492 = vpop.f32.mrb[0].mxu0
        %v6493 = vadd.f32 %v6408, %v6492
        %v6494 = vpop.f32.mrb[0].mxu0
        %v6495 = vpop.f32.mrb[0].mxu0
        %v6496 = vpop.f32.mrb[0].mxu0
        %6497 = vdwg.mxu0
        %v6498 = vmax.f32 %v6493, 0.0
        %v6499 = vld [vmem:[#allocation33] sm:$0x1]
        %v6501 = vlaneseq
        %v6502 = vshrl.u32 %v6501, 7
        %v6503 = vsub.s32 0, %v6502
        %v6504 = vrot.slane %v6499, %v6503
        %v6506 = vmul.f32 %v6498, %v6504
        %vm6507 = vcmask 523264
        %v6508 = vsel %vm6507, %v6506, 0.0
        %6509 = vadd.xlane.f32.xlu0 %v6508
        %v6510 = vpop.xlane.xlu0 %6509
        %v6511 = vld [vmem:[#allocation2] sm:$0x1]
        %v6513 = vlaneseq
        %v6514 = vshrl.u32 %v6513, 7
        %v6515 = vsub.s32 0, %v6514
        %v6516 = vrot.slane %v6511, %v6515
        %v6518 = vadd.f32 %v6510, %v6516
        %v6519 = vsub.f32 0.0, %v6518
        %v6520 = vmul.f32 %v6519, 1.442695
        %v6521 = vpow.pop %v6520
        %v6522 = vadd.f32 %v6521, 1.0
        %v6523 = vrcp.pop %v6522
        %v6524 = vmul.f32 1.0, %v6523
        %vm6525 = vcmask 7168
        %6526 = vst.msk [vmem:[%s931] sm:$0xff] %vm6525, %v6524
        %s6527 = sand.u32 %s504, 1
        %s6528 = scalar_lea.sflag [#allocation5], %s6527
        %s6529 = sand.u32 %s504, 1
        %s6530 = smul.addr %s6529, 8
        %s6531 = scalar_lea.vmem [#allocation35], %s6530
        // Predicated region
        $region185: #{tpu_custom_call.1} parent=103 // pred_check
          %p6532 = pneg %p514
        $region186: #{tpu_custom_call.1} parent=103 // pred_check_branch
          %6534 = sbr.rel (%p6532) target = $region188
        $region187: #{tpu_custom_call.1} parent=103 // pred_region
          %s6536 = ssub.s32 128, 128
          %6537 = vsyncadd %s6528, %s6536
          %s6538 = smul.addr %s50, 128
          %s6539 = scalar_lea.hbm %s21, %s6538
          %s6541 = sshll.u32 %s6531, 4
          %s6542 = int_to_ptr.vmem [resolvable:$true] %s6541
          %6544 = dma.vmem_to_hbm [thread:$0]  %s6542, 128, %s6539, %s6528
        $region188: #{tpu_custom_call.1} parent=103 // pred_fallthru
          _
      $region104: #{tpu_custom_call.1} parent=5 // pred_fallthru
        _
      %p6545 = scmp.le.s32.totalorder 2, %s45
      // Predicated region
      $region189: #{tpu_custom_call.1} parent=5 // pred_check
        %p6546 = pneg %p6545
      $region190: #{tpu_custom_call.1} parent=5 // pred_check_branch
        %6548 = sbr.rel (%p6546) target = $region192
      $region191: #{tpu_custom_call.1} parent=5 // pred_region
        %s6549 = ssub.s32 %s45, 2
        // Predicated region
        $region193: #{tpu_custom_call.1} parent=191 // pred_check
          %p6550 = pneg %p520
        $region194: #{tpu_custom_call.1} parent=191 // pred_check_branch
          %6552 = sbr.rel (%p6550) target = $region196
        $region195: #{tpu_custom_call.1} parent=191 // pred_region
          %s6553 = sand.u32 %s505, 1
          %s6554 = scalar_lea.sflag [#allocation5], %s6553
          %s6555 = sand.u32 %s505, 1
          %s6556 = smul.addr %s6555, 8
          %s6557 = scalar_lea.vmem [#allocation35], %s6556
          %6558 = dma.done %s6554, 128
        $region196: #{tpu_custom_call.1} parent=191 // pred_fallthru
          _
      $region192: #{tpu_custom_call.1} parent=5 // pred_fallthru
        _
    $region6: #{tpu_custom_call.1} parent=1 // loop_footer
      %s49 = sadd.s32 1, %s45
    $region7: #{tpu_custom_call.1} parent=1 // loop_footer_branch
      %44 = sbr.rel target = $region3
    $region8: #{tpu_custom_call.1} parent=1 // loop_exit
      _
    %6559 = vsyncpa [#allocation4], 1
    %s6560 = scalar_lea.sflag [#allocation4], 1
    %6561 = vsyncpa %s6560, 1
    %6562 = vsyncpa [#allocation7], 1
    %6563 = vsyncpa [#allocation10], 1
    %6564 = vsyncpa [#allocation13], 1
    %6565 = vsyncpa [#allocation16], 1
    %6566 = vsyncpa [#allocation19], 1
    %6567 = vsyncpa [#allocation22], 1
    %6568 = vsyncpa [#allocation25], 1
    %6569 = vsyncpa [#allocation28], 1
    %6570 = vsyncpa [#allocation31], 1
    %6571 = vsyncpa [#allocation34], 1
    %6572 = vsyncpa [#allocation5], 1
    %s6573 = scalar_lea.sflag [#allocation5], 1
    %6574 = vsyncpa %s6573, 1

</llo_original>
